<compile_context>
chip_gen: v7x
topology: tpu7x:2x2x1
jax: 0.10.0
libtpu: 0.0.40
codegen_flags: <defaults>
</compile_context>

<pallas_src>
import functools

import jax
import jax.numpy as jnp
from jax.experimental import pallas as pl
from jax.experimental.pallas import tpu as pltpu


def _round_up(x, m):
    return (x + m - 1) // m * m


# ---------------------------------------------------------------------------
# Pallas kernel: the whole forward pass (6 x matmul + bias + relu), one call.
# ---------------------------------------------------------------------------
def _fused_net_kernel(*refs, num_layers):
    """refs = (x, D_1, bias_1, ..., D_L, bias_L, out); everything in VMEM."""
    x_ref, o_ref = refs[0], refs[-1]
    h = x_ref[...]                                        # (N, F0) f32
    for l in range(num_layers):                           # unrolled at trace time
        d_ref = refs[1 + 2 * l]
        b_ref = refs[2 + 2 * l]
        acc = jnp.dot(h.astype(d_ref.dtype), d_ref[...],
                      preferred_element_type=jnp.float32)  # MXU, f32 accumulate
        h = jnp.maximum(acc + b_ref[...], 0.0)              # bias + relu in f32 (VPU)
    o_ref[...] = h.astype(o_ref.dtype)


def _fused_forward(x_flat, layers):
    """Run the fused network on x_flat:(N, F0). layers: ((D, bias_row), ...)."""
    n = x_flat.shape[0]
    f_out = layers[-1][0].shape[1]

    inputs = [x_flat]
    in_specs = [pl.BlockSpec(x_flat.shape, lambda i: (0, 0))]
    flops = 0
    bytes_accessed = x_flat.size * x_flat.dtype.itemsize + n * f_out * 4
    for d, b in layers:
        inputs += [d, b]
        in_specs += [pl.BlockSpec(d.shape, lambda i: (0, 0)),
                     pl.BlockSpec(b.shape, lambda i: (0, 0))]
        flops += 2 * n * d.shape[0] * d.shape[1]
        bytes_accessed += d.size * d.dtype.itemsize + b.size * b.dtype.itemsize

    # NOTE(v7x): the whole problem (~3 MFLOP, ~2 MiB of weights) is launch/DMA
    # bound, so we keep a single grid step rather than splitting the batch of 4
    # across both TensorCores (which would duplicate the weight DMA per core).
    return pl.pallas_call(
        functools.partial(_fused_net_kernel, num_layers=len(layers)),
        out_shape=jax.ShapeDtypeStruct((n, f_out), jnp.float32),
        grid=(1,),
        in_specs=in_specs,
        out_specs=pl.BlockSpec((n, f_out), lambda i: (0, 0)),
        compiler_params=pltpu.CompilerParams(
            dimension_semantics=("arbitrary",)),
        cost_estimate=pl.CostEstimate(flops=flops, transcendentals=0,
                                      bytes_accessed=bytes_accessed),
    )(*inputs)


# ---------------------------------------------------------------------------
# One-time weight lowering (prep time only, no activation data flows here).
# ---------------------------------------------------------------------------
def _conv_as_dense(w_oihw, bias, h_in, w_in, stride, pad):
    """Dense matrix D (feature order C,H,W) s.t. x_flat @ D == Conv2d(x)."""
    c_out, c_in, k, _ = w_oihw.shape
    k_feat = c_in * h_in * w_in
    eye = jnp.eye(k_feat, dtype=jnp.float32).reshape(k_feat, c_in, h_in, w_in)
    y = jax.lax.conv_general_dilated(
        eye, w_oihw.astype(jnp.float32),
        window_strides=(stride, stride),
        padding=((pad, pad), (pad, pad)),
        dimension_numbers=("NCHW", "OIHW", "NCHW"))
    _, _, h_out, w_out = y.shape
    dense = y.reshape(k_feat, c_out * h_out * w_out)
    bias_row = jnp.repeat(bias.astype(jnp.float32), h_out * w_out)[None, :]
    return dense, bias_row, (c_out, h_out, w_out)


def _conv_transpose_as_dense(w_iohw, bias, h_in, w_in, stride, pad, out_hw):
    """Dense matrix for PyTorch ConvTranspose2d(..., output_size=out_hw)."""
    c_in, c_out, k, _ = w_iohw.shape
    h_out, w_out = out_hw
    op_h = h_out - ((h_in - 1) * stride - 2 * pad + k)
    op_w = w_out - ((w_in - 1) * stride - 2 * pad + k)
    assert 0 <= op_h < stride and 0 <= op_w < stride
    # ConvTranspose == stride-1 conv on the stride-dilated input with the
    # spatially flipped kernel and swapped in/out channel axes.
    w_conv = jnp.transpose(w_iohw, (1, 0, 2, 3))[:, :, ::-1, ::-1]
    lo = k - 1 - pad
    k_feat = c_in * h_in * w_in
    eye = jnp.eye(k_feat, dtype=jnp.float32).reshape(k_feat, c_in, h_in, w_in)
    y = jax.lax.conv_general_dilated(
        eye, w_conv.astype(jnp.float32),
        window_strides=(1, 1),
        padding=((lo, lo + op_h), (lo, lo + op_w)),
        lhs_dilation=(stride, stride),
        dimension_numbers=("NCHW", "OIHW", "NCHW"))
    assert y.shape == (k_feat, c_out, h_out, w_out)
    dense = y.reshape(k_feat, c_out * h_out * w_out)
    bias_row = jnp.repeat(bias.astype(jnp.float32), h_out * w_out)[None, :]
    return dense, bias_row, (c_out, h_out, w_out)


def prepare_network(params, input_hw, *, mxu_dtype=jnp.bfloat16):
    """Lower every conv layer to a (dense_matrix, bias_row) pair, feature axes
    padded to multiples of 128 (lane width).  Done once, outside the forward."""
    h, w = input_hw
    enc_shapes = [(1, h, w)]                 # mirrors self.shape[] in the module
    layers = []

    c = 1
    for name, stride, pad in (("enc1", 2, 2), ("enc2", 2, 1), ("enc3", 2, 1)):
        d, b, (c, h, w) = _conv_as_dense(params[name + "_w"], params[name + "_b"],
                                         h, w, stride, pad)
        layers.append((d, b))
        enc_shapes.append((c, h, w))

    # decoders: output_size = recorded encoder shapes (PyTorch output_size arg)
    for name, stride, pad, tgt in (("dec1", 2, 1, enc_shapes[2]),
                                   ("dec2", 2, 1, enc_shapes[1]),
                                   ("dec3", 2, 2, enc_shapes[0])):
        d, b, (c, h, w) = _conv_transpose_as_dense(
            params[name + "_w"], params[name + "_b"], h, w, stride, pad, tgt[1:])
        layers.append((d, b))

    out_chw = (c, h, w)

    # Zero-pad feature axes to multiples of 128: padded bias is 0 and padded
    # rows/cols of D are 0, so padded activations are exactly 0 and never
    # affect the result.  Paid once here, never at forward time.
    padded = []
    for d, b in layers:
        kp = _round_up(d.shape[0], 128)
        fp = _round_up(d.shape[1], 128)
        d_p = jnp.zeros((kp, fp), jnp.float32).at[:d.shape[0], :d.shape[1]].set(d)
        b_p = jnp.zeros((1, fp), jnp.float32).at[:, :b.shape[1]].set(b)
        padded.append((d_p.astype(mxu_dtype), b_p))
    return tuple(padded), out_chw


# ---------------------------------------------------------------------------
# Public forward (test=False path of the PyTorch module).
# ---------------------------------------------------------------------------
@functools.partial(jax.jit, static_argnames=("out_chw",))
def network_forward(x_nchw, layers, *, out_chw):
    n = x_nchw.shape[0]
    x_flat = x_nchw.astype(jnp.float32).reshape(n, -1)   # NCHW flatten == (C,H,W) order
    k0 = layers[0][0].shape[0]
    if x_flat.shape[1] != k0:                            # static; no-op for 1x16x16
        x_flat = jnp.pad(x_flat, ((0, 0), (0, k0 - x_flat.shape[1])))
    out_flat = _fused_forward(x_flat, layers)
    c, h, w = out_chw
    if out_flat.shape[1] != c * h * w:                   # static; no-op here
        out_flat = out_flat[:, :c * h * w]
    return out_flat.reshape(n, c, h, w)


def init_params(key):
    def conv_w(key, c_out, c_in, k):
        return 0.1 * jax.random.normal(key, (c_out, c_in, k, k), jnp.float32)

    def convT_w(key, c_in, c_out, k):
        return 0.1 * jax.random.normal(key, (c_in, c_out, k, k), jnp.float32)

    ks = jax.random.split(key, 12)
    return {
        "enc1_w": conv_w(ks[0], 10, 1, 5),   "enc1_b": 0.01 * jax.random.normal(ks[1], (10,)),
        "enc2_w": conv_w(ks[2], 20, 10, 3),  "enc2_b": 0.01 * jax.random.normal(ks[3], (20,)),
        "enc3_w": conv_w(ks[4], 30, 20, 3),  "enc3_b": 0.01 * jax.random.normal(ks[5], (30,)),
        "dec1_w": convT_w(ks[6], 30, 20, 3), "dec1_b": 0.01 * jax.random.normal(ks[7], (20,)),
        "dec2_w": convT_w(ks[8], 20, 10, 3), "dec2_b": 0.01 * jax.random.normal(ks[9], (10,)),
        "dec3_w": convT_w(ks[10], 10, 1, 5), "dec3_b": 0.01 * jax.random.normal(ks[11], (1,)),
        # TODO(synk): Coef is only used in the test=True self-expressive branch
        # (a plain 4x4 matmul); the default forward (test=False) never reads it.
        "coef": 0.0001 * jnp.ones((4, 4), jnp.float32),
    }


# ---------------------------------------------------------------------------
# Independent reference (lax convs, same bf16-operand / f32-accum numerics).
# ---------------------------------------------------------------------------
def _ref_conv(x, w, b, stride, pad):
    y = jax.lax.conv_general_dilated(
        x.astype(jnp.bfloat16), w.astype(jnp.bfloat16),
        window_strides=(stride, stride), padding=((pad, pad), (pad, pad)),
        dimension_numbers=("NCHW", "OIHW", "NCHW"),
        preferred_element_type=jnp.float32)
    return jnp.maximum(y + b[None, :, None, None], 0.0)


def _ref_conv_transpose(x, w_iohw, b, stride, pad, out_hw):
    n, c_in, h, w = x.shape
    k = w_iohw.shape[2]
    h_out, w_out = out_hw
    op_h = h_out - ((h - 1) * stride - 2 * pad + k)
    op_w = w_out - ((w - 1) * stride - 2 * pad + k)
    xd = jnp.zeros((n, c_in, (h - 1) * stride + 1, (w - 1) * stride + 1), x.dtype)
    xd = xd.at[:, :, ::stride, ::stride].set(x)
    lo = k - 1 - pad
    xp = jnp.pad(xd, ((0, 0), (0, 0), (lo, lo + op_h), (lo, lo + op_w)))
    w_conv = jnp.transpose(w_iohw, (1, 0, 2, 3))[:, :, ::-1, ::-1]
    y = jax.lax.conv_general_dilated(
        xp.astype(jnp.bfloat16), w_conv.astype(jnp.bfloat16),
        window_strides=(1, 1), padding=((0, 0), (0, 0)),
        dimension_numbers=("NCHW", "OIHW", "NCHW"),
        preferred_element_type=jnp.float32)
    return jnp.maximum(y + b[None, :, None, None], 0.0)


def reference_forward(params, x):
    s0 = x.shape[2:]
    x1 = _ref_conv(x, params["enc1_w"], params["enc1_b"], 2, 2); s1 = x1.shape[2:]
    x2 = _ref_conv(x1, params["enc2_w"], params["enc2_b"], 2, 1); s2 = x2.shape[2:]
    x3 = _ref_conv(x2, params["enc3_w"], params["enc3_b"], 2, 1)
    y = _ref_conv_transpose(x3, params["dec1_w"], params["dec1_b"], 2, 1, s2)
    y = _ref_conv_transpose(y, params["dec2_w"], params["dec2_b"], 2, 1, s1)
    y = _ref_conv_transpose(y, params["dec3_w"], params["dec3_b"], 2, 2, s0)
    return y


if __name__ == "__main__":
    key = jax.random.PRNGKey(0)
    pkey, xkey = jax.random.split(key)
    params = init_params(pkey)

    # Coef is (4, 4) in the module -> batch of 4; single-channel 16x16 images.
    x = jax.random.normal(xkey, (4, 1, 16, 16), jnp.float32)

    layers, out_chw = prepare_network(params, input_hw=(16, 16))
    out = jax.block_until_ready(network_forward(x, layers, out_chw=out_chw))
    assert out.shape == (4, 1, 16, 16), out.shape

    # Correctness check against a lax-conv reference with matching bf16 MXU
    # operands / f32 accumulation (validates stride/pad/output_padding,
    # flipped-kernel transpose-conv handling, bias, relu and flatten order).
    ref = reference_forward(params, x)
    err = float(jnp.max(jnp.abs(out - ref)))
    assert err < 2e-2, err

    print("KERNEL_OK")
</pallas_src>

<mosaic_0001>
module attributes {stable_mosaic.version = 11 : i64} {
  func.func @_fused_net_kernel(%arg0: i32, %arg1: memref<4x256xf32, #tpu.memory_space<vmem>>, %arg2: memref<256x640xbf16, #tpu.memory_space<vmem>>, %arg3: memref<1x640xf32, #tpu.memory_space<vmem>>, %arg4: memref<640x384xbf16, #tpu.memory_space<vmem>>, %arg5: memref<1x384xf32, #tpu.memory_space<vmem>>, %arg6: memref<384x128xbf16, #tpu.memory_space<vmem>>, %arg7: memref<1x128xf32, #tpu.memory_space<vmem>>, %arg8: memref<128x384xbf16, #tpu.memory_space<vmem>>, %arg9: memref<1x384xf32, #tpu.memory_space<vmem>>, %arg10: memref<384x640xbf16, #tpu.memory_space<vmem>>, %arg11: memref<1x640xf32, #tpu.memory_space<vmem>>, %arg12: memref<640x256xbf16, #tpu.memory_space<vmem>>, %arg13: memref<1x256xf32, #tpu.memory_space<vmem>>, %arg14: memref<4x256xf32, #tpu.memory_space<vmem>>) attributes {dimension_semantics = [#tpu.dimension_semantics<arbitrary>], iteration_bounds = array<i64: 1>, scalar_prefetch = 0 : i64, scratch_operands = 0 : i64, tpu.core_type = #tpu.core_type<tc>, window_params = [{pipeline_mode = #tpu.pipeline_mode<synchronous>, transform_indices = @transform_0, window_bounds = array<i64: 4, 256>}, {pipeline_mode = #tpu.pipeline_mode<synchronous>, transform_indices = @transform_1, window_bounds = array<i64: 256, 640>}, {pipeline_mode = #tpu.pipeline_mode<synchronous>, transform_indices = @transform_2, window_bounds = array<i64: 1, 640>}, {pipeline_mode = #tpu.pipeline_mode<synchronous>, transform_indices = @transform_3, window_bounds = array<i64: 640, 384>}, {pipeline_mode = #tpu.pipeline_mode<synchronous>, transform_indices = @transform_4, window_bounds = array<i64: 1, 384>}, {pipeline_mode = #tpu.pipeline_mode<synchronous>, transform_indices = @transform_5, window_bounds = array<i64: 384, 128>}, {pipeline_mode = #tpu.pipeline_mode<synchronous>, transform_indices = @transform_6, window_bounds = array<i64: 1, 128>}, {pipeline_mode = #tpu.pipeline_mode<synchronous>, transform_indices = @transform_7, window_bounds = array<i64: 128, 384>}, {pipeline_mode = #tpu.pipeline_mode<synchronous>, transform_indices = @transform_8, window_bounds = array<i64: 1, 384>}, {pipeline_mode = #tpu.pipeline_mode<synchronous>, transform_indices = @transform_9, window_bounds = array<i64: 384, 640>}, {pipeline_mode = #tpu.pipeline_mode<synchronous>, transform_indices = @transform_10, window_bounds = array<i64: 1, 640>}, {pipeline_mode = #tpu.pipeline_mode<synchronous>, transform_indices = @transform_11, window_bounds = array<i64: 640, 256>}, {pipeline_mode = #tpu.pipeline_mode<synchronous>, transform_indices = @transform_12, window_bounds = array<i64: 1, 256>}, {pipeline_mode = #tpu.pipeline_mode<synchronous>, transform_indices = @transform_13, window_bounds = array<i64: 4, 256>}]} {
    %c0 = arith.constant 0 : index
    %c0_0 = arith.constant 0 : index
    %0 = vector.load %arg1[%c0, %c0_0] : memref<4x256xf32, #tpu.memory_space<vmem>>, vector<4x256xf32>
    %1 = arith.truncf %0 : vector<4x256xf32> to vector<4x256xbf16>
    %c0_1 = arith.constant 0 : index
    %c0_2 = arith.constant 0 : index
    %2 = vector.load %arg2[%c0_1, %c0_2] : memref<256x640xbf16, #tpu.memory_space<vmem>>, vector<256x640xbf16>
    %cst = arith.constant dense<0.000000e+00> : vector<4x640xf32>
    %3 = tpu.matmul %1, %2, %cst {dimension_numbers = #tpu.dot_dimension_numbers<[1], [0], [0], [1], [0, 0, 1, 1], [], []>} : vector<4x256xbf16>, vector<256x640xbf16>, vector<4x640xf32> -> vector<4x640xf32>
    %c0_3 = arith.constant 0 : index
    %c0_4 = arith.constant 0 : index
    %4 = vector.load %arg3[%c0_3, %c0_4] : memref<1x640xf32, #tpu.memory_space<vmem>>, vector<1x640xf32>
    %5 = vector.broadcast %4 : vector<1x640xf32> to vector<4x640xf32>
    %6 = arith.addf %3, %5 : vector<4x640xf32>
    %cst_5 = arith.constant 0.000000e+00 : f32
    %7 = vector.broadcast %cst_5 : f32 to vector<4x640xf32>
    %8 = arith.maximumf %6, %7 : vector<4x640xf32>
    %9 = arith.truncf %8 : vector<4x640xf32> to vector<4x640xbf16>
    %c0_6 = arith.constant 0 : index
    %c0_7 = arith.constant 0 : index
    %10 = vector.load %arg4[%c0_6, %c0_7] : memref<640x384xbf16, #tpu.memory_space<vmem>>, vector<640x384xbf16>
    %cst_8 = arith.constant dense<0.000000e+00> : vector<4x384xf32>
    %11 = tpu.matmul %9, %10, %cst_8 {dimension_numbers = #tpu.dot_dimension_numbers<[1], [0], [0], [1], [0, 0, 1, 1], [], []>} : vector<4x640xbf16>, vector<640x384xbf16>, vector<4x384xf32> -> vector<4x384xf32>
    %c0_9 = arith.constant 0 : index
    %c0_10 = arith.constant 0 : index
    %12 = vector.load %arg5[%c0_9, %c0_10] : memref<1x384xf32, #tpu.memory_space<vmem>>, vector<1x384xf32>
    %13 = vector.broadcast %12 : vector<1x384xf32> to vector<4x384xf32>
    %14 = arith.addf %11, %13 : vector<4x384xf32>
    %cst_11 = arith.constant 0.000000e+00 : f32
    %15 = vector.broadcast %cst_11 : f32 to vector<4x384xf32>
    %16 = arith.maximumf %14, %15 : vector<4x384xf32>
    %17 = arith.truncf %16 : vector<4x384xf32> to vector<4x384xbf16>
    %c0_12 = arith.constant 0 : index
    %c0_13 = arith.constant 0 : index
    %18 = vector.load %arg6[%c0_12, %c0_13] : memref<384x128xbf16, #tpu.memory_space<vmem>>, vector<384x128xbf16>
    %cst_14 = arith.constant dense<0.000000e+00> : vector<4x128xf32>
    %19 = tpu.matmul %17, %18, %cst_14 {dimension_numbers = #tpu.dot_dimension_numbers<[1], [0], [0], [1], [0, 0, 1, 1], [], []>} : vector<4x384xbf16>, vector<384x128xbf16>, vector<4x128xf32> -> vector<4x128xf32>
    %c0_15 = arith.constant 0 : index
    %c0_16 = arith.constant 0 : index
    %20 = vector.load %arg7[%c0_15, %c0_16] : memref<1x128xf32, #tpu.memory_space<vmem>>, vector<1x128xf32>
    %21 = vector.broadcast %20 : vector<1x128xf32> to vector<4x128xf32>
    %22 = arith.addf %19, %21 : vector<4x128xf32>
    %cst_17 = arith.constant 0.000000e+00 : f32
    %23 = vector.broadcast %cst_17 : f32 to vector<4x128xf32>
    %24 = arith.maximumf %22, %23 : vector<4x128xf32>
    %25 = arith.truncf %24 : vector<4x128xf32> to vector<4x128xbf16>
    %c0_18 = arith.constant 0 : index
    %c0_19 = arith.constant 0 : index
    %26 = vector.load %arg8[%c0_18, %c0_19] : memref<128x384xbf16, #tpu.memory_space<vmem>>, vector<128x384xbf16>
    %cst_20 = arith.constant dense<0.000000e+00> : vector<4x384xf32>
    %27 = tpu.matmul %25, %26, %cst_20 {dimension_numbers = #tpu.dot_dimension_numbers<[1], [0], [0], [1], [0, 0, 1, 1], [], []>} : vector<4x128xbf16>, vector<128x384xbf16>, vector<4x384xf32> -> vector<4x384xf32>
    %c0_21 = arith.constant 0 : index
    %c0_22 = arith.constant 0 : index
    %28 = vector.load %arg9[%c0_21, %c0_22] : memref<1x384xf32, #tpu.memory_space<vmem>>, vector<1x384xf32>
    %29 = vector.broadcast %28 : vector<1x384xf32> to vector<4x384xf32>
    %30 = arith.addf %27, %29 : vector<4x384xf32>
    %cst_23 = arith.constant 0.000000e+00 : f32
    %31 = vector.broadcast %cst_23 : f32 to vector<4x384xf32>
    %32 = arith.maximumf %30, %31 : vector<4x384xf32>
    %33 = arith.truncf %32 : vector<4x384xf32> to vector<4x384xbf16>
    %c0_24 = arith.constant 0 : index
    %c0_25 = arith.constant 0 : index
    %34 = vector.load %arg10[%c0_24, %c0_25] : memref<384x640xbf16, #tpu.memory_space<vmem>>, vector<384x640xbf16>
    %cst_26 = arith.constant dense<0.000000e+00> : vector<4x640xf32>
    %35 = tpu.matmul %33, %34, %cst_26 {dimension_numbers = #tpu.dot_dimension_numbers<[1], [0], [0], [1], [0, 0, 1, 1], [], []>} : vector<4x384xbf16>, vector<384x640xbf16>, vector<4x640xf32> -> vector<4x640xf32>
    %c0_27 = arith.constant 0 : index
    %c0_28 = arith.constant 0 : index
    %36 = vector.load %arg11[%c0_27, %c0_28] : memref<1x640xf32, #tpu.memory_space<vmem>>, vector<1x640xf32>
    %37 = vector.broadcast %36 : vector<1x640xf32> to vector<4x640xf32>
    %38 = arith.addf %35, %37 : vector<4x640xf32>
    %cst_29 = arith.constant 0.000000e+00 : f32
    %39 = vector.broadcast %cst_29 : f32 to vector<4x640xf32>
    %40 = arith.maximumf %38, %39 : vector<4x640xf32>
    %41 = arith.truncf %40 : vector<4x640xf32> to vector<4x640xbf16>
    %c0_30 = arith.constant 0 : index
    %c0_31 = arith.constant 0 : index
    %42 = vector.load %arg12[%c0_30, %c0_31] : memref<640x256xbf16, #tpu.memory_space<vmem>>, vector<640x256xbf16>
    %cst_32 = arith.constant dense<0.000000e+00> : vector<4x256xf32>
    %43 = tpu.matmul %41, %42, %cst_32 {dimension_numbers = #tpu.dot_dimension_numbers<[1], [0], [0], [1], [0, 0, 1, 1], [], []>} : vector<4x640xbf16>, vector<640x256xbf16>, vector<4x256xf32> -> vector<4x256xf32>
    %c0_33 = arith.constant 0 : index
    %c0_34 = arith.constant 0 : index
    %44 = vector.load %arg13[%c0_33, %c0_34] : memref<1x256xf32, #tpu.memory_space<vmem>>, vector<1x256xf32>
    %45 = vector.broadcast %44 : vector<1x256xf32> to vector<4x256xf32>
    %46 = arith.addf %43, %45 : vector<4x256xf32>
    %cst_35 = arith.constant 0.000000e+00 : f32
    %47 = vector.broadcast %cst_35 : f32 to vector<4x256xf32>
    %48 = arith.maximumf %46, %47 : vector<4x256xf32>
    %c0_36 = arith.constant 0 : index
    %c0_37 = arith.constant 0 : index
    %49 = vector.load %arg14[%c0_36, %c0_37] : memref<4x256xf32, #tpu.memory_space<vmem>>, vector<4x256xf32>
    tpu.vector_store %arg14[%c0_36, %c0_37], %48 {strides = array<i32>} : memref<4x256xf32, #tpu.memory_space<vmem>>, vector<4x256xf32>,
    return
  }
  func.func @transform_0(%arg0: i32) -> (i32, i32) {
    %c0_i32 = arith.constant 0 : i32
    %c0_i32_0 = arith.constant 0 : i32
    %c0_i32_1 = arith.constant 0 : i32
    return %c0_i32, %c0_i32_0 : i32, i32
  }
  func.func @transform_1(%arg0: i32) -> (i32, i32) {
    %c0_i32 = arith.constant 0 : i32
    %c0_i32_0 = arith.constant 0 : i32
    %c0_i32_1 = arith.constant 0 : i32
    return %c0_i32, %c0_i32_0 : i32, i32
  }
  func.func @transform_2(%arg0: i32) -> (i32, i32) {
    %c0_i32 = arith.constant 0 : i32
    %c0_i32_0 = arith.constant 0 : i32
    %c0_i32_1 = arith.constant 0 : i32
    return %c0_i32, %c0_i32_0 : i32, i32
  }
  func.func @transform_3(%arg0: i32) -> (i32, i32) {
    %c0_i32 = arith.constant 0 : i32
    %c0_i32_0 = arith.constant 0 : i32
    %c0_i32_1 = arith.constant 0 : i32
    return %c0_i32, %c0_i32_0 : i32, i32
  }
  func.func @transform_4(%arg0: i32) -> (i32, i32) {
    %c0_i32 = arith.constant 0 : i32
    %c0_i32_0 = arith.constant 0 : i32
    %c0_i32_1 = arith.constant 0 : i32
    return %c0_i32, %c0_i32_0 : i32, i32
  }
  func.func @transform_5(%arg0: i32) -> (i32, i32) {
    %c0_i32 = arith.constant 0 : i32
    %c0_i32_0 = arith.constant 0 : i32
    %c0_i32_1 = arith.constant 0 : i32
    return %c0_i32, %c0_i32_0 : i32, i32
  }
  func.func @transform_6(%arg0: i32) -> (i32, i32) {
    %c0_i32 = arith.constant 0 : i32
    %c0_i32_0 = arith.constant 0 : i32
    %c0_i32_1 = arith.constant 0 : i32
    return %c0_i32, %c0_i32_0 : i32, i32
  }
  func.func @transform_7(%arg0: i32) -> (i32, i32) {
    %c0_i32 = arith.constant 0 : i32
    %c0_i32_0 = arith.constant 0 : i32
    %c0_i32_1 = arith.constant 0 : i32
    return %c0_i32, %c0_i32_0 : i32, i32
  }
  func.func @transform_8(%arg0: i32) -> (i32, i32) {
    %c0_i32 = arith.constant 0 : i32
    %c0_i32_0 = arith.constant 0 : i32
    %c0_i32_1 = arith.constant 0 : i32
    return %c0_i32, %c0_i32_0 : i32, i32
  }
  func.func @transform_9(%arg0: i32) -> (i32, i32) {
    %c0_i32 = arith.constant 0 : i32
    %c0_i32_0 = arith.constant 0 : i32
    %c0_i32_1 = arith.constant 0 : i32
    return %c0_i32, %c0_i32_0 : i32, i32
  }
  func.func @transform_10(%arg0: i32) -> (i32, i32) {
    %c0_i32 = arith.constant 0 : i32
    %c0_i32_0 = arith.constant 0 : i32
    %c0_i32_1 = arith.constant 0 : i32
    return %c0_i32, %c0_i32_0 : i32, i32
  }
  func.func @transform_11(%arg0: i32) -> (i32, i32) {
    %c0_i32 = arith.constant 0 : i32
    %c0_i32_0 = arith.constant 0 : i32
    %c0_i32_1 = arith.constant 0 : i32
    return %c0_i32, %c0_i32_0 : i32, i32
  }
  func.func @transform_12(%arg0: i32) -> (i32, i32) {
    %c0_i32 = arith.constant 0 : i32
    %c0_i32_0 = arith.constant 0 : i32
    %c0_i32_1 = arith.constant 0 : i32
    return %c0_i32, %c0_i32_0 : i32, i32
  }
  func.func @transform_13(%arg0: i32) -> (i32, i32) {
    %c0_i32 = arith.constant 0 : i32
    %c0_i32_0 = arith.constant 0 : i32
    %c0_i32_1 = arith.constant 0 : i32
    return %c0_i32, %c0_i32_0 : i32, i32
  }
}

</mosaic_0001>

<llo_original>
// kernel: network_forward.1
$region0: #{network_forward.1}
  #allocation0 [shape = 'u32[]', space=smem, size = 0x4, offset = 0x4, fixed_abs, tag = 'smem constant byte address 0x4 - core index']
  #allocation1 [shape = 'u32[144,128]{1,0:T(1,128)}', space=vmem, size = 0x12000, scoped, tag = 'internal scratch']
  %s0 = inlined_call_operand.vmem [shape: f32[4,256], index: 0, kind: input, shape index: {}]
  %s1 = inlined_call_operand.hbm [shape: bf16[256,640], index: 1, kind: input, shape index: {}]
  %s2 = inlined_call_operand.vmem [shape: f32[1,640], index: 2, kind: input, shape index: {}]
  %s3 = inlined_call_operand.hbm [shape: bf16[640,384], index: 3, kind: input, shape index: {}]
  %s4 = inlined_call_operand.vmem [shape: f32[1,384], index: 4, kind: input, shape index: {}]
  %s5 = inlined_call_operand.hbm [shape: bf16[384,128], index: 5, kind: input, shape index: {}]
  %s6 = inlined_call_operand.vmem [shape: f32[1,128], index: 6, kind: input, shape index: {}]
  %s7 = inlined_call_operand.hbm [shape: bf16[128,384], index: 7, kind: input, shape index: {}]
  %s8 = inlined_call_operand.vmem [shape: f32[1,384], index: 8, kind: input, shape index: {}]
  %s9 = inlined_call_operand.hbm [shape: bf16[384,640], index: 9, kind: input, shape index: {}]
  %s10 = inlined_call_operand.vmem [shape: f32[1,640], index: 10, kind: input, shape index: {}]
  %s11 = inlined_call_operand.hbm [shape: bf16[640,256], index: 11, kind: input, shape index: {}]
  %s12 = inlined_call_operand.vmem [shape: f32[1,256], index: 12, kind: input, shape index: {}]
  %s13 = inlined_call_operand.vmem [shape: f32[4,256], index: 13, kind: output, shape index: {}]
  %s14 = sld [smem:[#allocation0]]
  $region86: #{network_forward.1} parent=0
    _
  %s16 = ssub.s32 1, %s14
  %s17 = scalar_select 0, %s16, %s14
  $region1: #{network_forward.1} parent=0
    #allocation2 [shape = 'u8[327680]{0}', space=vmem, size = 0x50000, scoped, tag = 'input window, operand 1, single buffered']
    #allocation3 [shape = 's32[1]{0}', space=sflag, size = 0x4, scoped, tag = 'scoped memory for network_forward.1']
    #allocation4 [shape = 'u8[491520]{0}', space=vmem, size = 0x78000, scoped, tag = 'input window, operand 3, single buffered']
    #allocation5 [shape = 's32[1]{0}', space=sflag, size = 0x4, scoped, tag = 'scoped memory for network_forward.1']
    #allocation6 [shape = 'u8[98304]{0}', space=vmem, size = 0x18000, scoped, tag = 'input window, operand 5, single buffered']
    #allocation7 [shape = 'u8[98304]{0}', space=vmem, size = 0x18000, scoped, tag = 'input window, operand 7, single buffered']
    #allocation8 [shape = 's32[1]{0}', space=sflag, size = 0x4, scoped, tag = 'scoped memory for network_forward.1']
    #allocation9 [shape = 'u8[491520]{0}', space=vmem, size = 0x78000, scoped, tag = 'input window, operand 9, single buffered']
    #allocation10 [shape = 'u8[327680]{0}', space=vmem, size = 0x50000, scoped, tag = 'input window, operand 11, single buffered']
    #allocation11 [shape = 's32[1]{0}', space=sflag, size = 0x4, scoped, tag = 'scoped memory for network_forward.1']
    %18 = vsyncpa [#allocation3], 0
    %19 = vsyncpa [#allocation5], 0
    %20 = vsyncpa [#allocation8], 0
    %21 = vsyncpa [#allocation11], 0
    // Predicated region
    $region2: #{network_forward.1} parent=1 // pred_check
      _
    $region3: #{network_forward.1} parent=1 // pred_check_branch
      %23 = sbr.rel (0) target = $region5
    $region4: #{network_forward.1} parent=1 // pred_region
      _
    $region5: #{network_forward.1} parent=1 // pred_fallthru
      _
    // Predicated region
    $region6: #{network_forward.1} parent=1 // pred_check
      _
    $region7: #{network_forward.1} parent=1 // pred_check_branch
      %25 = sbr.rel (0) target = $region9
    $region8: #{network_forward.1} parent=1 // pred_region
      %s27 = ssub.s32 10240, 10240
      %28 = vsyncadd [#allocation3], %s27
      %s29 = sshll.u32 [#allocation2], 4
      %s30 = int_to_ptr.vmem [resolvable:$true] %s29
      %35 = dma.hbm_to_vmem [thread:$0]  %s1, 10240, %s30, [#allocation3], 320, 320, 20
    $region9: #{network_forward.1} parent=1 // pred_fallthru
      _
    // Predicated region
    $region10: #{network_forward.1} parent=1 // pred_check
      _
    $region11: #{network_forward.1} parent=1 // pred_check_branch
      %37 = sbr.rel (0) target = $region13
    $region12: #{network_forward.1} parent=1 // pred_region
      _
    $region13: #{network_forward.1} parent=1 // pred_fallthru
      _
    // Predicated region
    $region14: #{network_forward.1} parent=1 // pred_check
      _
    $region15: #{network_forward.1} parent=1 // pred_check_branch
      %39 = sbr.rel (0) target = $region17
    $region16: #{network_forward.1} parent=1 // pred_region
      %s41 = ssub.s32 15360, 15360
      %42 = vsyncadd [#allocation5], %s41
      %s43 = sshll.u32 [#allocation4], 4
      %s44 = int_to_ptr.vmem [resolvable:$true] %s43
      %49 = dma.hbm_to_vmem [thread:$0]  %s3, 15360, %s44, [#allocation5], 192, 192, 12
    $region17: #{network_forward.1} parent=1 // pred_fallthru
      _
    // Predicated region
    $region18: #{network_forward.1} parent=1 // pred_check
      _
    $region19: #{network_forward.1} parent=1 // pred_check_branch
      %51 = sbr.rel (0) target = $region21
    $region20: #{network_forward.1} parent=1 // pred_region
      _
    $region21: #{network_forward.1} parent=1 // pred_fallthru
      _
    // Predicated region
    $region22: #{network_forward.1} parent=1 // pred_check
      _
    $region23: #{network_forward.1} parent=1 // pred_check_branch
      %53 = sbr.rel (0) target = $region25
    $region24: #{network_forward.1} parent=1 // pred_region
      %s55 = ssub.s32 3072, 3072
      %56 = vsyncadd [#allocation5], %s55
      %s57 = sshll.u32 [#allocation6], 4
      %s58 = int_to_ptr.vmem [resolvable:$true] %s57
      %63 = dma.hbm_to_vmem [thread:$0]  %s5, 3072, %s58, [#allocation5], 64, 64, 4
    $region25: #{network_forward.1} parent=1 // pred_fallthru
      _
    // Predicated region
    $region26: #{network_forward.1} parent=1 // pred_check
      _
    $region27: #{network_forward.1} parent=1 // pred_check_branch
      %65 = sbr.rel (0) target = $region29
    $region28: #{network_forward.1} parent=1 // pred_region
      _
    $region29: #{network_forward.1} parent=1 // pred_fallthru
      _
    // Predicated region
    $region30: #{network_forward.1} parent=1 // pred_check
      _
    $region31: #{network_forward.1} parent=1 // pred_check_branch
      %67 = sbr.rel (0) target = $region33
    $region32: #{network_forward.1} parent=1 // pred_region
      %s69 = ssub.s32 3072, 3072
      %70 = vsyncadd [#allocation8], %s69
      %s71 = sshll.u32 [#allocation7], 4
      %s72 = int_to_ptr.vmem [resolvable:$true] %s71
      %77 = dma.hbm_to_vmem [thread:$0]  %s7, 3072, %s72, [#allocation8], 192, 192, 12
    $region33: #{network_forward.1} parent=1 // pred_fallthru
      _
    // Predicated region
    $region34: #{network_forward.1} parent=1 // pred_check
      _
    $region35: #{network_forward.1} parent=1 // pred_check_branch
      %79 = sbr.rel (0) target = $region37
    $region36: #{network_forward.1} parent=1 // pred_region
      _
    $region37: #{network_forward.1} parent=1 // pred_fallthru
      _
    // Predicated region
    $region38: #{network_forward.1} parent=1 // pred_check
      _
    $region39: #{network_forward.1} parent=1 // pred_check_branch
      %81 = sbr.rel (0) target = $region41
    $region40: #{network_forward.1} parent=1 // pred_region
      %s83 = ssub.s32 15360, 15360
      %84 = vsyncadd [#allocation8], %s83
      %s85 = sshll.u32 [#allocation9], 4
      %s86 = int_to_ptr.vmem [resolvable:$true] %s85
      %91 = dma.hbm_to_vmem [thread:$0]  %s9, 15360, %s86, [#allocation8], 320, 320, 20
    $region41: #{network_forward.1} parent=1 // pred_fallthru
      _
    // Predicated region
    $region42: #{network_forward.1} parent=1 // pred_check
      _
    $region43: #{network_forward.1} parent=1 // pred_check_branch
      %93 = sbr.rel (0) target = $region45
    $region44: #{network_forward.1} parent=1 // pred_region
      _
    $region45: #{network_forward.1} parent=1 // pred_fallthru
      _
    // Predicated region
    $region46: #{network_forward.1} parent=1 // pred_check
      _
    $region47: #{network_forward.1} parent=1 // pred_check_branch
      %95 = sbr.rel (0) target = $region49
    $region48: #{network_forward.1} parent=1 // pred_region
      %s97 = ssub.s32 10240, 10240
      %98 = vsyncadd [#allocation11], %s97
      %s99 = sshll.u32 [#allocation10], 4
      %s100 = int_to_ptr.vmem [resolvable:$true] %s99
      %105 = dma.hbm_to_vmem [thread:$0]  %s11, 10240, %s100, [#allocation11], 128, 128, 8
    $region49: #{network_forward.1} parent=1 // pred_fallthru
      _
    // Predicated region
    $region50: #{network_forward.1} parent=1 // pred_check
      _
    $region51: #{network_forward.1} parent=1 // pred_check_branch
      %107 = sbr.rel (0) target = $region53
    $region52: #{network_forward.1} parent=1 // pred_region
      _
    $region53: #{network_forward.1} parent=1 // pred_fallthru
      _
    // Predicated region
    $region54: #{network_forward.1} parent=1 // pred_check
      _
    $region55: #{network_forward.1} parent=1 // pred_check_branch
      %109 = sbr.rel (0) target = $region57
    $region56: #{network_forward.1} parent=1 // pred_region
      %110 = dma.done [#allocation3], 10240
    $region57: #{network_forward.1} parent=1 // pred_fallthru
      _
    // Predicated region
    $region58: #{network_forward.1} parent=1 // pred_check
      _
    $region59: #{network_forward.1} parent=1 // pred_check_branch
      %112 = sbr.rel (0) target = $region61
    $region60: #{network_forward.1} parent=1 // pred_region
      %113 = dma.done [#allocation5], 15360
    $region61: #{network_forward.1} parent=1 // pred_fallthru
      _
    // Predicated region
    $region62: #{network_forward.1} parent=1 // pred_check
      _
    $region63: #{network_forward.1} parent=1 // pred_check_branch
      %115 = sbr.rel (0) target = $region65
    $region64: #{network_forward.1} parent=1 // pred_region
      %116 = dma.done [#allocation5], 3072
    $region65: #{network_forward.1} parent=1 // pred_fallthru
      _
    // Predicated region
    $region66: #{network_forward.1} parent=1 // pred_check
      _
    $region67: #{network_forward.1} parent=1 // pred_check_branch
      %118 = sbr.rel (0) target = $region69
    $region68: #{network_forward.1} parent=1 // pred_region
      %119 = dma.done [#allocation8], 3072
    $region69: #{network_forward.1} parent=1 // pred_fallthru
      _
    // Predicated region
    $region70: #{network_forward.1} parent=1 // pred_check
      _
    $region71: #{network_forward.1} parent=1 // pred_check_branch
      %121 = sbr.rel (0) target = $region73
    $region72: #{network_forward.1} parent=1 // pred_region
      %122 = dma.done [#allocation8], 15360
    $region73: #{network_forward.1} parent=1 // pred_fallthru
      _
    // Predicated region
    $region74: #{network_forward.1} parent=1 // pred_check
      _
    $region75: #{network_forward.1} parent=1 // pred_check_branch
      %124 = sbr.rel (0) target = $region77
    $region76: #{network_forward.1} parent=1 // pred_region
      %125 = dma.done [#allocation11], 10240
    $region77: #{network_forward.1} parent=1 // pred_fallthru
      _
    %v127 = vld [vmem:[%s0] sm:$0xff]
    %v129 = vcombine.high %v127, %v127
    %v131 = vpack.c.bf16 %v127, %v127
    %v132 = vpack.c.bf16 %v129, %v129
    %v133 = vld [vmem:[#allocation2] sm:$0xff]
    %v134 = vld [vmem:[#allocation2 + $0x8] sm:$0xff]
    %v135 = vld [vmem:[#allocation2 + $0x10] sm:$0xf]
    %v136 = vld [vmem:[#allocation2 + $0x14] sm:$0xff]
    %v137 = vld [vmem:[#allocation2 + $0x1c] sm:$0xff]
    %v138 = vld [vmem:[#allocation2 + $0x24] sm:$0xf]
    %v139 = vld [vmem:[#allocation2 + $0x28] sm:$0xff]
    %v140 = vld [vmem:[#allocation2 + $0x30] sm:$0xff]
    %v141 = vld [vmem:[#allocation2 + $0x38] sm:$0xf]
    %v142 = vld [vmem:[#allocation2 + $0x3c] sm:$0xff]
    %v143 = vld [vmem:[#allocation2 + $0x44] sm:$0xff]
    %v144 = vld [vmem:[#allocation2 + $0x4c] sm:$0xf]
    %v145 = vld [vmem:[#allocation2 + $0x50] sm:$0xff]
    %v146 = vld [vmem:[#allocation2 + $0x58] sm:$0xff]
    %v147 = vld [vmem:[#allocation2 + $0x60] sm:$0xf]
    %v148 = vld [vmem:[#allocation2 + $0x64] sm:$0xff]
    %v149 = vld [vmem:[#allocation2 + $0x6c] sm:$0xff]
    %v150 = vld [vmem:[#allocation2 + $0x74] sm:$0xf]
    %v151 = vld [vmem:[#allocation2 + $0x78] sm:$0xff]
    %v152 = vld [vmem:[#allocation2 + $0x80] sm:$0xff]
    %v153 = vld [vmem:[#allocation2 + $0x88] sm:$0xf]
    %v154 = vld [vmem:[#allocation2 + $0x8c] sm:$0xff]
    %v155 = vld [vmem:[#allocation2 + $0x94] sm:$0xff]
    %v156 = vld [vmem:[#allocation2 + $0x9c] sm:$0xf]
    %v157 = vld [vmem:[#allocation2 + $0xa0] sm:$0xff]
    %v158 = vld [vmem:[#allocation2 + $0xa8] sm:$0xff]
    %v159 = vld [vmem:[#allocation2 + $0xb0] sm:$0xf]
    %v160 = vld [vmem:[#allocation2 + $0xb4] sm:$0xff]
    %v161 = vld [vmem:[#allocation2 + $0xbc] sm:$0xff]
    %v162 = vld [vmem:[#allocation2 + $0xc4] sm:$0xf]
    %v163 = vld [vmem:[#allocation2 + $0xc8] sm:$0xff]
    %v164 = vld [vmem:[#allocation2 + $0xd0] sm:$0xff]
    %v165 = vld [vmem:[#allocation2 + $0xd8] sm:$0xf]
    %v166 = vld [vmem:[#allocation2 + $0xdc] sm:$0xff]
    %v167 = vld [vmem:[#allocation2 + $0xe4] sm:$0xff]
    %v168 = vld [vmem:[#allocation2 + $0xec] sm:$0xf]
    %v169 = vld [vmem:[#allocation2 + $0xf0] sm:$0xff]
    %v170 = vld [vmem:[#allocation2 + $0xf8] sm:$0xff]
    %v171 = vld [vmem:[#allocation2 + $0x100] sm:$0xf]
    %v172 = vld [vmem:[#allocation2 + $0x104] sm:$0xff]
    %v173 = vld [vmem:[#allocation2 + $0x10c] sm:$0xff]
    %v174 = vld [vmem:[#allocation2 + $0x114] sm:$0xf]
    %v175 = vld [vmem:[#allocation2 + $0x118] sm:$0xff]
    %v176 = vld [vmem:[#allocation2 + $0x120] sm:$0xff]
    %v177 = vld [vmem:[#allocation2 + $0x128] sm:$0xf]
    %v178 = vld [vmem:[#allocation2 + $0x12c] sm:$0xff]
    %v179 = vld [vmem:[#allocation2 + $0x134] sm:$0xff]
    %v180 = vld [vmem:[#allocation2 + $0x13c] sm:$0xf]
    %v181 = vld [vmem:[#allocation2 + $0x140] sm:$0xff]
    %v182 = vld [vmem:[#allocation2 + $0x148] sm:$0xff]
    %v183 = vld [vmem:[#allocation2 + $0x150] sm:$0xf]
    %v184 = vld [vmem:[#allocation2 + $0x154] sm:$0xff]
    %v185 = vld [vmem:[#allocation2 + $0x15c] sm:$0xff]
    %v186 = vld [vmem:[#allocation2 + $0x164] sm:$0xf]
    %v187 = vld [vmem:[#allocation2 + $0x168] sm:$0xff]
    %v188 = vld [vmem:[#allocation2 + $0x170] sm:$0xff]
    %v189 = vld [vmem:[#allocation2 + $0x178] sm:$0xf]
    %v190 = vld [vmem:[#allocation2 + $0x17c] sm:$0xff]
    %v191 = vld [vmem:[#allocation2 + $0x184] sm:$0xff]
    %v192 = vld [vmem:[#allocation2 + $0x18c] sm:$0xf]
    %v193 = vld [vmem:[#allocation2 + $0x190] sm:$0xff]
    %v194 = vld [vmem:[#allocation2 + $0x198] sm:$0xff]
    %v195 = vld [vmem:[#allocation2 + $0x1a0] sm:$0xf]
    %v196 = vld [vmem:[#allocation2 + $0x1a4] sm:$0xff]
    %v197 = vld [vmem:[#allocation2 + $0x1ac] sm:$0xff]
    %v198 = vld [vmem:[#allocation2 + $0x1b4] sm:$0xf]
    %v199 = vld [vmem:[#allocation2 + $0x1b8] sm:$0xff]
    %v200 = vld [vmem:[#allocation2 + $0x1c0] sm:$0xff]
    %v201 = vld [vmem:[#allocation2 + $0x1c8] sm:$0xf]
    %v202 = vld [vmem:[#allocation2 + $0x1cc] sm:$0xff]
    %v203 = vld [vmem:[#allocation2 + $0x1d4] sm:$0xff]
    %v204 = vld [vmem:[#allocation2 + $0x1dc] sm:$0xf]
    %v205 = vld [vmem:[#allocation2 + $0x1e0] sm:$0xff]
    %v206 = vld [vmem:[#allocation2 + $0x1e8] sm:$0xff]
    %v207 = vld [vmem:[#allocation2 + $0x1f0] sm:$0xf]
    %v208 = vld [vmem:[#allocation2 + $0x1f4] sm:$0xff]
    %v209 = vld [vmem:[#allocation2 + $0x1fc] sm:$0xff]
    %v210 = vld [vmem:[#allocation2 + $0x204] sm:$0xf]
    %v211 = vld [vmem:[#allocation2 + $0x208] sm:$0xff]
    %v212 = vld [vmem:[#allocation2 + $0x210] sm:$0xff]
    %v213 = vld [vmem:[#allocation2 + $0x218] sm:$0xf]
    %v214 = vld [vmem:[#allocation2 + $0x21c] sm:$0xff]
    %v215 = vld [vmem:[#allocation2 + $0x224] sm:$0xff]
    %v216 = vld [vmem:[#allocation2 + $0x22c] sm:$0xf]
    %v217 = vld [vmem:[#allocation2 + $0x230] sm:$0xff]
    %v218 = vld [vmem:[#allocation2 + $0x238] sm:$0xff]
    %v219 = vld [vmem:[#allocation2 + $0x240] sm:$0xf]
    %v220 = vld [vmem:[#allocation2 + $0x244] sm:$0xff]
    %v221 = vld [vmem:[#allocation2 + $0x24c] sm:$0xff]
    %v222 = vld [vmem:[#allocation2 + $0x254] sm:$0xf]
    %v223 = vld [vmem:[#allocation2 + $0x258] sm:$0xff]
    %v224 = vld [vmem:[#allocation2 + $0x260] sm:$0xff]
    %v225 = vld [vmem:[#allocation2 + $0x268] sm:$0xf]
    %v226 = vld [vmem:[#allocation2 + $0x26c] sm:$0xff]
    %v227 = vld [vmem:[#allocation2 + $0x274] sm:$0xff]
    %v228 = vld [vmem:[#allocation2 + $0x27c] sm:$0xf]
    %v229 = vld [vmem:[%s2] sm:$0x1f]
    %v231 = vlaneseq
    %v232 = vshrl.u32 %v231, 7
    %v233 = vsub.s32 0, %v232
    %v234 = vrot.slane %v229, %v233
    %v235 = vlaneseq
    %v236 = vshrl.u32 %v235, 7
    %v237 = vsub.s32 1, %v236
    %v238 = vrot.slane %v229, %v237
    %v239 = vlaneseq
    %v240 = vshrl.u32 %v239, 7
    %v241 = vsub.s32 2, %v240
    %v242 = vrot.slane %v229, %v241
    %v243 = vlaneseq
    %v244 = vshrl.u32 %v243, 7
    %v245 = vsub.s32 3, %v244
    %v246 = vrot.slane %v229, %v245
    %v247 = vlaneseq
    %v248 = vshrl.u32 %v247, 7
    %v249 = vsub.s32 4, %v248
    %v250 = vrot.slane %v229, %v249
    %v352 = vunpack.c.l.b16 %v133
    %v353 = vunpack.c.h.b16 %v133
    %v354 = vunpack.c.l.b16 %v134
    %v355 = vunpack.c.h.b16 %v134
    %v356 = vunpack.c.l.b16 %v135
    %v357 = vunpack.c.l.b16 %v136
    %v358 = vunpack.c.h.b16 %v136
    %v359 = vunpack.c.l.b16 %v137
    %v360 = vunpack.c.h.b16 %v137
    %v361 = vunpack.c.l.b16 %v138
    %v362 = vunpack.c.l.b16 %v139
    %v363 = vunpack.c.h.b16 %v139
    %v364 = vunpack.c.l.b16 %v140
    %v365 = vunpack.c.h.b16 %v140
    %v366 = vunpack.c.l.b16 %v141
    %v367 = vunpack.c.l.b16 %v142
    %v368 = vunpack.c.h.b16 %v142
    %v369 = vunpack.c.l.b16 %v143
    %v370 = vunpack.c.h.b16 %v143
    %v371 = vunpack.c.l.b16 %v144
    %v372 = vunpack.c.l.b16 %v145
    %v373 = vunpack.c.h.b16 %v145
    %v374 = vunpack.c.l.b16 %v146
    %v375 = vunpack.c.h.b16 %v146
    %v376 = vunpack.c.l.b16 %v147
    %v377 = vunpack.c.l.b16 %v148
    %v378 = vunpack.c.h.b16 %v148
    %v379 = vunpack.c.l.b16 %v149
    %v380 = vunpack.c.h.b16 %v149
    %v381 = vunpack.c.l.b16 %v150
    %v382 = vunpack.c.l.b16 %v151
    %v383 = vunpack.c.h.b16 %v151
    %v384 = vunpack.c.l.b16 %v152
    %v385 = vunpack.c.h.b16 %v152
    %v386 = vunpack.c.l.b16 %v153
    %v387 = vunpack.c.l.b16 %v154
    %v388 = vunpack.c.h.b16 %v154
    %v389 = vunpack.c.l.b16 %v155
    %v390 = vunpack.c.h.b16 %v155
    %v391 = vunpack.c.l.b16 %v156
    %v392 = vunpack.c.l.b16 %v157
    %v393 = vunpack.c.h.b16 %v157
    %v394 = vunpack.c.l.b16 %v158
    %v395 = vunpack.c.h.b16 %v158
    %v396 = vunpack.c.l.b16 %v159
    %v397 = vunpack.c.l.b16 %v160
    %v398 = vunpack.c.h.b16 %v160
    %v399 = vunpack.c.l.b16 %v161
    %v400 = vunpack.c.h.b16 %v161
    %v401 = vunpack.c.l.b16 %v162
    %v402 = vunpack.c.l.b16 %v163
    %v403 = vunpack.c.h.b16 %v163
    %v404 = vunpack.c.l.b16 %v164
    %v405 = vunpack.c.h.b16 %v164
    %v406 = vunpack.c.l.b16 %v165
    %v407 = vunpack.c.l.b16 %v166
    %v408 = vunpack.c.h.b16 %v166
    %v409 = vunpack.c.l.b16 %v167
    %v410 = vunpack.c.h.b16 %v167
    %v411 = vunpack.c.l.b16 %v168
    %v412 = vunpack.c.l.b16 %v169
    %v413 = vunpack.c.h.b16 %v169
    %v414 = vunpack.c.l.b16 %v170
    %v415 = vunpack.c.h.b16 %v170
    %v416 = vunpack.c.l.b16 %v171
    %v417 = vunpack.c.l.b16 %v172
    %v418 = vunpack.c.h.b16 %v172
    %v419 = vunpack.c.l.b16 %v173
    %v420 = vunpack.c.h.b16 %v173
    %v421 = vunpack.c.l.b16 %v174
    %v422 = vunpack.c.l.b16 %v175
    %v423 = vunpack.c.h.b16 %v175
    %v424 = vunpack.c.l.b16 %v176
    %v425 = vunpack.c.h.b16 %v176
    %v426 = vunpack.c.l.b16 %v177
    %v427 = vunpack.c.l.b16 %v178
    %v428 = vunpack.c.h.b16 %v178
    %v429 = vunpack.c.l.b16 %v179
    %v430 = vunpack.c.h.b16 %v179
    %v431 = vunpack.c.l.b16 %v180
    %v432 = vunpack.c.l.b16 %v181
    %v433 = vunpack.c.h.b16 %v181
    %v434 = vunpack.c.l.b16 %v182
    %v435 = vunpack.c.h.b16 %v182
    %v436 = vunpack.c.l.b16 %v183
    %v437 = vunpack.c.l.b16 %v184
    %v438 = vunpack.c.h.b16 %v184
    %v439 = vunpack.c.l.b16 %v185
    %v440 = vunpack.c.h.b16 %v185
    %v441 = vunpack.c.l.b16 %v186
    %v442 = vunpack.c.l.b16 %v187
    %v443 = vunpack.c.h.b16 %v187
    %v444 = vunpack.c.l.b16 %v188
    %v445 = vunpack.c.h.b16 %v188
    %v446 = vunpack.c.l.b16 %v189
    %v447 = vunpack.c.l.b16 %v190
    %v448 = vunpack.c.h.b16 %v190
    %v449 = vunpack.c.l.b16 %v191
    %v450 = vunpack.c.h.b16 %v191
    %v451 = vunpack.c.l.b16 %v192
    %v452 = vunpack.c.l.b16 %v193
    %v453 = vunpack.c.h.b16 %v193
    %v454 = vunpack.c.l.b16 %v194
    %v455 = vunpack.c.h.b16 %v194
    %v456 = vunpack.c.l.b16 %v195
    %v457 = vunpack.c.l.b16 %v196
    %v458 = vunpack.c.h.b16 %v196
    %v459 = vunpack.c.l.b16 %v197
    %v460 = vunpack.c.h.b16 %v197
    %v461 = vunpack.c.l.b16 %v198
    %v462 = vunpack.c.l.b16 %v199
    %v463 = vunpack.c.h.b16 %v199
    %v464 = vunpack.c.l.b16 %v200
    %v465 = vunpack.c.h.b16 %v200
    %v466 = vunpack.c.l.b16 %v201
    %v467 = vunpack.c.l.b16 %v202
    %v468 = vunpack.c.h.b16 %v202
    %v469 = vunpack.c.l.b16 %v203
    %v470 = vunpack.c.h.b16 %v203
    %v471 = vunpack.c.l.b16 %v204
    %v472 = vunpack.c.l.b16 %v205
    %v473 = vunpack.c.h.b16 %v205
    %v474 = vunpack.c.l.b16 %v206
    %v475 = vunpack.c.h.b16 %v206
    %v476 = vunpack.c.l.b16 %v207
    %v477 = vunpack.c.l.b16 %v208
    %v478 = vunpack.c.h.b16 %v208
    %v479 = vunpack.c.l.b16 %v209
    %v480 = vunpack.c.h.b16 %v209
    %v481 = vunpack.c.l.b16 %v210
    %v482 = vunpack.c.l.b16 %v211
    %v483 = vunpack.c.h.b16 %v211
    %v484 = vunpack.c.l.b16 %v212
    %v485 = vunpack.c.h.b16 %v212
    %v486 = vunpack.c.l.b16 %v213
    %v487 = vunpack.c.l.b16 %v214
    %v488 = vunpack.c.h.b16 %v214
    %v489 = vunpack.c.l.b16 %v215
    %v490 = vunpack.c.h.b16 %v215
    %v491 = vunpack.c.l.b16 %v216
    %v492 = vunpack.c.l.b16 %v217
    %v493 = vunpack.c.h.b16 %v217
    %v494 = vunpack.c.l.b16 %v218
    %v495 = vunpack.c.h.b16 %v218
    %v496 = vunpack.c.l.b16 %v219
    %v497 = vunpack.c.l.b16 %v220
    %v498 = vunpack.c.h.b16 %v220
    %v499 = vunpack.c.l.b16 %v221
    %v500 = vunpack.c.h.b16 %v221
    %v501 = vunpack.c.l.b16 %v222
    %v502 = vunpack.c.l.b16 %v223
    %v503 = vunpack.c.h.b16 %v223
    %v504 = vunpack.c.l.b16 %v224
    %v505 = vunpack.c.h.b16 %v224
    %v506 = vunpack.c.l.b16 %v225
    %v507 = vunpack.c.l.b16 %v226
    %v508 = vunpack.c.h.b16 %v226
    %v509 = vunpack.c.l.b16 %v227
    %v510 = vunpack.c.h.b16 %v227
    %v511 = vunpack.c.l.b16 %v228
    %v512 = vpack.c.b16 %v357, %v352
    %v513 = vpack.c.b16 %v358, %v353
    %v514 = vpack.c.b16 %v359, %v354
    %v515 = vpack.c.b16 %v360, %v355
    %v516 = vpack.c.b16 %v361, %v356
    %v517 = vpack.c.b16 %v367, %v362
    %v518 = vpack.c.b16 %v368, %v363
    %v519 = vpack.c.b16 %v369, %v364
    %v520 = vpack.c.b16 %v370, %v365
    %v521 = vpack.c.b16 %v371, %v366
    %v522 = vpack.c.b16 %v377, %v372
    %v523 = vpack.c.b16 %v378, %v373
    %v524 = vpack.c.b16 %v379, %v374
    %v525 = vpack.c.b16 %v380, %v375
    %v526 = vpack.c.b16 %v381, %v376
    %v527 = vpack.c.b16 %v387, %v382
    %v528 = vpack.c.b16 %v388, %v383
    %v529 = vpack.c.b16 %v389, %v384
    %v530 = vpack.c.b16 %v390, %v385
    %v531 = vpack.c.b16 %v391, %v386
    %v532 = vpack.c.b16 %v397, %v392
    %v533 = vpack.c.b16 %v398, %v393
    %v534 = vpack.c.b16 %v399, %v394
    %v535 = vpack.c.b16 %v400, %v395
    %v536 = vpack.c.b16 %v401, %v396
    %v537 = vpack.c.b16 %v407, %v402
    %v538 = vpack.c.b16 %v408, %v403
    %v539 = vpack.c.b16 %v409, %v404
    %v540 = vpack.c.b16 %v410, %v405
    %v541 = vpack.c.b16 %v411, %v406
    %v542 = vpack.c.b16 %v417, %v412
    %v543 = vpack.c.b16 %v418, %v413
    %v544 = vpack.c.b16 %v419, %v414
    %v545 = vpack.c.b16 %v420, %v415
    %v546 = vpack.c.b16 %v421, %v416
    %v547 = vpack.c.b16 %v427, %v422
    %v548 = vpack.c.b16 %v428, %v423
    %v549 = vpack.c.b16 %v429, %v424
    %v550 = vpack.c.b16 %v430, %v425
    %v551 = vpack.c.b16 %v431, %v426
    %v552 = vpack.c.b16 %v437, %v432
    %v553 = vpack.c.b16 %v438, %v433
    %v554 = vpack.c.b16 %v439, %v434
    %v555 = vpack.c.b16 %v440, %v435
    %v556 = vpack.c.b16 %v441, %v436
    %v557 = vpack.c.b16 %v447, %v442
    %v558 = vpack.c.b16 %v448, %v443
    %v559 = vpack.c.b16 %v449, %v444
    %v560 = vpack.c.b16 %v450, %v445
    %v561 = vpack.c.b16 %v451, %v446
    %v562 = vpack.c.b16 %v457, %v452
    %v563 = vpack.c.b16 %v458, %v453
    %v564 = vpack.c.b16 %v459, %v454
    %v565 = vpack.c.b16 %v460, %v455
    %v566 = vpack.c.b16 %v461, %v456
    %v567 = vpack.c.b16 %v467, %v462
    %v568 = vpack.c.b16 %v468, %v463
    %v569 = vpack.c.b16 %v469, %v464
    %v570 = vpack.c.b16 %v470, %v465
    %v571 = vpack.c.b16 %v471, %v466
    %v572 = vpack.c.b16 %v477, %v472
    %v573 = vpack.c.b16 %v478, %v473
    %v574 = vpack.c.b16 %v479, %v474
    %v575 = vpack.c.b16 %v480, %v475
    %v576 = vpack.c.b16 %v481, %v476
    %v577 = vpack.c.b16 %v487, %v482
    %v578 = vpack.c.b16 %v488, %v483
    %v579 = vpack.c.b16 %v489, %v484
    %v580 = vpack.c.b16 %v490, %v485
    %v581 = vpack.c.b16 %v491, %v486
    %v582 = vpack.c.b16 %v497, %v492
    %v583 = vpack.c.b16 %v498, %v493
    %v584 = vpack.c.b16 %v499, %v494
    %v585 = vpack.c.b16 %v500, %v495
    %v586 = vpack.c.b16 %v501, %v496
    %v587 = vpack.c.b16 %v507, %v502
    %v588 = vpack.c.b16 %v508, %v503
    %v589 = vpack.c.b16 %v509, %v504
    %v590 = vpack.c.b16 %v510, %v505
    %v591 = vpack.c.b16 %v511, %v506
    %672 = vmatprep.subr.bf16.mxu0 %v513
    %673 = vmatpush1.bf16.msra.mxu0 %v512
    %674 = vmatprep.subr.bf16.mxu0 %v518
    %675 = vmatpush1.bf16.msra.mxu0 %v517
    %676 = vmatprep.subr.bf16.mxu0 %v523
    %677 = vmatpush1.bf16.msra.mxu0 %v522
    %678 = vmatprep.subr.bf16.mxu0 %v528
    %679 = vmatpush1.bf16.msra.mxu0 %v527
    %680 = vmatprep.subr.bf16.mxu0 %v533
    %681 = vmatpush1.bf16.msra.mxu0 %v532
    %682 = vmatprep.subr.bf16.mxu0 %v538
    %683 = vmatpush1.bf16.msra.mxu0 %v537
    %684 = vmatprep.subr.bf16.mxu0 %v543
    %685 = vmatpush1.bf16.msra.mxu0 %v542
    %686 = vmatprep.subr.bf16.mxu0 %v548
    %687 = vmatpush1.bf16.msra.mxu0 %v547
    %688 = vmatprep.subr.bf16.mxu0 %v553
    %689 = vmatpush1.bf16.msra.mxu0 %v552
    %690 = vmatprep.subr.bf16.mxu0 %v558
    %691 = vmatpush1.bf16.msra.mxu0 %v557
    %692 = vmatprep.subr.bf16.mxu0 %v563
    %693 = vmatpush1.bf16.msra.mxu0 %v562
    %694 = vmatprep.subr.bf16.mxu0 %v568
    %695 = vmatpush1.bf16.msra.mxu0 %v567
    %696 = vmatprep.subr.bf16.mxu0 %v573
    %697 = vmatpush1.bf16.msra.mxu0 %v572
    %698 = vmatprep.subr.bf16.mxu0 %v578
    %699 = vmatpush1.bf16.msra.mxu0 %v577
    %700 = vmatprep.subr.bf16.mxu0 %v583
    %701 = vmatpush1.bf16.msra.mxu0 %v582
    %702 = vmatprep.subr.bf16.mxu0 %v588
    %703 = vmatpush1.bf16.msra.mxu0 %v587
    %704 = vmatprep.mubr.bf16.mxu0 %v132
    %705 = vmatmul.mubr.bf16.gmra.mrb[0].mxu0 %v131
    %v706 = vpop.f32.mrb[0].mxu0
    %v707 = vadd.f32 %v234, %v706
    %v708 = vpop.f32.mrb[0].mxu0
    %v709 = vadd.f32 %v238, %v708
    %v710 = vpop.f32.mrb[0].mxu0
    %v711 = vpop.f32.mrb[0].mxu0
    %712 = vdwg.mxu0
    %713 = vmatprep.subr.bf16.mxu0 %v515
    %714 = vmatpush1.bf16.msra.mxu0 %v514
    %715 = vmatprep.subr.bf16.mxu0 %v520
    %716 = vmatpush1.bf16.msra.mxu0 %v519
    %717 = vmatprep.subr.bf16.mxu0 %v525
    %718 = vmatpush1.bf16.msra.mxu0 %v524
    %719 = vmatprep.subr.bf16.mxu0 %v530
    %720 = vmatpush1.bf16.msra.mxu0 %v529
    %721 = vmatprep.subr.bf16.mxu0 %v535
    %722 = vmatpush1.bf16.msra.mxu0 %v534
    %723 = vmatprep.subr.bf16.mxu0 %v540
    %724 = vmatpush1.bf16.msra.mxu0 %v539
    %725 = vmatprep.subr.bf16.mxu0 %v545
    %726 = vmatpush1.bf16.msra.mxu0 %v544
    %727 = vmatprep.subr.bf16.mxu0 %v550
    %728 = vmatpush1.bf16.msra.mxu0 %v549
    %729 = vmatprep.subr.bf16.mxu0 %v555
    %730 = vmatpush1.bf16.msra.mxu0 %v554
    %731 = vmatprep.subr.bf16.mxu0 %v560
    %732 = vmatpush1.bf16.msra.mxu0 %v559
    %733 = vmatprep.subr.bf16.mxu0 %v565
    %734 = vmatpush1.bf16.msra.mxu0 %v564
    %735 = vmatprep.subr.bf16.mxu0 %v570
    %736 = vmatpush1.bf16.msra.mxu0 %v569
    %737 = vmatprep.subr.bf16.mxu0 %v575
    %738 = vmatpush1.bf16.msra.mxu0 %v574
    %739 = vmatprep.subr.bf16.mxu0 %v580
    %740 = vmatpush1.bf16.msra.mxu0 %v579
    %741 = vmatprep.subr.bf16.mxu0 %v585
    %742 = vmatpush1.bf16.msra.mxu0 %v584
    %743 = vmatprep.subr.bf16.mxu0 %v590
    %744 = vmatpush1.bf16.msra.mxu0 %v589
    %745 = vmatprep.mubr.bf16.mxu0 %v132
    %746 = vmatmul.mubr.bf16.gmra.mrb[0].mxu0 %v131
    %v747 = vpop.f32.mrb[0].mxu0
    %v748 = vadd.f32 %v242, %v747
    %v749 = vpop.f32.mrb[0].mxu0
    %v750 = vadd.f32 %v246, %v749
    %v751 = vpop.f32.mrb[0].mxu0
    %v752 = vpop.f32.mrb[0].mxu0
    %753 = vdwg.mxu0
    %754 = vmatprep.subr.bf16.mxu0 0
    %755 = vmatpush1.bf16.msra.mxu0 %v516
    %756 = vmatprep.subr.bf16.mxu0 0
    %757 = vmatpush1.bf16.msra.mxu0 %v521
    %758 = vmatprep.subr.bf16.mxu0 0
    %759 = vmatpush1.bf16.msra.mxu0 %v526
    %760 = vmatprep.subr.bf16.mxu0 0
    %761 = vmatpush1.bf16.msra.mxu0 %v531
    %762 = vmatprep.subr.bf16.mxu0 0
    %763 = vmatpush1.bf16.msra.mxu0 %v536
    %764 = vmatprep.subr.bf16.mxu0 0
    %765 = vmatpush1.bf16.msra.mxu0 %v541
    %766 = vmatprep.subr.bf16.mxu0 0
    %767 = vmatpush1.bf16.msra.mxu0 %v546
    %768 = vmatprep.subr.bf16.mxu0 0
    %769 = vmatpush1.bf16.msra.mxu0 %v551
    %770 = vmatprep.subr.bf16.mxu0 0
    %771 = vmatpush1.bf16.msra.mxu0 %v556
    %772 = vmatprep.subr.bf16.mxu0 0
    %773 = vmatpush1.bf16.msra.mxu0 %v561
    %774 = vmatprep.subr.bf16.mxu0 0
    %775 = vmatpush1.bf16.msra.mxu0 %v566
    %776 = vmatprep.subr.bf16.mxu0 0
    %777 = vmatpush1.bf16.msra.mxu0 %v571
    %778 = vmatprep.subr.bf16.mxu0 0
    %779 = vmatpush1.bf16.msra.mxu0 %v576
    %780 = vmatprep.subr.bf16.mxu0 0
    %781 = vmatpush1.bf16.msra.mxu0 %v581
    %782 = vmatprep.subr.bf16.mxu0 0
    %783 = vmatpush1.bf16.msra.mxu0 %v586
    %784 = vmatprep.subr.bf16.mxu0 0
    %785 = vmatpush1.bf16.msra.mxu0 %v591
    %786 = vmatprep.mubr.bf16.mxu0 %v132
    %787 = vmatmul.mubr.bf16.gmra.mrb[0].mxu0 %v131
    %v788 = vpop.f32.mrb[0].mxu0
    %v789 = vadd.f32 %v250, %v788
    %v790 = vpop.f32.mrb[0].mxu0
    %v791 = vpop.f32.mrb[0].mxu0
    %v792 = vpop.f32.mrb[0].mxu0
    %793 = vdwg.mxu0
    %v794 = vmax.f32 %v707, 0.0
    %v795 = vmax.f32 %v709, 0.0
    %v796 = vmax.f32 %v748, 0.0
    %v797 = vmax.f32 %v750, 0.0
    %v798 = vmax.f32 %v789, 0.0
    %v799 = vpack.c.bf16 %v794, %v794
    %v800 = vpack.c.bf16 %v795, %v795
    %v801 = vpack.c.bf16 %v796, %v796
    %v802 = vpack.c.bf16 %v797, %v797
    %v803 = vpack.c.bf16 %v798, %v798
    %v804 = vld [vmem:[#allocation4] sm:$0xff]
    %v805 = vld [vmem:[#allocation4 + $0x8] sm:$0xf]
    %v806 = vld [vmem:[#allocation4 + $0xc] sm:$0xff]
    %v807 = vld [vmem:[#allocation4 + $0x14] sm:$0xf]
    %v808 = vld [vmem:[#allocation4 + $0x18] sm:$0xff]
    %v809 = vld [vmem:[#allocation4 + $0x20] sm:$0xf]
    %v810 = vld [vmem:[#allocation4 + $0x24] sm:$0xff]
    %v811 = vld [vmem:[#allocation4 + $0x2c] sm:$0xf]
    %v812 = vld [vmem:[#allocation4 + $0x30] sm:$0xff]
    %v813 = vld [vmem:[#allocation4 + $0x38] sm:$0xf]
    %v814 = vld [vmem:[#allocation4 + $0x3c] sm:$0xff]
    %v815 = vld [vmem:[#allocation4 + $0x44] sm:$0xf]
    %v816 = vld [vmem:[#allocation4 + $0x48] sm:$0xff]
    %v817 = vld [vmem:[#allocation4 + $0x50] sm:$0xf]
    %v818 = vld [vmem:[#allocation4 + $0x54] sm:$0xff]
    %v819 = vld [vmem:[#allocation4 + $0x5c] sm:$0xf]
    %v820 = vld [vmem:[#allocation4 + $0x60] sm:$0xff]
    %v821 = vld [vmem:[#allocation4 + $0x68] sm:$0xf]
    %v822 = vld [vmem:[#allocation4 + $0x6c] sm:$0xff]
    %v823 = vld [vmem:[#allocation4 + $0x74] sm:$0xf]
    %v824 = vld [vmem:[#allocation4 + $0x78] sm:$0xff]
    %v825 = vld [vmem:[#allocation4 + $0x80] sm:$0xf]
    %v826 = vld [vmem:[#allocation4 + $0x84] sm:$0xff]
    %v827 = vld [vmem:[#allocation4 + $0x8c] sm:$0xf]
    %v828 = vld [vmem:[#allocation4 + $0x90] sm:$0xff]
    %v829 = vld [vmem:[#allocation4 + $0x98] sm:$0xf]
    %v830 = vld [vmem:[#allocation4 + $0x9c] sm:$0xff]
    %v831 = vld [vmem:[#allocation4 + $0xa4] sm:$0xf]
    %v832 = vld [vmem:[#allocation4 + $0xa8] sm:$0xff]
    %v833 = vld [vmem:[#allocation4 + $0xb0] sm:$0xf]
    %v834 = vld [vmem:[#allocation4 + $0xb4] sm:$0xff]
    %v835 = vld [vmem:[#allocation4 + $0xbc] sm:$0xf]
    %v836 = vld [vmem:[#allocation4 + $0xc0] sm:$0xff]
    %v837 = vld [vmem:[#allocation4 + $0xc8] sm:$0xf]
    %v838 = vld [vmem:[#allocation4 + $0xcc] sm:$0xff]
    %v839 = vld [vmem:[#allocation4 + $0xd4] sm:$0xf]
    %v840 = vld [vmem:[#allocation4 + $0xd8] sm:$0xff]
    %v841 = vld [vmem:[#allocation4 + $0xe0] sm:$0xf]
    %v842 = vld [vmem:[#allocation4 + $0xe4] sm:$0xff]
    %v843 = vld [vmem:[#allocation4 + $0xec] sm:$0xf]
    %v844 = vld [vmem:[#allocation4 + $0xf0] sm:$0xff]
    %v845 = vld [vmem:[#allocation4 + $0xf8] sm:$0xf]
    %v846 = vld [vmem:[#allocation4 + $0xfc] sm:$0xff]
    %v847 = vld [vmem:[#allocation4 + $0x104] sm:$0xf]
    %v848 = vld [vmem:[#allocation4 + $0x108] sm:$0xff]
    %v849 = vld [vmem:[#allocation4 + $0x110] sm:$0xf]
    %v850 = vld [vmem:[#allocation4 + $0x114] sm:$0xff]
    %v851 = vld [vmem:[#allocation4 + $0x11c] sm:$0xf]
    %v852 = vld [vmem:[#allocation4 + $0x120] sm:$0xff]
    %v853 = vld [vmem:[#allocation4 + $0x128] sm:$0xf]
    %v854 = vld [vmem:[#allocation4 + $0x12c] sm:$0xff]
    %v855 = vld [vmem:[#allocation4 + $0x134] sm:$0xf]
    %v856 = vld [vmem:[#allocation4 + $0x138] sm:$0xff]
    %v857 = vld [vmem:[#allocation4 + $0x140] sm:$0xf]
    %v858 = vld [vmem:[#allocation4 + $0x144] sm:$0xff]
    %v859 = vld [vmem:[#allocation4 + $0x14c] sm:$0xf]
    %v860 = vld [vmem:[#allocation4 + $0x150] sm:$0xff]
    %v861 = vld [vmem:[#allocation4 + $0x158] sm:$0xf]
    %v862 = vld [vmem:[#allocation4 + $0x15c] sm:$0xff]
    %v863 = vld [vmem:[#allocation4 + $0x164] sm:$0xf]
    %v864 = vld [vmem:[#allocation4 + $0x168] sm:$0xff]
    %v865 = vld [vmem:[#allocation4 + $0x170] sm:$0xf]
    %v866 = vld [vmem:[#allocation4 + $0x174] sm:$0xff]
    %v867 = vld [vmem:[#allocation4 + $0x17c] sm:$0xf]
    %v868 = vld [vmem:[#allocation4 + $0x180] sm:$0xff]
    %v869 = vld [vmem:[#allocation4 + $0x188] sm:$0xf]
    %v870 = vld [vmem:[#allocation4 + $0x18c] sm:$0xff]
    %v871 = vld [vmem:[#allocation4 + $0x194] sm:$0xf]
    %v872 = vld [vmem:[#allocation4 + $0x198] sm:$0xff]
    %v873 = vld [vmem:[#allocation4 + $0x1a0] sm:$0xf]
    %v874 = vld [vmem:[#allocation4 + $0x1a4] sm:$0xff]
    %v875 = vld [vmem:[#allocation4 + $0x1ac] sm:$0xf]
    %v876 = vld [vmem:[#allocation4 + $0x1b0] sm:$0xff]
    %v877 = vld [vmem:[#allocation4 + $0x1b8] sm:$0xf]
    %v878 = vld [vmem:[#allocation4 + $0x1bc] sm:$0xff]
    %v879 = vld [vmem:[#allocation4 + $0x1c4] sm:$0xf]
    %v880 = vld [vmem:[#allocation4 + $0x1c8] sm:$0xff]
    %v881 = vld [vmem:[#allocation4 + $0x1d0] sm:$0xf]
    %v882 = vld [vmem:[#allocation4 + $0x1d4] sm:$0xff]
    %v883 = vld [vmem:[#allocation4 + $0x1dc] sm:$0xf]
    %v884 = vld [vmem:[#allocation4 + $0x1e0] sm:$0xff]
    %v885 = vld [vmem:[#allocation4 + $0x1e8] sm:$0xf]
    %v886 = vld [vmem:[#allocation4 + $0x1ec] sm:$0xff]
    %v887 = vld [vmem:[#allocation4 + $0x1f4] sm:$0xf]
    %v888 = vld [vmem:[#allocation4 + $0x1f8] sm:$0xff]
    %v889 = vld [vmem:[#allocation4 + $0x200] sm:$0xf]
    %v890 = vld [vmem:[#allocation4 + $0x204] sm:$0xff]
    %v891 = vld [vmem:[#allocation4 + $0x20c] sm:$0xf]
    %v892 = vld [vmem:[#allocation4 + $0x210] sm:$0xff]
    %v893 = vld [vmem:[#allocation4 + $0x218] sm:$0xf]
    %v894 = vld [vmem:[#allocation4 + $0x21c] sm:$0xff]
    %v895 = vld [vmem:[#allocation4 + $0x224] sm:$0xf]
    %v896 = vld [vmem:[#allocation4 + $0x228] sm:$0xff]
    %v897 = vld [vmem:[#allocation4 + $0x230] sm:$0xf]
    %v898 = vld [vmem:[#allocation4 + $0x234] sm:$0xff]
    %v899 = vld [vmem:[#allocation4 + $0x23c] sm:$0xf]
    %v900 = vld [vmem:[#allocation4 + $0x240] sm:$0xff]
    %v901 = vld [vmem:[#allocation4 + $0x248] sm:$0xf]
    %v902 = vld [vmem:[#allocation4 + $0x24c] sm:$0xff]
    %v903 = vld [vmem:[#allocation4 + $0x254] sm:$0xf]
    %v904 = vld [vmem:[#allocation4 + $0x258] sm:$0xff]
    %v905 = vld [vmem:[#allocation4 + $0x260] sm:$0xf]
    %v906 = vld [vmem:[#allocation4 + $0x264] sm:$0xff]
    %v907 = vld [vmem:[#allocation4 + $0x26c] sm:$0xf]
    %v908 = vld [vmem:[#allocation4 + $0x270] sm:$0xff]
    %v909 = vld [vmem:[#allocation4 + $0x278] sm:$0xf]
    %v910 = vld [vmem:[#allocation4 + $0x27c] sm:$0xff]
    %v911 = vld [vmem:[#allocation4 + $0x284] sm:$0xf]
    %v912 = vld [vmem:[#allocation4 + $0x288] sm:$0xff]
    %v913 = vld [vmem:[#allocation4 + $0x290] sm:$0xf]
    %v914 = vld [vmem:[#allocation4 + $0x294] sm:$0xff]
    %v915 = vld [vmem:[#allocation4 + $0x29c] sm:$0xf]
    %v916 = vld [vmem:[#allocation4 + $0x2a0] sm:$0xff]
    %v917 = vld [vmem:[#allocation4 + $0x2a8] sm:$0xf]
    %v918 = vld [vmem:[#allocation4 + $0x2ac] sm:$0xff]
    %v919 = vld [vmem:[#allocation4 + $0x2b4] sm:$0xf]
    %v920 = vld [vmem:[#allocation4 + $0x2b8] sm:$0xff]
    %v921 = vld [vmem:[#allocation4 + $0x2c0] sm:$0xf]
    %v922 = vld [vmem:[#allocation4 + $0x2c4] sm:$0xff]
    %v923 = vld [vmem:[#allocation4 + $0x2cc] sm:$0xf]
    %v924 = vld [vmem:[#allocation4 + $0x2d0] sm:$0xff]
    %v925 = vld [vmem:[#allocation4 + $0x2d8] sm:$0xf]
    %v926 = vld [vmem:[#allocation4 + $0x2dc] sm:$0xff]
    %v927 = vld [vmem:[#allocation4 + $0x2e4] sm:$0xf]
    %v928 = vld [vmem:[#allocation4 + $0x2e8] sm:$0xff]
    %v929 = vld [vmem:[#allocation4 + $0x2f0] sm:$0xf]
    %v930 = vld [vmem:[#allocation4 + $0x2f4] sm:$0xff]
    %v931 = vld [vmem:[#allocation4 + $0x2fc] sm:$0xf]
    %v932 = vld [vmem:[#allocation4 + $0x300] sm:$0xff]
    %v933 = vld [vmem:[#allocation4 + $0x308] sm:$0xf]
    %v934 = vld [vmem:[#allocation4 + $0x30c] sm:$0xff]
    %v935 = vld [vmem:[#allocation4 + $0x314] sm:$0xf]
    %v936 = vld [vmem:[#allocation4 + $0x318] sm:$0xff]
    %v937 = vld [vmem:[#allocation4 + $0x320] sm:$0xf]
    %v938 = vld [vmem:[#allocation4 + $0x324] sm:$0xff]
    %v939 = vld [vmem:[#allocation4 + $0x32c] sm:$0xf]
    %v940 = vld [vmem:[#allocation4 + $0x330] sm:$0xff]
    %v941 = vld [vmem:[#allocation4 + $0x338] sm:$0xf]
    %v942 = vld [vmem:[#allocation4 + $0x33c] sm:$0xff]
    %v943 = vld [vmem:[#allocation4 + $0x344] sm:$0xf]
    %v944 = vld [vmem:[#allocation4 + $0x348] sm:$0xff]
    %v945 = vld [vmem:[#allocation4 + $0x350] sm:$0xf]
    %v946 = vld [vmem:[#allocation4 + $0x354] sm:$0xff]
    %v947 = vld [vmem:[#allocation4 + $0x35c] sm:$0xf]
    %v948 = vld [vmem:[#allocation4 + $0x360] sm:$0xff]
    %v949 = vld [vmem:[#allocation4 + $0x368] sm:$0xf]
    %v950 = vld [vmem:[#allocation4 + $0x36c] sm:$0xff]
    %v951 = vld [vmem:[#allocation4 + $0x374] sm:$0xf]
    %v952 = vld [vmem:[#allocation4 + $0x378] sm:$0xff]
    %v953 = vld [vmem:[#allocation4 + $0x380] sm:$0xf]
    %v954 = vld [vmem:[#allocation4 + $0x384] sm:$0xff]
    %v955 = vld [vmem:[#allocation4 + $0x38c] sm:$0xf]
    %v956 = vld [vmem:[#allocation4 + $0x390] sm:$0xff]
    %v957 = vld [vmem:[#allocation4 + $0x398] sm:$0xf]
    %v958 = vld [vmem:[#allocation4 + $0x39c] sm:$0xff]
    %v959 = vld [vmem:[#allocation4 + $0x3a4] sm:$0xf]
    %v960 = vld [vmem:[#allocation4 + $0x3a8] sm:$0xff]
    %v961 = vld [vmem:[#allocation4 + $0x3b0] sm:$0xf]
    %v962 = vld [vmem:[#allocation4 + $0x3b4] sm:$0xff]
    %v963 = vld [vmem:[#allocation4 + $0x3bc] sm:$0xf]
    %v964 = vld [vmem:[%s4] sm:$0x7]
    %v966 = vlaneseq
    %v967 = vshrl.u32 %v966, 7
    %v968 = vsub.s32 0, %v967
    %v969 = vrot.slane %v964, %v968
    %v970 = vlaneseq
    %v971 = vshrl.u32 %v970, 7
    %v972 = vsub.s32 1, %v971
    %v973 = vrot.slane %v964, %v972
    %v974 = vlaneseq
    %v975 = vshrl.u32 %v974, 7
    %v976 = vsub.s32 2, %v975
    %v977 = vrot.slane %v964, %v976
    %v1141 = vunpack.c.l.b16 %v804
    %v1142 = vunpack.c.h.b16 %v804
    %v1143 = vunpack.c.l.b16 %v805
    %v1144 = vunpack.c.l.b16 %v806
    %v1145 = vunpack.c.h.b16 %v806
    %v1146 = vunpack.c.l.b16 %v807
    %v1147 = vunpack.c.l.b16 %v808
    %v1148 = vunpack.c.h.b16 %v808
    %v1149 = vunpack.c.l.b16 %v809
    %v1150 = vunpack.c.l.b16 %v810
    %v1151 = vunpack.c.h.b16 %v810
    %v1152 = vunpack.c.l.b16 %v811
    %v1153 = vunpack.c.l.b16 %v812
    %v1154 = vunpack.c.h.b16 %v812
    %v1155 = vunpack.c.l.b16 %v813
    %v1156 = vunpack.c.l.b16 %v814
    %v1157 = vunpack.c.h.b16 %v814
    %v1158 = vunpack.c.l.b16 %v815
    %v1159 = vunpack.c.l.b16 %v816
    %v1160 = vunpack.c.h.b16 %v816
    %v1161 = vunpack.c.l.b16 %v817
    %v1162 = vunpack.c.l.b16 %v818
    %v1163 = vunpack.c.h.b16 %v818
    %v1164 = vunpack.c.l.b16 %v819
    %v1165 = vunpack.c.l.b16 %v820
    %v1166 = vunpack.c.h.b16 %v820
    %v1167 = vunpack.c.l.b16 %v821
    %v1168 = vunpack.c.l.b16 %v822
    %v1169 = vunpack.c.h.b16 %v822
    %v1170 = vunpack.c.l.b16 %v823
    %v1171 = vunpack.c.l.b16 %v824
    %v1172 = vunpack.c.h.b16 %v824
    %v1173 = vunpack.c.l.b16 %v825
    %v1174 = vunpack.c.l.b16 %v826
    %v1175 = vunpack.c.h.b16 %v826
    %v1176 = vunpack.c.l.b16 %v827
    %v1177 = vunpack.c.l.b16 %v828
    %v1178 = vunpack.c.h.b16 %v828
    %v1179 = vunpack.c.l.b16 %v829
    %v1180 = vunpack.c.l.b16 %v830
    %v1181 = vunpack.c.h.b16 %v830
    %v1182 = vunpack.c.l.b16 %v831
    %v1183 = vunpack.c.l.b16 %v832
    %v1184 = vunpack.c.h.b16 %v832
    %v1185 = vunpack.c.l.b16 %v833
    %v1186 = vunpack.c.l.b16 %v834
    %v1187 = vunpack.c.h.b16 %v834
    %v1188 = vunpack.c.l.b16 %v835
    %v1189 = vunpack.c.l.b16 %v836
    %v1190 = vunpack.c.h.b16 %v836
    %v1191 = vunpack.c.l.b16 %v837
    %v1192 = vunpack.c.l.b16 %v838
    %v1193 = vunpack.c.h.b16 %v838
    %v1194 = vunpack.c.l.b16 %v839
    %v1195 = vunpack.c.l.b16 %v840
    %v1196 = vunpack.c.h.b16 %v840
    %v1197 = vunpack.c.l.b16 %v841
    %v1198 = vunpack.c.l.b16 %v842
    %v1199 = vunpack.c.h.b16 %v842
    %v1200 = vunpack.c.l.b16 %v843
    %v1201 = vunpack.c.l.b16 %v844
    %v1202 = vunpack.c.h.b16 %v844
    %v1203 = vunpack.c.l.b16 %v845
    %v1204 = vunpack.c.l.b16 %v846
    %v1205 = vunpack.c.h.b16 %v846
    %v1206 = vunpack.c.l.b16 %v847
    %v1207 = vunpack.c.l.b16 %v848
    %v1208 = vunpack.c.h.b16 %v848
    %v1209 = vunpack.c.l.b16 %v849
    %v1210 = vunpack.c.l.b16 %v850
    %v1211 = vunpack.c.h.b16 %v850
    %v1212 = vunpack.c.l.b16 %v851
    %v1213 = vunpack.c.l.b16 %v852
    %v1214 = vunpack.c.h.b16 %v852
    %v1215 = vunpack.c.l.b16 %v853
    %v1216 = vunpack.c.l.b16 %v854
    %v1217 = vunpack.c.h.b16 %v854
    %v1218 = vunpack.c.l.b16 %v855
    %v1219 = vunpack.c.l.b16 %v856
    %v1220 = vunpack.c.h.b16 %v856
    %v1221 = vunpack.c.l.b16 %v857
    %v1222 = vunpack.c.l.b16 %v858
    %v1223 = vunpack.c.h.b16 %v858
    %v1224 = vunpack.c.l.b16 %v859
    %v1225 = vunpack.c.l.b16 %v860
    %v1226 = vunpack.c.h.b16 %v860
    %v1227 = vunpack.c.l.b16 %v861
    %v1228 = vunpack.c.l.b16 %v862
    %v1229 = vunpack.c.h.b16 %v862
    %v1230 = vunpack.c.l.b16 %v863
    %v1231 = vunpack.c.l.b16 %v864
    %v1232 = vunpack.c.h.b16 %v864
    %v1233 = vunpack.c.l.b16 %v865
    %v1234 = vunpack.c.l.b16 %v866
    %v1235 = vunpack.c.h.b16 %v866
    %v1236 = vunpack.c.l.b16 %v867
    %v1237 = vunpack.c.l.b16 %v868
    %v1238 = vunpack.c.h.b16 %v868
    %v1239 = vunpack.c.l.b16 %v869
    %v1240 = vunpack.c.l.b16 %v870
    %v1241 = vunpack.c.h.b16 %v870
    %v1242 = vunpack.c.l.b16 %v871
    %v1243 = vunpack.c.l.b16 %v872
    %v1244 = vunpack.c.h.b16 %v872
    %v1245 = vunpack.c.l.b16 %v873
    %v1246 = vunpack.c.l.b16 %v874
    %v1247 = vunpack.c.h.b16 %v874
    %v1248 = vunpack.c.l.b16 %v875
    %v1249 = vunpack.c.l.b16 %v876
    %v1250 = vunpack.c.h.b16 %v876
    %v1251 = vunpack.c.l.b16 %v877
    %v1252 = vunpack.c.l.b16 %v878
    %v1253 = vunpack.c.h.b16 %v878
    %v1254 = vunpack.c.l.b16 %v879
    %v1255 = vunpack.c.l.b16 %v880
    %v1256 = vunpack.c.h.b16 %v880
    %v1257 = vunpack.c.l.b16 %v881
    %v1258 = vunpack.c.l.b16 %v882
    %v1259 = vunpack.c.h.b16 %v882
    %v1260 = vunpack.c.l.b16 %v883
    %v1261 = vunpack.c.l.b16 %v884
    %v1262 = vunpack.c.h.b16 %v884
    %v1263 = vunpack.c.l.b16 %v885
    %v1264 = vunpack.c.l.b16 %v886
    %v1265 = vunpack.c.h.b16 %v886
    %v1266 = vunpack.c.l.b16 %v887
    %v1267 = vunpack.c.l.b16 %v888
    %v1268 = vunpack.c.h.b16 %v888
    %v1269 = vunpack.c.l.b16 %v889
    %v1270 = vunpack.c.l.b16 %v890
    %v1271 = vunpack.c.h.b16 %v890
    %v1272 = vunpack.c.l.b16 %v891
    %v1273 = vunpack.c.l.b16 %v892
    %v1274 = vunpack.c.h.b16 %v892
    %v1275 = vunpack.c.l.b16 %v893
    %v1276 = vunpack.c.l.b16 %v894
    %v1277 = vunpack.c.h.b16 %v894
    %v1278 = vunpack.c.l.b16 %v895
    %v1279 = vunpack.c.l.b16 %v896
    %v1280 = vunpack.c.h.b16 %v896
    %v1281 = vunpack.c.l.b16 %v897
    %v1282 = vunpack.c.l.b16 %v898
    %v1283 = vunpack.c.h.b16 %v898
    %v1284 = vunpack.c.l.b16 %v899
    %v1285 = vunpack.c.l.b16 %v900
    %v1286 = vunpack.c.h.b16 %v900
    %v1287 = vunpack.c.l.b16 %v901
    %v1288 = vunpack.c.l.b16 %v902
    %v1289 = vunpack.c.h.b16 %v902
    %v1290 = vunpack.c.l.b16 %v903
    %v1291 = vunpack.c.l.b16 %v904
    %v1292 = vunpack.c.h.b16 %v904
    %v1293 = vunpack.c.l.b16 %v905
    %v1294 = vunpack.c.l.b16 %v906
    %v1295 = vunpack.c.h.b16 %v906
    %v1296 = vunpack.c.l.b16 %v907
    %v1297 = vunpack.c.l.b16 %v908
    %v1298 = vunpack.c.h.b16 %v908
    %v1299 = vunpack.c.l.b16 %v909
    %v1300 = vunpack.c.l.b16 %v910
    %v1301 = vunpack.c.h.b16 %v910
    %v1302 = vunpack.c.l.b16 %v911
    %v1303 = vunpack.c.l.b16 %v912
    %v1304 = vunpack.c.h.b16 %v912
    %v1305 = vunpack.c.l.b16 %v913
    %v1306 = vunpack.c.l.b16 %v914
    %v1307 = vunpack.c.h.b16 %v914
    %v1308 = vunpack.c.l.b16 %v915
    %v1309 = vunpack.c.l.b16 %v916
    %v1310 = vunpack.c.h.b16 %v916
    %v1311 = vunpack.c.l.b16 %v917
    %v1312 = vunpack.c.l.b16 %v918
    %v1313 = vunpack.c.h.b16 %v918
    %v1314 = vunpack.c.l.b16 %v919
    %v1315 = vunpack.c.l.b16 %v920
    %v1316 = vunpack.c.h.b16 %v920
    %v1317 = vunpack.c.l.b16 %v921
    %v1318 = vunpack.c.l.b16 %v922
    %v1319 = vunpack.c.h.b16 %v922
    %v1320 = vunpack.c.l.b16 %v923
    %v1321 = vunpack.c.l.b16 %v924
    %v1322 = vunpack.c.h.b16 %v924
    %v1323 = vunpack.c.l.b16 %v925
    %v1324 = vunpack.c.l.b16 %v926
    %v1325 = vunpack.c.h.b16 %v926
    %v1326 = vunpack.c.l.b16 %v927
    %v1327 = vunpack.c.l.b16 %v928
    %v1328 = vunpack.c.h.b16 %v928
    %v1329 = vunpack.c.l.b16 %v929
    %v1330 = vunpack.c.l.b16 %v930
    %v1331 = vunpack.c.h.b16 %v930
    %v1332 = vunpack.c.l.b16 %v931
    %v1333 = vunpack.c.l.b16 %v932
    %v1334 = vunpack.c.h.b16 %v932
    %v1335 = vunpack.c.l.b16 %v933
    %v1336 = vunpack.c.l.b16 %v934
    %v1337 = vunpack.c.h.b16 %v934
    %v1338 = vunpack.c.l.b16 %v935
    %v1339 = vunpack.c.l.b16 %v936
    %v1340 = vunpack.c.h.b16 %v936
    %v1341 = vunpack.c.l.b16 %v937
    %v1342 = vunpack.c.l.b16 %v938
    %v1343 = vunpack.c.h.b16 %v938
    %v1344 = vunpack.c.l.b16 %v939
    %v1345 = vunpack.c.l.b16 %v940
    %v1346 = vunpack.c.h.b16 %v940
    %v1347 = vunpack.c.l.b16 %v941
    %v1348 = vunpack.c.l.b16 %v942
    %v1349 = vunpack.c.h.b16 %v942
    %v1350 = vunpack.c.l.b16 %v943
    %v1351 = vunpack.c.l.b16 %v944
    %v1352 = vunpack.c.h.b16 %v944
    %v1353 = vunpack.c.l.b16 %v945
    %v1354 = vunpack.c.l.b16 %v946
    %v1355 = vunpack.c.h.b16 %v946
    %v1356 = vunpack.c.l.b16 %v947
    %v1357 = vunpack.c.l.b16 %v948
    %v1358 = vunpack.c.h.b16 %v948
    %v1359 = vunpack.c.l.b16 %v949
    %v1360 = vunpack.c.l.b16 %v950
    %v1361 = vunpack.c.h.b16 %v950
    %v1362 = vunpack.c.l.b16 %v951
    %v1363 = vunpack.c.l.b16 %v952
    %v1364 = vunpack.c.h.b16 %v952
    %v1365 = vunpack.c.l.b16 %v953
    %v1366 = vunpack.c.l.b16 %v954
    %v1367 = vunpack.c.h.b16 %v954
    %v1368 = vunpack.c.l.b16 %v955
    %v1369 = vunpack.c.l.b16 %v956
    %v1370 = vunpack.c.h.b16 %v956
    %v1371 = vunpack.c.l.b16 %v957
    %v1372 = vunpack.c.l.b16 %v958
    %v1373 = vunpack.c.h.b16 %v958
    %v1374 = vunpack.c.l.b16 %v959
    %v1375 = vunpack.c.l.b16 %v960
    %v1376 = vunpack.c.h.b16 %v960
    %v1377 = vunpack.c.l.b16 %v961
    %v1378 = vunpack.c.l.b16 %v962
    %v1379 = vunpack.c.h.b16 %v962
    %v1380 = vunpack.c.l.b16 %v963
    %v1381 = vpack.c.b16 %v1144, %v1141
    %v1382 = vpack.c.b16 %v1145, %v1142
    %v1383 = vpack.c.b16 %v1146, %v1143
    %v1384 = vpack.c.b16 %v1150, %v1147
    %v1385 = vpack.c.b16 %v1151, %v1148
    %v1386 = vpack.c.b16 %v1152, %v1149
    %v1387 = vpack.c.b16 %v1156, %v1153
    %v1388 = vpack.c.b16 %v1157, %v1154
    %v1389 = vpack.c.b16 %v1158, %v1155
    %v1390 = vpack.c.b16 %v1162, %v1159
    %v1391 = vpack.c.b16 %v1163, %v1160
    %v1392 = vpack.c.b16 %v1164, %v1161
    %v1393 = vpack.c.b16 %v1168, %v1165
    %v1394 = vpack.c.b16 %v1169, %v1166
    %v1395 = vpack.c.b16 %v1170, %v1167
    %v1396 = vpack.c.b16 %v1174, %v1171
    %v1397 = vpack.c.b16 %v1175, %v1172
    %v1398 = vpack.c.b16 %v1176, %v1173
    %v1399 = vpack.c.b16 %v1180, %v1177
    %v1400 = vpack.c.b16 %v1181, %v1178
    %v1401 = vpack.c.b16 %v1182, %v1179
    %v1402 = vpack.c.b16 %v1186, %v1183
    %v1403 = vpack.c.b16 %v1187, %v1184
    %v1404 = vpack.c.b16 %v1188, %v1185
    %v1405 = vpack.c.b16 %v1192, %v1189
    %v1406 = vpack.c.b16 %v1193, %v1190
    %v1407 = vpack.c.b16 %v1194, %v1191
    %v1408 = vpack.c.b16 %v1198, %v1195
    %v1409 = vpack.c.b16 %v1199, %v1196
    %v1410 = vpack.c.b16 %v1200, %v1197
    %v1411 = vpack.c.b16 %v1204, %v1201
    %v1412 = vpack.c.b16 %v1205, %v1202
    %v1413 = vpack.c.b16 %v1206, %v1203
    %v1414 = vpack.c.b16 %v1210, %v1207
    %v1415 = vpack.c.b16 %v1211, %v1208
    %v1416 = vpack.c.b16 %v1212, %v1209
    %v1417 = vpack.c.b16 %v1216, %v1213
    %v1418 = vpack.c.b16 %v1217, %v1214
    %v1419 = vpack.c.b16 %v1218, %v1215
    %v1420 = vpack.c.b16 %v1222, %v1219
    %v1421 = vpack.c.b16 %v1223, %v1220
    %v1422 = vpack.c.b16 %v1224, %v1221
    %v1423 = vpack.c.b16 %v1228, %v1225
    %v1424 = vpack.c.b16 %v1229, %v1226
    %v1425 = vpack.c.b16 %v1230, %v1227
    %v1426 = vpack.c.b16 %v1234, %v1231
    %v1427 = vpack.c.b16 %v1235, %v1232
    %v1428 = vpack.c.b16 %v1236, %v1233
    %v1429 = vpack.c.b16 %v1240, %v1237
    %v1430 = vpack.c.b16 %v1241, %v1238
    %v1431 = vpack.c.b16 %v1242, %v1239
    %v1432 = vpack.c.b16 %v1246, %v1243
    %v1433 = vpack.c.b16 %v1247, %v1244
    %v1434 = vpack.c.b16 %v1248, %v1245
    %v1435 = vpack.c.b16 %v1252, %v1249
    %v1436 = vpack.c.b16 %v1253, %v1250
    %v1437 = vpack.c.b16 %v1254, %v1251
    %v1438 = vpack.c.b16 %v1258, %v1255
    %v1439 = vpack.c.b16 %v1259, %v1256
    %v1440 = vpack.c.b16 %v1260, %v1257
    %v1441 = vpack.c.b16 %v1264, %v1261
    %v1442 = vpack.c.b16 %v1265, %v1262
    %v1443 = vpack.c.b16 %v1266, %v1263
    %v1444 = vpack.c.b16 %v1270, %v1267
    %v1445 = vpack.c.b16 %v1271, %v1268
    %v1446 = vpack.c.b16 %v1272, %v1269
    %v1447 = vpack.c.b16 %v1276, %v1273
    %v1448 = vpack.c.b16 %v1277, %v1274
    %v1449 = vpack.c.b16 %v1278, %v1275
    %v1450 = vpack.c.b16 %v1282, %v1279
    %v1451 = vpack.c.b16 %v1283, %v1280
    %v1452 = vpack.c.b16 %v1284, %v1281
    %v1453 = vpack.c.b16 %v1288, %v1285
    %v1454 = vpack.c.b16 %v1289, %v1286
    %v1455 = vpack.c.b16 %v1290, %v1287
    %v1456 = vpack.c.b16 %v1294, %v1291
    %v1457 = vpack.c.b16 %v1295, %v1292
    %v1458 = vpack.c.b16 %v1296, %v1293
    %v1459 = vpack.c.b16 %v1300, %v1297
    %v1460 = vpack.c.b16 %v1301, %v1298
    %v1461 = vpack.c.b16 %v1302, %v1299
    %v1462 = vpack.c.b16 %v1306, %v1303
    %v1463 = vpack.c.b16 %v1307, %v1304
    %v1464 = vpack.c.b16 %v1308, %v1305
    %v1465 = vpack.c.b16 %v1312, %v1309
    %v1466 = vpack.c.b16 %v1313, %v1310
    %v1467 = vpack.c.b16 %v1314, %v1311
    %v1468 = vpack.c.b16 %v1318, %v1315
    %v1469 = vpack.c.b16 %v1319, %v1316
    %v1470 = vpack.c.b16 %v1320, %v1317
    %v1471 = vpack.c.b16 %v1324, %v1321
    %v1472 = vpack.c.b16 %v1325, %v1322
    %v1473 = vpack.c.b16 %v1326, %v1323
    %v1474 = vpack.c.b16 %v1330, %v1327
    %v1475 = vpack.c.b16 %v1331, %v1328
    %v1476 = vpack.c.b16 %v1332, %v1329
    %v1477 = vpack.c.b16 %v1336, %v1333
    %v1478 = vpack.c.b16 %v1337, %v1334
    %v1479 = vpack.c.b16 %v1338, %v1335
    %v1480 = vpack.c.b16 %v1342, %v1339
    %v1481 = vpack.c.b16 %v1343, %v1340
    %v1482 = vpack.c.b16 %v1344, %v1341
    %v1483 = vpack.c.b16 %v1348, %v1345
    %v1484 = vpack.c.b16 %v1349, %v1346
    %v1485 = vpack.c.b16 %v1350, %v1347
    %v1486 = vpack.c.b16 %v1354, %v1351
    %v1487 = vpack.c.b16 %v1355, %v1352
    %v1488 = vpack.c.b16 %v1356, %v1353
    %v1489 = vpack.c.b16 %v1360, %v1357
    %v1490 = vpack.c.b16 %v1361, %v1358
    %v1491 = vpack.c.b16 %v1362, %v1359
    %v1492 = vpack.c.b16 %v1366, %v1363
    %v1493 = vpack.c.b16 %v1367, %v1364
    %v1494 = vpack.c.b16 %v1368, %v1365
    %v1495 = vpack.c.b16 %v1372, %v1369
    %v1496 = vpack.c.b16 %v1373, %v1370
    %v1497 = vpack.c.b16 %v1374, %v1371
    %v1498 = vpack.c.b16 %v1378, %v1375
    %v1499 = vpack.c.b16 %v1379, %v1376
    %v1500 = vpack.c.b16 %v1380, %v1377
    %1621 = vmatprep.subr.bf16.mxu0 %v1382
    %1622 = vmatpush1.bf16.msra.mxu0 %v1381
    %1623 = vmatprep.subr.bf16.mxu0 %v1385
    %1624 = vmatpush1.bf16.msra.mxu0 %v1384
    %1625 = vmatprep.subr.bf16.mxu0 %v1388
    %1626 = vmatpush1.bf16.msra.mxu0 %v1387
    %1627 = vmatprep.subr.bf16.mxu0 %v1391
    %1628 = vmatpush1.bf16.msra.mxu0 %v1390
    %1629 = vmatprep.subr.bf16.mxu0 %v1394
    %1630 = vmatpush1.bf16.msra.mxu0 %v1393
    %1631 = vmatprep.subr.bf16.mxu0 %v1397
    %1632 = vmatpush1.bf16.msra.mxu0 %v1396
    %1633 = vmatprep.subr.bf16.mxu0 %v1400
    %1634 = vmatpush1.bf16.msra.mxu0 %v1399
    %1635 = vmatprep.subr.bf16.mxu0 %v1403
    %1636 = vmatpush1.bf16.msra.mxu0 %v1402
    %1637 = vmatprep.subr.bf16.mxu0 %v1406
    %1638 = vmatpush1.bf16.msra.mxu0 %v1405
    %1639 = vmatprep.subr.bf16.mxu0 %v1409
    %1640 = vmatpush1.bf16.msra.mxu0 %v1408
    %1641 = vmatprep.subr.bf16.mxu0 %v1412
    %1642 = vmatpush1.bf16.msra.mxu0 %v1411
    %1643 = vmatprep.subr.bf16.mxu0 %v1415
    %1644 = vmatpush1.bf16.msra.mxu0 %v1414
    %1645 = vmatprep.subr.bf16.mxu0 %v1418
    %1646 = vmatpush1.bf16.msra.mxu0 %v1417
    %1647 = vmatprep.subr.bf16.mxu0 %v1421
    %1648 = vmatpush1.bf16.msra.mxu0 %v1420
    %1649 = vmatprep.subr.bf16.mxu0 %v1424
    %1650 = vmatpush1.bf16.msra.mxu0 %v1423
    %1651 = vmatprep.subr.bf16.mxu0 %v1427
    %1652 = vmatpush1.bf16.msra.mxu0 %v1426
    %1653 = vmatprep.mubr.bf16.mxu0 %v800
    %1654 = vmatmul.mubr.bf16.gmra.mrb[0].mxu0 %v799
    %v1655 = vpop.f32.mrb[0].mxu0
    %v1656 = vadd.f32 %v969, %v1655
    %v1657 = vpop.f32.mrb[0].mxu0
    %v1658 = vadd.f32 %v973, %v1657
    %v1659 = vpop.f32.mrb[0].mxu0
    %v1660 = vpop.f32.mrb[0].mxu0
    %1661 = vdwg.mxu0
    %1662 = vmatprep.subr.bf16.mxu0 %v1430
    %1663 = vmatpush1.bf16.msra.mxu0 %v1429
    %1664 = vmatprep.subr.bf16.mxu0 %v1433
    %1665 = vmatpush1.bf16.msra.mxu0 %v1432
    %1666 = vmatprep.subr.bf16.mxu0 %v1436
    %1667 = vmatpush1.bf16.msra.mxu0 %v1435
    %1668 = vmatprep.subr.bf16.mxu0 %v1439
    %1669 = vmatpush1.bf16.msra.mxu0 %v1438
    %1670 = vmatprep.subr.bf16.mxu0 %v1442
    %1671 = vmatpush1.bf16.msra.mxu0 %v1441
    %1672 = vmatprep.subr.bf16.mxu0 %v1445
    %1673 = vmatpush1.bf16.msra.mxu0 %v1444
    %1674 = vmatprep.subr.bf16.mxu0 %v1448
    %1675 = vmatpush1.bf16.msra.mxu0 %v1447
    %1676 = vmatprep.subr.bf16.mxu0 %v1451
    %1677 = vmatpush1.bf16.msra.mxu0 %v1450
    %1678 = vmatprep.subr.bf16.mxu0 %v1454
    %1679 = vmatpush1.bf16.msra.mxu0 %v1453
    %1680 = vmatprep.subr.bf16.mxu0 %v1457
    %1681 = vmatpush1.bf16.msra.mxu0 %v1456
    %1682 = vmatprep.subr.bf16.mxu0 %v1460
    %1683 = vmatpush1.bf16.msra.mxu0 %v1459
    %1684 = vmatprep.subr.bf16.mxu0 %v1463
    %1685 = vmatpush1.bf16.msra.mxu0 %v1462
    %1686 = vmatprep.subr.bf16.mxu0 %v1466
    %1687 = vmatpush1.bf16.msra.mxu0 %v1465
    %1688 = vmatprep.subr.bf16.mxu0 %v1469
    %1689 = vmatpush1.bf16.msra.mxu0 %v1468
    %1690 = vmatprep.subr.bf16.mxu0 %v1472
    %1691 = vmatpush1.bf16.msra.mxu0 %v1471
    %1692 = vmatprep.subr.bf16.mxu0 %v1475
    %1693 = vmatpush1.bf16.msra.mxu0 %v1474
    %1694 = vmatprep.mubr.bf16.mxu0 %v802
    %1695 = vmatmul.mubr.bf16.gmra.mrb[0].mxu0 %v801
    %v1696 = vpop.f32.mrb[0].mxu0
    %v1697 = vadd.f32 %v1656, %v1696
    %v1698 = vpop.f32.mrb[0].mxu0
    %v1699 = vadd.f32 %v1658, %v1698
    %v1700 = vpop.f32.mrb[0].mxu0
    %v1701 = vpop.f32.mrb[0].mxu0
    %1702 = vdwg.mxu0
    %1703 = vmatprep.subr.bf16.mxu0 %v1478
    %1704 = vmatpush1.bf16.msra.mxu0 %v1477
    %1705 = vmatprep.subr.bf16.mxu0 %v1481
    %1706 = vmatpush1.bf16.msra.mxu0 %v1480
    %1707 = vmatprep.subr.bf16.mxu0 %v1484
    %1708 = vmatpush1.bf16.msra.mxu0 %v1483
    %1709 = vmatprep.subr.bf16.mxu0 %v1487
    %1710 = vmatpush1.bf16.msra.mxu0 %v1486
    %1711 = vmatprep.subr.bf16.mxu0 %v1490
    %1712 = vmatpush1.bf16.msra.mxu0 %v1489
    %1713 = vmatprep.subr.bf16.mxu0 %v1493
    %1714 = vmatpush1.bf16.msra.mxu0 %v1492
    %1715 = vmatprep.subr.bf16.mxu0 %v1496
    %1716 = vmatpush1.bf16.msra.mxu0 %v1495
    %1717 = vmatprep.subr.bf16.mxu0 %v1499
    %1718 = vmatpush1.bf16.msra.mxu0 %v1498
    %1719 = vmatprep.subr.bf16.mxu0 0
    %1720 = vmatpush1.bf16.msra.mxu0 0
    %1721 = vmatprep.subr.bf16.mxu0 0
    %1722 = vmatpush1.bf16.msra.mxu0 0
    %1723 = vmatprep.subr.bf16.mxu0 0
    %1724 = vmatpush1.bf16.msra.mxu0 0
    %1725 = vmatprep.subr.bf16.mxu0 0
    %1726 = vmatpush1.bf16.msra.mxu0 0
    %1727 = vmatprep.subr.bf16.mxu0 0
    %1728 = vmatpush1.bf16.msra.mxu0 0
    %1729 = vmatprep.subr.bf16.mxu0 0
    %1730 = vmatpush1.bf16.msra.mxu0 0
    %1731 = vmatprep.subr.bf16.mxu0 0
    %1732 = vmatpush1.bf16.msra.mxu0 0
    %1733 = vmatprep.subr.bf16.mxu0 0
    %1734 = vmatpush1.bf16.msra.mxu0 0
    %1735 = vmatprep.mubr.bf16.mxu0 0
    %1736 = vmatmul.mubr.bf16.gmra.mrb[0].mxu0 %v803
    %v1737 = vpop.f32.mrb[0].mxu0
    %v1738 = vadd.f32 %v1697, %v1737
    %v1739 = vpop.f32.mrb[0].mxu0
    %v1740 = vadd.f32 %v1699, %v1739
    %v1741 = vpop.f32.mrb[0].mxu0
    %v1742 = vpop.f32.mrb[0].mxu0
    %1743 = vdwg.mxu0
    %1744 = vmatprep.subr.bf16.mxu0 0
    %1745 = vmatpush1.bf16.msra.mxu0 %v1383
    %1746 = vmatprep.subr.bf16.mxu0 0
    %1747 = vmatpush1.bf16.msra.mxu0 %v1386
    %1748 = vmatprep.subr.bf16.mxu0 0
    %1749 = vmatpush1.bf16.msra.mxu0 %v1389
    %1750 = vmatprep.subr.bf16.mxu0 0
    %1751 = vmatpush1.bf16.msra.mxu0 %v1392
    %1752 = vmatprep.subr.bf16.mxu0 0
    %1753 = vmatpush1.bf16.msra.mxu0 %v1395
    %1754 = vmatprep.subr.bf16.mxu0 0
    %1755 = vmatpush1.bf16.msra.mxu0 %v1398
    %1756 = vmatprep.subr.bf16.mxu0 0
    %1757 = vmatpush1.bf16.msra.mxu0 %v1401
    %1758 = vmatprep.subr.bf16.mxu0 0
    %1759 = vmatpush1.bf16.msra.mxu0 %v1404
    %1760 = vmatprep.subr.bf16.mxu0 0
    %1761 = vmatpush1.bf16.msra.mxu0 %v1407
    %1762 = vmatprep.subr.bf16.mxu0 0
    %1763 = vmatpush1.bf16.msra.mxu0 %v1410
    %1764 = vmatprep.subr.bf16.mxu0 0
    %1765 = vmatpush1.bf16.msra.mxu0 %v1413
    %1766 = vmatprep.subr.bf16.mxu0 0
    %1767 = vmatpush1.bf16.msra.mxu0 %v1416
    %1768 = vmatprep.subr.bf16.mxu0 0
    %1769 = vmatpush1.bf16.msra.mxu0 %v1419
    %1770 = vmatprep.subr.bf16.mxu0 0
    %1771 = vmatpush1.bf16.msra.mxu0 %v1422
    %1772 = vmatprep.subr.bf16.mxu0 0
    %1773 = vmatpush1.bf16.msra.mxu0 %v1425
    %1774 = vmatprep.subr.bf16.mxu0 0
    %1775 = vmatpush1.bf16.msra.mxu0 %v1428
    %1776 = vmatprep.mubr.bf16.mxu0 %v800
    %1777 = vmatmul.mubr.bf16.gmra.mrb[0].mxu0 %v799
    %v1778 = vpop.f32.mrb[0].mxu0
    %v1779 = vadd.f32 %v977, %v1778
    %v1780 = vpop.f32.mrb[0].mxu0
    %v1781 = vpop.f32.mrb[0].mxu0
    %v1782 = vpop.f32.mrb[0].mxu0
    %1783 = vdwg.mxu0
    %1784 = vmatprep.subr.bf16.mxu0 0
    %1785 = vmatpush1.bf16.msra.mxu0 %v1431
    %1786 = vmatprep.subr.bf16.mxu0 0
    %1787 = vmatpush1.bf16.msra.mxu0 %v1434
    %1788 = vmatprep.subr.bf16.mxu0 0
    %1789 = vmatpush1.bf16.msra.mxu0 %v1437
    %1790 = vmatprep.subr.bf16.mxu0 0
    %1791 = vmatpush1.bf16.msra.mxu0 %v1440
    %1792 = vmatprep.subr.bf16.mxu0 0
    %1793 = vmatpush1.bf16.msra.mxu0 %v1443
    %1794 = vmatprep.subr.bf16.mxu0 0
    %1795 = vmatpush1.bf16.msra.mxu0 %v1446
    %1796 = vmatprep.subr.bf16.mxu0 0
    %1797 = vmatpush1.bf16.msra.mxu0 %v1449
    %1798 = vmatprep.subr.bf16.mxu0 0
    %1799 = vmatpush1.bf16.msra.mxu0 %v1452
    %1800 = vmatprep.subr.bf16.mxu0 0
    %1801 = vmatpush1.bf16.msra.mxu0 %v1455
    %1802 = vmatprep.subr.bf16.mxu0 0
    %1803 = vmatpush1.bf16.msra.mxu0 %v1458
    %1804 = vmatprep.subr.bf16.mxu0 0
    %1805 = vmatpush1.bf16.msra.mxu0 %v1461
    %1806 = vmatprep.subr.bf16.mxu0 0
    %1807 = vmatpush1.bf16.msra.mxu0 %v1464
    %1808 = vmatprep.subr.bf16.mxu0 0
    %1809 = vmatpush1.bf16.msra.mxu0 %v1467
    %1810 = vmatprep.subr.bf16.mxu0 0
    %1811 = vmatpush1.bf16.msra.mxu0 %v1470
    %1812 = vmatprep.subr.bf16.mxu0 0
    %1813 = vmatpush1.bf16.msra.mxu0 %v1473
    %1814 = vmatprep.subr.bf16.mxu0 0
    %1815 = vmatpush1.bf16.msra.mxu0 %v1476
    %1816 = vmatprep.mubr.bf16.mxu0 %v802
    %1817 = vmatmul.mubr.bf16.gmra.mrb[0].mxu0 %v801
    %v1818 = vpop.f32.mrb[0].mxu0
    %v1819 = vadd.f32 %v1779, %v1818
    %v1820 = vpop.f32.mrb[0].mxu0
    %v1821 = vpop.f32.mrb[0].mxu0
    %v1822 = vpop.f32.mrb[0].mxu0
    %1823 = vdwg.mxu0
    %1824 = vmatprep.subr.bf16.mxu0 0
    %1825 = vmatpush1.bf16.msra.mxu0 %v1479
    %1826 = vmatprep.subr.bf16.mxu0 0
    %1827 = vmatpush1.bf16.msra.mxu0 %v1482
    %1828 = vmatprep.subr.bf16.mxu0 0
    %1829 = vmatpush1.bf16.msra.mxu0 %v1485
    %1830 = vmatprep.subr.bf16.mxu0 0
    %1831 = vmatpush1.bf16.msra.mxu0 %v1488
    %1832 = vmatprep.subr.bf16.mxu0 0
    %1833 = vmatpush1.bf16.msra.mxu0 %v1491
    %1834 = vmatprep.subr.bf16.mxu0 0
    %1835 = vmatpush1.bf16.msra.mxu0 %v1494
    %1836 = vmatprep.subr.bf16.mxu0 0
    %1837 = vmatpush1.bf16.msra.mxu0 %v1497
    %1838 = vmatprep.subr.bf16.mxu0 0
    %1839 = vmatpush1.bf16.msra.mxu0 %v1500
    %1840 = vmatprep.subr.bf16.mxu0 0
    %1841 = vmatpush1.bf16.msra.mxu0 0
    %1842 = vmatprep.subr.bf16.mxu0 0
    %1843 = vmatpush1.bf16.msra.mxu0 0
    %1844 = vmatprep.subr.bf16.mxu0 0
    %1845 = vmatpush1.bf16.msra.mxu0 0
    %1846 = vmatprep.subr.bf16.mxu0 0
    %1847 = vmatpush1.bf16.msra.mxu0 0
    %1848 = vmatprep.subr.bf16.mxu0 0
    %1849 = vmatpush1.bf16.msra.mxu0 0
    %1850 = vmatprep.subr.bf16.mxu0 0
    %1851 = vmatpush1.bf16.msra.mxu0 0
    %1852 = vmatprep.subr.bf16.mxu0 0
    %1853 = vmatpush1.bf16.msra.mxu0 0
    %1854 = vmatprep.subr.bf16.mxu0 0
    %1855 = vmatpush1.bf16.msra.mxu0 0
    %1856 = vmatprep.mubr.bf16.mxu0 0
    %1857 = vmatmul.mubr.bf16.gmra.mrb[0].mxu0 %v803
    %v1858 = vpop.f32.mrb[0].mxu0
    %v1859 = vadd.f32 %v1819, %v1858
    %v1860 = vpop.f32.mrb[0].mxu0
    %v1861 = vpop.f32.mrb[0].mxu0
    %v1862 = vpop.f32.mrb[0].mxu0
    %1863 = vdwg.mxu0
    %v1864 = vmax.f32 %v1738, 0.0
    %v1865 = vmax.f32 %v1740, 0.0
    %v1866 = vmax.f32 %v1859, 0.0
    %v1867 = vpack.c.bf16 %v1864, %v1864
    %v1868 = vpack.c.bf16 %v1865, %v1865
    %v1869 = vpack.c.bf16 %v1866, %v1866
    %v1870 = vld [vmem:[#allocation6] sm:$0xf]
    %v1871 = vld [vmem:[#allocation6 + $0x4] sm:$0xf]
    %v1872 = vld [vmem:[#allocation6 + $0x8] sm:$0xf]
    %v1873 = vld [vmem:[#allocation6 + $0xc] sm:$0xf]
    %v1874 = vld [vmem:[#allocation6 + $0x10] sm:$0xf]
    %v1875 = vld [vmem:[#allocation6 + $0x14] sm:$0xf]
    %v1876 = vld [vmem:[#allocation6 + $0x18] sm:$0xf]
    %v1877 = vld [vmem:[#allocation6 + $0x1c] sm:$0xf]
    %v1878 = vld [vmem:[#allocation6 + $0x20] sm:$0xf]
    %v1879 = vld [vmem:[#allocation6 + $0x24] sm:$0xf]
    %v1880 = vld [vmem:[#allocation6 + $0x28] sm:$0xf]
    %v1881 = vld [vmem:[#allocation6 + $0x2c] sm:$0xf]
    %v1882 = vld [vmem:[#allocation6 + $0x30] sm:$0xf]
    %v1883 = vld [vmem:[#allocation6 + $0x34] sm:$0xf]
    %v1884 = vld [vmem:[#allocation6 + $0x38] sm:$0xf]
    %v1885 = vld [vmem:[#allocation6 + $0x3c] sm:$0xf]
    %v1886 = vld [vmem:[#allocation6 + $0x40] sm:$0xf]
    %v1887 = vld [vmem:[#allocation6 + $0x44] sm:$0xf]
    %v1888 = vld [vmem:[#allocation6 + $0x48] sm:$0xf]
    %v1889 = vld [vmem:[#allocation6 + $0x4c] sm:$0xf]
    %v1890 = vld [vmem:[#allocation6 + $0x50] sm:$0xf]
    %v1891 = vld [vmem:[#allocation6 + $0x54] sm:$0xf]
    %v1892 = vld [vmem:[#allocation6 + $0x58] sm:$0xf]
    %v1893 = vld [vmem:[#allocation6 + $0x5c] sm:$0xf]
    %v1894 = vld [vmem:[#allocation6 + $0x60] sm:$0xf]
    %v1895 = vld [vmem:[#allocation6 + $0x64] sm:$0xf]
    %v1896 = vld [vmem:[#allocation6 + $0x68] sm:$0xf]
    %v1897 = vld [vmem:[#allocation6 + $0x6c] sm:$0xf]
    %v1898 = vld [vmem:[#allocation6 + $0x70] sm:$0xf]
    %v1899 = vld [vmem:[#allocation6 + $0x74] sm:$0xf]
    %v1900 = vld [vmem:[#allocation6 + $0x78] sm:$0xf]
    %v1901 = vld [vmem:[#allocation6 + $0x7c] sm:$0xf]
    %v1902 = vld [vmem:[#allocation6 + $0x80] sm:$0xf]
    %v1903 = vld [vmem:[#allocation6 + $0x84] sm:$0xf]
    %v1904 = vld [vmem:[#allocation6 + $0x88] sm:$0xf]
    %v1905 = vld [vmem:[#allocation6 + $0x8c] sm:$0xf]
    %v1906 = vld [vmem:[#allocation6 + $0x90] sm:$0xf]
    %v1907 = vld [vmem:[#allocation6 + $0x94] sm:$0xf]
    %v1908 = vld [vmem:[#allocation6 + $0x98] sm:$0xf]
    %v1909 = vld [vmem:[#allocation6 + $0x9c] sm:$0xf]
    %v1910 = vld [vmem:[#allocation6 + $0xa0] sm:$0xf]
    %v1911 = vld [vmem:[#allocation6 + $0xa4] sm:$0xf]
    %v1912 = vld [vmem:[#allocation6 + $0xa8] sm:$0xf]
    %v1913 = vld [vmem:[#allocation6 + $0xac] sm:$0xf]
    %v1914 = vld [vmem:[#allocation6 + $0xb0] sm:$0xf]
    %v1915 = vld [vmem:[#allocation6 + $0xb4] sm:$0xf]
    %v1916 = vld [vmem:[#allocation6 + $0xb8] sm:$0xf]
    %v1917 = vld [vmem:[#allocation6 + $0xbc] sm:$0xf]
    %v1918 = vld [vmem:[%s6] sm:$0x1]
    %v1920 = vlaneseq
    %v1921 = vshrl.u32 %v1920, 7
    %v1922 = vsub.s32 0, %v1921
    %v1923 = vrot.slane %v1918, %v1922
    %v1973 = vunpack.c.l.b16 %v1870
    %v1974 = vunpack.c.l.b16 %v1871
    %v1975 = vunpack.c.l.b16 %v1872
    %v1976 = vunpack.c.l.b16 %v1873
    %v1977 = vunpack.c.l.b16 %v1874
    %v1978 = vunpack.c.l.b16 %v1875
    %v1979 = vunpack.c.l.b16 %v1876
    %v1980 = vunpack.c.l.b16 %v1877
    %v1981 = vunpack.c.l.b16 %v1878
    %v1982 = vunpack.c.l.b16 %v1879
    %v1983 = vunpack.c.l.b16 %v1880
    %v1984 = vunpack.c.l.b16 %v1881
    %v1985 = vunpack.c.l.b16 %v1882
    %v1986 = vunpack.c.l.b16 %v1883
    %v1987 = vunpack.c.l.b16 %v1884
    %v1988 = vunpack.c.l.b16 %v1885
    %v1989 = vunpack.c.l.b16 %v1886
    %v1990 = vunpack.c.l.b16 %v1887
    %v1991 = vunpack.c.l.b16 %v1888
    %v1992 = vunpack.c.l.b16 %v1889
    %v1993 = vunpack.c.l.b16 %v1890
    %v1994 = vunpack.c.l.b16 %v1891
    %v1995 = vunpack.c.l.b16 %v1892
    %v1996 = vunpack.c.l.b16 %v1893
    %v1997 = vunpack.c.l.b16 %v1894
    %v1998 = vunpack.c.l.b16 %v1895
    %v1999 = vunpack.c.l.b16 %v1896
    %v2000 = vunpack.c.l.b16 %v1897
    %v2001 = vunpack.c.l.b16 %v1898
    %v2002 = vunpack.c.l.b16 %v1899
    %v2003 = vunpack.c.l.b16 %v1900
    %v2004 = vunpack.c.l.b16 %v1901
    %v2005 = vunpack.c.l.b16 %v1902
    %v2006 = vunpack.c.l.b16 %v1903
    %v2007 = vunpack.c.l.b16 %v1904
    %v2008 = vunpack.c.l.b16 %v1905
    %v2009 = vunpack.c.l.b16 %v1906
    %v2010 = vunpack.c.l.b16 %v1907
    %v2011 = vunpack.c.l.b16 %v1908
    %v2012 = vunpack.c.l.b16 %v1909
    %v2013 = vunpack.c.l.b16 %v1910
    %v2014 = vunpack.c.l.b16 %v1911
    %v2015 = vunpack.c.l.b16 %v1912
    %v2016 = vunpack.c.l.b16 %v1913
    %v2017 = vunpack.c.l.b16 %v1914
    %v2018 = vunpack.c.l.b16 %v1915
    %v2019 = vunpack.c.l.b16 %v1916
    %v2020 = vunpack.c.l.b16 %v1917
    %v2021 = vpack.c.b16 %v1974, %v1973
    %v2022 = vpack.c.b16 %v1976, %v1975
    %v2023 = vpack.c.b16 %v1978, %v1977
    %v2024 = vpack.c.b16 %v1980, %v1979
    %v2025 = vpack.c.b16 %v1982, %v1981
    %v2026 = vpack.c.b16 %v1984, %v1983
    %v2027 = vpack.c.b16 %v1986, %v1985
    %v2028 = vpack.c.b16 %v1988, %v1987
    %v2029 = vpack.c.b16 %v1990, %v1989
    %v2030 = vpack.c.b16 %v1992, %v1991
    %v2031 = vpack.c.b16 %v1994, %v1993
    %v2032 = vpack.c.b16 %v1996, %v1995
    %v2033 = vpack.c.b16 %v1998, %v1997
    %v2034 = vpack.c.b16 %v2000, %v1999
    %v2035 = vpack.c.b16 %v2002, %v2001
    %v2036 = vpack.c.b16 %v2004, %v2003
    %v2037 = vpack.c.b16 %v2006, %v2005
    %v2038 = vpack.c.b16 %v2008, %v2007
    %v2039 = vpack.c.b16 %v2010, %v2009
    %v2040 = vpack.c.b16 %v2012, %v2011
    %v2041 = vpack.c.b16 %v2014, %v2013
    %v2042 = vpack.c.b16 %v2016, %v2015
    %v2043 = vpack.c.b16 %v2018, %v2017
    %v2044 = vpack.c.b16 %v2020, %v2019
    %2069 = vmatprep.subr.bf16.mxu0 0
    %2070 = vmatpush1.bf16.msra.mxu0 %v2021
    %2071 = vmatprep.subr.bf16.mxu0 0
    %2072 = vmatpush1.bf16.msra.mxu0 %v2022
    %2073 = vmatprep.subr.bf16.mxu0 0
    %2074 = vmatpush1.bf16.msra.mxu0 %v2023
    %2075 = vmatprep.subr.bf16.mxu0 0
    %2076 = vmatpush1.bf16.msra.mxu0 %v2024
    %2077 = vmatprep.subr.bf16.mxu0 0
    %2078 = vmatpush1.bf16.msra.mxu0 %v2025
    %2079 = vmatprep.subr.bf16.mxu0 0
    %2080 = vmatpush1.bf16.msra.mxu0 %v2026
    %2081 = vmatprep.subr.bf16.mxu0 0
    %2082 = vmatpush1.bf16.msra.mxu0 %v2027
    %2083 = vmatprep.subr.bf16.mxu0 0
    %2084 = vmatpush1.bf16.msra.mxu0 %v2028
    %2085 = vmatprep.subr.bf16.mxu0 0
    %2086 = vmatpush1.bf16.msra.mxu0 %v2029
    %2087 = vmatprep.subr.bf16.mxu0 0
    %2088 = vmatpush1.bf16.msra.mxu0 %v2030
    %2089 = vmatprep.subr.bf16.mxu0 0
    %2090 = vmatpush1.bf16.msra.mxu0 %v2031
    %2091 = vmatprep.subr.bf16.mxu0 0
    %2092 = vmatpush1.bf16.msra.mxu0 %v2032
    %2093 = vmatprep.subr.bf16.mxu0 0
    %2094 = vmatpush1.bf16.msra.mxu0 %v2033
    %2095 = vmatprep.subr.bf16.mxu0 0
    %2096 = vmatpush1.bf16.msra.mxu0 %v2034
    %2097 = vmatprep.subr.bf16.mxu0 0
    %2098 = vmatpush1.bf16.msra.mxu0 %v2035
    %2099 = vmatprep.subr.bf16.mxu0 0
    %2100 = vmatpush1.bf16.msra.mxu0 %v2036
    %2101 = vmatprep.mubr.bf16.mxu0 %v1868
    %2102 = vmatmul.mubr.bf16.gmra.mrb[0].mxu0 %v1867
    %v2103 = vpop.f32.mrb[0].mxu0
    %v2104 = vadd.f32 %v1923, %v2103
    %v2105 = vpop.f32.mrb[0].mxu0
    %v2106 = vpop.f32.mrb[0].mxu0
    %v2107 = vpop.f32.mrb[0].mxu0
    %2108 = vdwg.mxu0
    %2109 = vmatprep.subr.bf16.mxu0 0
    %2110 = vmatpush1.bf16.msra.mxu0 %v2037
    %2111 = vmatprep.subr.bf16.mxu0 0
    %2112 = vmatpush1.bf16.msra.mxu0 %v2038
    %2113 = vmatprep.subr.bf16.mxu0 0
    %2114 = vmatpush1.bf16.msra.mxu0 %v2039
    %2115 = vmatprep.subr.bf16.mxu0 0
    %2116 = vmatpush1.bf16.msra.mxu0 %v2040
    %2117 = vmatprep.subr.bf16.mxu0 0
    %2118 = vmatpush1.bf16.msra.mxu0 %v2041
    %2119 = vmatprep.subr.bf16.mxu0 0
    %2120 = vmatpush1.bf16.msra.mxu0 %v2042
    %2121 = vmatprep.subr.bf16.mxu0 0
    %2122 = vmatpush1.bf16.msra.mxu0 %v2043
    %2123 = vmatprep.subr.bf16.mxu0 0
    %2124 = vmatpush1.bf16.msra.mxu0 %v2044
    %2125 = vmatprep.subr.bf16.mxu0 0
    %2126 = vmatpush1.bf16.msra.mxu0 0
    %2127 = vmatprep.subr.bf16.mxu0 0
    %2128 = vmatpush1.bf16.msra.mxu0 0
    %2129 = vmatprep.subr.bf16.mxu0 0
    %2130 = vmatpush1.bf16.msra.mxu0 0
    %2131 = vmatprep.subr.bf16.mxu0 0
    %2132 = vmatpush1.bf16.msra.mxu0 0
    %2133 = vmatprep.subr.bf16.mxu0 0
    %2134 = vmatpush1.bf16.msra.mxu0 0
    %2135 = vmatprep.subr.bf16.mxu0 0
    %2136 = vmatpush1.bf16.msra.mxu0 0
    %2137 = vmatprep.subr.bf16.mxu0 0
    %2138 = vmatpush1.bf16.msra.mxu0 0
    %2139 = vmatprep.subr.bf16.mxu0 0
    %2140 = vmatpush1.bf16.msra.mxu0 0
    %2141 = vmatprep.mubr.bf16.mxu0 0
    %2142 = vmatmul.mubr.bf16.gmra.mrb[0].mxu0 %v1869
    %v2143 = vpop.f32.mrb[0].mxu0
    %v2144 = vadd.f32 %v2104, %v2143
    %v2145 = vpop.f32.mrb[0].mxu0
    %v2146 = vpop.f32.mrb[0].mxu0
    %v2147 = vpop.f32.mrb[0].mxu0
    %2148 = vdwg.mxu0
    %v2149 = vmax.f32 %v2144, 0.0
    %v2150 = vpack.c.bf16 %v2149, %v2149
    %v2151 = vld [vmem:[#allocation7] sm:$0xff]
    %v2152 = vld [vmem:[#allocation7 + $0x8] sm:$0xf]
    %v2153 = vld [vmem:[#allocation7 + $0xc] sm:$0xff]
    %v2154 = vld [vmem:[#allocation7 + $0x14] sm:$0xf]
    %v2155 = vld [vmem:[#allocation7 + $0x18] sm:$0xff]
    %v2156 = vld [vmem:[#allocation7 + $0x20] sm:$0xf]
    %v2157 = vld [vmem:[#allocation7 + $0x24] sm:$0xff]
    %v2158 = vld [vmem:[#allocation7 + $0x2c] sm:$0xf]
    %v2159 = vld [vmem:[#allocation7 + $0x30] sm:$0xff]
    %v2160 = vld [vmem:[#allocation7 + $0x38] sm:$0xf]
    %v2161 = vld [vmem:[#allocation7 + $0x3c] sm:$0xff]
    %v2162 = vld [vmem:[#allocation7 + $0x44] sm:$0xf]
    %v2163 = vld [vmem:[#allocation7 + $0x48] sm:$0xff]
    %v2164 = vld [vmem:[#allocation7 + $0x50] sm:$0xf]
    %v2165 = vld [vmem:[#allocation7 + $0x54] sm:$0xff]
    %v2166 = vld [vmem:[#allocation7 + $0x5c] sm:$0xf]
    %v2167 = vld [vmem:[#allocation7 + $0x60] sm:$0xff]
    %v2168 = vld [vmem:[#allocation7 + $0x68] sm:$0xf]
    %v2169 = vld [vmem:[#allocation7 + $0x6c] sm:$0xff]
    %v2170 = vld [vmem:[#allocation7 + $0x74] sm:$0xf]
    %v2171 = vld [vmem:[#allocation7 + $0x78] sm:$0xff]
    %v2172 = vld [vmem:[#allocation7 + $0x80] sm:$0xf]
    %v2173 = vld [vmem:[#allocation7 + $0x84] sm:$0xff]
    %v2174 = vld [vmem:[#allocation7 + $0x8c] sm:$0xf]
    %v2175 = vld [vmem:[#allocation7 + $0x90] sm:$0xff]
    %v2176 = vld [vmem:[#allocation7 + $0x98] sm:$0xf]
    %v2177 = vld [vmem:[#allocation7 + $0x9c] sm:$0xff]
    %v2178 = vld [vmem:[#allocation7 + $0xa4] sm:$0xf]
    %v2179 = vld [vmem:[#allocation7 + $0xa8] sm:$0xff]
    %v2180 = vld [vmem:[#allocation7 + $0xb0] sm:$0xf]
    %v2181 = vld [vmem:[#allocation7 + $0xb4] sm:$0xff]
    %v2182 = vld [vmem:[#allocation7 + $0xbc] sm:$0xf]
    %v2183 = vld [vmem:[%s8] sm:$0x7]
    %v2185 = vlaneseq
    %v2186 = vshrl.u32 %v2185, 7
    %v2187 = vsub.s32 0, %v2186
    %v2188 = vrot.slane %v2183, %v2187
    %v2189 = vlaneseq
    %v2190 = vshrl.u32 %v2189, 7
    %v2191 = vsub.s32 1, %v2190
    %v2192 = vrot.slane %v2183, %v2191
    %v2193 = vlaneseq
    %v2194 = vshrl.u32 %v2193, 7
    %v2195 = vsub.s32 2, %v2194
    %v2196 = vrot.slane %v2183, %v2195
    %v2232 = vunpack.c.l.b16 %v2151
    %v2233 = vunpack.c.h.b16 %v2151
    %v2234 = vunpack.c.l.b16 %v2152
    %v2235 = vunpack.c.l.b16 %v2153
    %v2236 = vunpack.c.h.b16 %v2153
    %v2237 = vunpack.c.l.b16 %v2154
    %v2238 = vunpack.c.l.b16 %v2155
    %v2239 = vunpack.c.h.b16 %v2155
    %v2240 = vunpack.c.l.b16 %v2156
    %v2241 = vunpack.c.l.b16 %v2157
    %v2242 = vunpack.c.h.b16 %v2157
    %v2243 = vunpack.c.l.b16 %v2158
    %v2244 = vunpack.c.l.b16 %v2159
    %v2245 = vunpack.c.h.b16 %v2159
    %v2246 = vunpack.c.l.b16 %v2160
    %v2247 = vunpack.c.l.b16 %v2161
    %v2248 = vunpack.c.h.b16 %v2161
    %v2249 = vunpack.c.l.b16 %v2162
    %v2250 = vunpack.c.l.b16 %v2163
    %v2251 = vunpack.c.h.b16 %v2163
    %v2252 = vunpack.c.l.b16 %v2164
    %v2253 = vunpack.c.l.b16 %v2165
    %v2254 = vunpack.c.h.b16 %v2165
    %v2255 = vunpack.c.l.b16 %v2166
    %v2256 = vunpack.c.l.b16 %v2167
    %v2257 = vunpack.c.h.b16 %v2167
    %v2258 = vunpack.c.l.b16 %v2168
    %v2259 = vunpack.c.l.b16 %v2169
    %v2260 = vunpack.c.h.b16 %v2169
    %v2261 = vunpack.c.l.b16 %v2170
    %v2262 = vunpack.c.l.b16 %v2171
    %v2263 = vunpack.c.h.b16 %v2171
    %v2264 = vunpack.c.l.b16 %v2172
    %v2265 = vunpack.c.l.b16 %v2173
    %v2266 = vunpack.c.h.b16 %v2173
    %v2267 = vunpack.c.l.b16 %v2174
    %v2268 = vunpack.c.l.b16 %v2175
    %v2269 = vunpack.c.h.b16 %v2175
    %v2270 = vunpack.c.l.b16 %v2176
    %v2271 = vunpack.c.l.b16 %v2177
    %v2272 = vunpack.c.h.b16 %v2177
    %v2273 = vunpack.c.l.b16 %v2178
    %v2274 = vunpack.c.l.b16 %v2179
    %v2275 = vunpack.c.h.b16 %v2179
    %v2276 = vunpack.c.l.b16 %v2180
    %v2277 = vunpack.c.l.b16 %v2181
    %v2278 = vunpack.c.h.b16 %v2181
    %v2279 = vunpack.c.l.b16 %v2182
    %v2280 = vpack.c.b16 %v2235, %v2232
    %v2281 = vpack.c.b16 %v2236, %v2233
    %v2282 = vpack.c.b16 %v2237, %v2234
    %v2283 = vpack.c.b16 %v2241, %v2238
    %v2284 = vpack.c.b16 %v2242, %v2239
    %v2285 = vpack.c.b16 %v2243, %v2240
    %v2286 = vpack.c.b16 %v2247, %v2244
    %v2287 = vpack.c.b16 %v2248, %v2245
    %v2288 = vpack.c.b16 %v2249, %v2246
    %v2289 = vpack.c.b16 %v2253, %v2250
    %v2290 = vpack.c.b16 %v2254, %v2251
    %v2291 = vpack.c.b16 %v2255, %v2252
    %v2292 = vpack.c.b16 %v2259, %v2256
    %v2293 = vpack.c.b16 %v2260, %v2257
    %v2294 = vpack.c.b16 %v2261, %v2258
    %v2295 = vpack.c.b16 %v2265, %v2262
    %v2296 = vpack.c.b16 %v2266, %v2263
    %v2297 = vpack.c.b16 %v2267, %v2264
    %v2298 = vpack.c.b16 %v2271, %v2268
    %v2299 = vpack.c.b16 %v2272, %v2269
    %v2300 = vpack.c.b16 %v2273, %v2270
    %v2301 = vpack.c.b16 %v2277, %v2274
    %v2302 = vpack.c.b16 %v2278, %v2275
    %v2303 = vpack.c.b16 %v2279, %v2276
    %2328 = vmatprep.subr.bf16.mxu0 %v2281
    %2329 = vmatpush1.bf16.msra.mxu0 %v2280
    %2330 = vmatprep.subr.bf16.mxu0 %v2284
    %2331 = vmatpush1.bf16.msra.mxu0 %v2283
    %2332 = vmatprep.subr.bf16.mxu0 %v2287
    %2333 = vmatpush1.bf16.msra.mxu0 %v2286
    %2334 = vmatprep.subr.bf16.mxu0 %v2290
    %2335 = vmatpush1.bf16.msra.mxu0 %v2289
    %2336 = vmatprep.subr.bf16.mxu0 %v2293
    %2337 = vmatpush1.bf16.msra.mxu0 %v2292
    %2338 = vmatprep.subr.bf16.mxu0 %v2296
    %2339 = vmatpush1.bf16.msra.mxu0 %v2295
    %2340 = vmatprep.subr.bf16.mxu0 %v2299
    %2341 = vmatpush1.bf16.msra.mxu0 %v2298
    %2342 = vmatprep.subr.bf16.mxu0 %v2302
    %2343 = vmatpush1.bf16.msra.mxu0 %v2301
    %2344 = vmatprep.subr.bf16.mxu0 0
    %2345 = vmatpush1.bf16.msra.mxu0 0
    %2346 = vmatprep.subr.bf16.mxu0 0
    %2347 = vmatpush1.bf16.msra.mxu0 0
    %2348 = vmatprep.subr.bf16.mxu0 0
    %2349 = vmatpush1.bf16.msra.mxu0 0
    %2350 = vmatprep.subr.bf16.mxu0 0
    %2351 = vmatpush1.bf16.msra.mxu0 0
    %2352 = vmatprep.subr.bf16.mxu0 0
    %2353 = vmatpush1.bf16.msra.mxu0 0
    %2354 = vmatprep.subr.bf16.mxu0 0
    %2355 = vmatpush1.bf16.msra.mxu0 0
    %2356 = vmatprep.subr.bf16.mxu0 0
    %2357 = vmatpush1.bf16.msra.mxu0 0
    %2358 = vmatprep.subr.bf16.mxu0 0
    %2359 = vmatpush1.bf16.msra.mxu0 0
    %2360 = vmatprep.mubr.bf16.mxu0 0
    %2361 = vmatmul.mubr.bf16.gmra.mrb[0].mxu0 %v2150
    %v2362 = vpop.f32.mrb[0].mxu0
    %v2363 = vadd.f32 %v2188, %v2362
    %v2364 = vpop.f32.mrb[0].mxu0
    %v2365 = vadd.f32 %v2192, %v2364
    %v2366 = vpop.f32.mrb[0].mxu0
    %v2367 = vpop.f32.mrb[0].mxu0
    %2368 = vdwg.mxu0
    %2369 = vmatprep.subr.bf16.mxu0 0
    %2370 = vmatpush1.bf16.msra.mxu0 %v2282
    %2371 = vmatprep.subr.bf16.mxu0 0
    %2372 = vmatpush1.bf16.msra.mxu0 %v2285
    %2373 = vmatprep.subr.bf16.mxu0 0
    %2374 = vmatpush1.bf16.msra.mxu0 %v2288
    %2375 = vmatprep.subr.bf16.mxu0 0
    %2376 = vmatpush1.bf16.msra.mxu0 %v2291
    %2377 = vmatprep.subr.bf16.mxu0 0
    %2378 = vmatpush1.bf16.msra.mxu0 %v2294
    %2379 = vmatprep.subr.bf16.mxu0 0
    %2380 = vmatpush1.bf16.msra.mxu0 %v2297
    %2381 = vmatprep.subr.bf16.mxu0 0
    %2382 = vmatpush1.bf16.msra.mxu0 %v2300
    %2383 = vmatprep.subr.bf16.mxu0 0
    %2384 = vmatpush1.bf16.msra.mxu0 %v2303
    %2385 = vmatprep.subr.bf16.mxu0 0
    %2386 = vmatpush1.bf16.msra.mxu0 0
    %2387 = vmatprep.subr.bf16.mxu0 0
    %2388 = vmatpush1.bf16.msra.mxu0 0
    %2389 = vmatprep.subr.bf16.mxu0 0
    %2390 = vmatpush1.bf16.msra.mxu0 0
    %2391 = vmatprep.subr.bf16.mxu0 0
    %2392 = vmatpush1.bf16.msra.mxu0 0
    %2393 = vmatprep.subr.bf16.mxu0 0
    %2394 = vmatpush1.bf16.msra.mxu0 0
    %2395 = vmatprep.subr.bf16.mxu0 0
    %2396 = vmatpush1.bf16.msra.mxu0 0
    %2397 = vmatprep.subr.bf16.mxu0 0
    %2398 = vmatpush1.bf16.msra.mxu0 0
    %2399 = vmatprep.subr.bf16.mxu0 0
    %2400 = vmatpush1.bf16.msra.mxu0 0
    %2401 = vmatprep.mubr.bf16.mxu0 0
    %2402 = vmatmul.mubr.bf16.gmra.mrb[0].mxu0 %v2150
    %v2403 = vpop.f32.mrb[0].mxu0
    %v2404 = vadd.f32 %v2196, %v2403
    %v2405 = vpop.f32.mrb[0].mxu0
    %v2406 = vpop.f32.mrb[0].mxu0
    %v2407 = vpop.f32.mrb[0].mxu0
    %2408 = vdwg.mxu0
    %v2409 = vmax.f32 %v2363, 0.0
    %v2410 = vmax.f32 %v2365, 0.0
    %v2411 = vmax.f32 %v2404, 0.0
    %v2412 = vpack.c.bf16 %v2409, %v2409
    %v2413 = vpack.c.bf16 %v2410, %v2410
    %v2414 = vpack.c.bf16 %v2411, %v2411
    %v2415 = vld [vmem:[#allocation9] sm:$0xff]
    %v2416 = vld [vmem:[#allocation9 + $0x8] sm:$0xff]
    %v2417 = vld [vmem:[#allocation9 + $0x10] sm:$0xf]
    %v2418 = vld [vmem:[#allocation9 + $0x14] sm:$0xff]
    %v2419 = vld [vmem:[#allocation9 + $0x1c] sm:$0xff]
    %v2420 = vld [vmem:[#allocation9 + $0x24] sm:$0xf]
    %v2421 = vld [vmem:[#allocation9 + $0x28] sm:$0xff]
    %v2422 = vld [vmem:[#allocation9 + $0x30] sm:$0xff]
    %v2423 = vld [vmem:[#allocation9 + $0x38] sm:$0xf]
    %v2424 = vld [vmem:[#allocation9 + $0x3c] sm:$0xff]
    %v2425 = vld [vmem:[#allocation9 + $0x44] sm:$0xff]
    %v2426 = vld [vmem:[#allocation9 + $0x4c] sm:$0xf]
    %v2427 = vld [vmem:[#allocation9 + $0x50] sm:$0xff]
    %v2428 = vld [vmem:[#allocation9 + $0x58] sm:$0xff]
    %v2429 = vld [vmem:[#allocation9 + $0x60] sm:$0xf]
    %v2430 = vld [vmem:[#allocation9 + $0x64] sm:$0xff]
    %v2431 = vld [vmem:[#allocation9 + $0x6c] sm:$0xff]
    %v2432 = vld [vmem:[#allocation9 + $0x74] sm:$0xf]
    %v2433 = vld [vmem:[#allocation9 + $0x78] sm:$0xff]
    %v2434 = vld [vmem:[#allocation9 + $0x80] sm:$0xff]
    %v2435 = vld [vmem:[#allocation9 + $0x88] sm:$0xf]
    %v2436 = vld [vmem:[#allocation9 + $0x8c] sm:$0xff]
    %v2437 = vld [vmem:[#allocation9 + $0x94] sm:$0xff]
    %v2438 = vld [vmem:[#allocation9 + $0x9c] sm:$0xf]
    %v2439 = vld [vmem:[#allocation9 + $0xa0] sm:$0xff]
    %v2440 = vld [vmem:[#allocation9 + $0xa8] sm:$0xff]
    %v2441 = vld [vmem:[#allocation9 + $0xb0] sm:$0xf]
    %v2442 = vld [vmem:[#allocation9 + $0xb4] sm:$0xff]
    %v2443 = vld [vmem:[#allocation9 + $0xbc] sm:$0xff]
    %v2444 = vld [vmem:[#allocation9 + $0xc4] sm:$0xf]
    %v2445 = vld [vmem:[#allocation9 + $0xc8] sm:$0xff]
    %v2446 = vld [vmem:[#allocation9 + $0xd0] sm:$0xff]
    %v2447 = vld [vmem:[#allocation9 + $0xd8] sm:$0xf]
    %v2448 = vld [vmem:[#allocation9 + $0xdc] sm:$0xff]
    %v2449 = vld [vmem:[#allocation9 + $0xe4] sm:$0xff]
    %v2450 = vld [vmem:[#allocation9 + $0xec] sm:$0xf]
    %v2451 = vld [vmem:[#allocation9 + $0xf0] sm:$0xff]
    %v2452 = vld [vmem:[#allocation9 + $0xf8] sm:$0xff]
    %v2453 = vld [vmem:[#allocation9 + $0x100] sm:$0xf]
    %v2454 = vld [vmem:[#allocation9 + $0x104] sm:$0xff]
    %v2455 = vld [vmem:[#allocation9 + $0x10c] sm:$0xff]
    %v2456 = vld [vmem:[#allocation9 + $0x114] sm:$0xf]
    %v2457 = vld [vmem:[#allocation9 + $0x118] sm:$0xff]
    %v2458 = vld [vmem:[#allocation9 + $0x120] sm:$0xff]
    %v2459 = vld [vmem:[#allocation9 + $0x128] sm:$0xf]
    %v2460 = vld [vmem:[#allocation9 + $0x12c] sm:$0xff]
    %v2461 = vld [vmem:[#allocation9 + $0x134] sm:$0xff]
    %v2462 = vld [vmem:[#allocation9 + $0x13c] sm:$0xf]
    %v2463 = vld [vmem:[#allocation9 + $0x140] sm:$0xff]
    %v2464 = vld [vmem:[#allocation9 + $0x148] sm:$0xff]
    %v2465 = vld [vmem:[#allocation9 + $0x150] sm:$0xf]
    %v2466 = vld [vmem:[#allocation9 + $0x154] sm:$0xff]
    %v2467 = vld [vmem:[#allocation9 + $0x15c] sm:$0xff]
    %v2468 = vld [vmem:[#allocation9 + $0x164] sm:$0xf]
    %v2469 = vld [vmem:[#allocation9 + $0x168] sm:$0xff]
    %v2470 = vld [vmem:[#allocation9 + $0x170] sm:$0xff]
    %v2471 = vld [vmem:[#allocation9 + $0x178] sm:$0xf]
    %v2472 = vld [vmem:[#allocation9 + $0x17c] sm:$0xff]
    %v2473 = vld [vmem:[#allocation9 + $0x184] sm:$0xff]
    %v2474 = vld [vmem:[#allocation9 + $0x18c] sm:$0xf]
    %v2475 = vld [vmem:[#allocation9 + $0x190] sm:$0xff]
    %v2476 = vld [vmem:[#allocation9 + $0x198] sm:$0xff]
    %v2477 = vld [vmem:[#allocation9 + $0x1a0] sm:$0xf]
    %v2478 = vld [vmem:[#allocation9 + $0x1a4] sm:$0xff]
    %v2479 = vld [vmem:[#allocation9 + $0x1ac] sm:$0xff]
    %v2480 = vld [vmem:[#allocation9 + $0x1b4] sm:$0xf]
    %v2481 = vld [vmem:[#allocation9 + $0x1b8] sm:$0xff]
    %v2482 = vld [vmem:[#allocation9 + $0x1c0] sm:$0xff]
    %v2483 = vld [vmem:[#allocation9 + $0x1c8] sm:$0xf]
    %v2484 = vld [vmem:[#allocation9 + $0x1cc] sm:$0xff]
    %v2485 = vld [vmem:[#allocation9 + $0x1d4] sm:$0xff]
    %v2486 = vld [vmem:[#allocation9 + $0x1dc] sm:$0xf]
    %v2487 = vld [vmem:[#allocation9 + $0x1e0] sm:$0xff]
    %v2488 = vld [vmem:[#allocation9 + $0x1e8] sm:$0xff]
    %v2489 = vld [vmem:[#allocation9 + $0x1f0] sm:$0xf]
    %v2490 = vld [vmem:[#allocation9 + $0x1f4] sm:$0xff]
    %v2491 = vld [vmem:[#allocation9 + $0x1fc] sm:$0xff]
    %v2492 = vld [vmem:[#allocation9 + $0x204] sm:$0xf]
    %v2493 = vld [vmem:[#allocation9 + $0x208] sm:$0xff]
    %v2494 = vld [vmem:[#allocation9 + $0x210] sm:$0xff]
    %v2495 = vld [vmem:[#allocation9 + $0x218] sm:$0xf]
    %v2496 = vld [vmem:[#allocation9 + $0x21c] sm:$0xff]
    %v2497 = vld [vmem:[#allocation9 + $0x224] sm:$0xff]
    %v2498 = vld [vmem:[#allocation9 + $0x22c] sm:$0xf]
    %v2499 = vld [vmem:[#allocation9 + $0x230] sm:$0xff]
    %v2500 = vld [vmem:[#allocation9 + $0x238] sm:$0xff]
    %v2501 = vld [vmem:[#allocation9 + $0x240] sm:$0xf]
    %v2502 = vld [vmem:[#allocation9 + $0x244] sm:$0xff]
    %v2503 = vld [vmem:[#allocation9 + $0x24c] sm:$0xff]
    %v2504 = vld [vmem:[#allocation9 + $0x254] sm:$0xf]
    %v2505 = vld [vmem:[#allocation9 + $0x258] sm:$0xff]
    %v2506 = vld [vmem:[#allocation9 + $0x260] sm:$0xff]
    %v2507 = vld [vmem:[#allocation9 + $0x268] sm:$0xf]
    %v2508 = vld [vmem:[#allocation9 + $0x26c] sm:$0xff]
    %v2509 = vld [vmem:[#allocation9 + $0x274] sm:$0xff]
    %v2510 = vld [vmem:[#allocation9 + $0x27c] sm:$0xf]
    %v2511 = vld [vmem:[#allocation9 + $0x280] sm:$0xff]
    %v2512 = vld [vmem:[#allocation9 + $0x288] sm:$0xff]
    %v2513 = vld [vmem:[#allocation9 + $0x290] sm:$0xf]
    %v2514 = vld [vmem:[#allocation9 + $0x294] sm:$0xff]
    %v2515 = vld [vmem:[#allocation9 + $0x29c] sm:$0xff]
    %v2516 = vld [vmem:[#allocation9 + $0x2a4] sm:$0xf]
    %v2517 = vld [vmem:[#allocation9 + $0x2a8] sm:$0xff]
    %v2518 = vld [vmem:[#allocation9 + $0x2b0] sm:$0xff]
    %v2519 = vld [vmem:[#allocation9 + $0x2b8] sm:$0xf]
    %v2520 = vld [vmem:[#allocation9 + $0x2bc] sm:$0xff]
    %v2521 = vld [vmem:[#allocation9 + $0x2c4] sm:$0xff]
    %v2522 = vld [vmem:[#allocation9 + $0x2cc] sm:$0xf]
    %v2523 = vld [vmem:[#allocation9 + $0x2d0] sm:$0xff]
    %v2524 = vld [vmem:[#allocation9 + $0x2d8] sm:$0xff]
    %v2525 = vld [vmem:[#allocation9 + $0x2e0] sm:$0xf]
    %v2526 = vld [vmem:[#allocation9 + $0x2e4] sm:$0xff]
    %v2527 = vld [vmem:[#allocation9 + $0x2ec] sm:$0xff]
    %v2528 = vld [vmem:[#allocation9 + $0x2f4] sm:$0xf]
    %v2529 = vld [vmem:[#allocation9 + $0x2f8] sm:$0xff]
    %v2530 = vld [vmem:[#allocation9 + $0x300] sm:$0xff]
    %v2531 = vld [vmem:[#allocation9 + $0x308] sm:$0xf]
    %v2532 = vld [vmem:[#allocation9 + $0x30c] sm:$0xff]
    %v2533 = vld [vmem:[#allocation9 + $0x314] sm:$0xff]
    %v2534 = vld [vmem:[#allocation9 + $0x31c] sm:$0xf]
    %v2535 = vld [vmem:[#allocation9 + $0x320] sm:$0xff]
    %v2536 = vld [vmem:[#allocation9 + $0x328] sm:$0xff]
    %v2537 = vld [vmem:[#allocation9 + $0x330] sm:$0xf]
    %v2538 = vld [vmem:[#allocation9 + $0x334] sm:$0xff]
    %v2539 = vld [vmem:[#allocation9 + $0x33c] sm:$0xff]
    %v2540 = vld [vmem:[#allocation9 + $0x344] sm:$0xf]
    %v2541 = vld [vmem:[#allocation9 + $0x348] sm:$0xff]
    %v2542 = vld [vmem:[#allocation9 + $0x350] sm:$0xff]
    %v2543 = vld [vmem:[#allocation9 + $0x358] sm:$0xf]
    %v2544 = vld [vmem:[#allocation9 + $0x35c] sm:$0xff]
    %v2545 = vld [vmem:[#allocation9 + $0x364] sm:$0xff]
    %v2546 = vld [vmem:[#allocation9 + $0x36c] sm:$0xf]
    %v2547 = vld [vmem:[#allocation9 + $0x370] sm:$0xff]
    %v2548 = vld [vmem:[#allocation9 + $0x378] sm:$0xff]
    %v2549 = vld [vmem:[#allocation9 + $0x380] sm:$0xf]
    %v2550 = vld [vmem:[#allocation9 + $0x384] sm:$0xff]
    %v2551 = vld [vmem:[#allocation9 + $0x38c] sm:$0xff]
    %v2552 = vld [vmem:[#allocation9 + $0x394] sm:$0xf]
    %v2553 = vld [vmem:[#allocation9 + $0x398] sm:$0xff]
    %v2554 = vld [vmem:[#allocation9 + $0x3a0] sm:$0xff]
    %v2555 = vld [vmem:[#allocation9 + $0x3a8] sm:$0xf]
    %v2556 = vld [vmem:[#allocation9 + $0x3ac] sm:$0xff]
    %v2557 = vld [vmem:[#allocation9 + $0x3b4] sm:$0xff]
    %v2558 = vld [vmem:[#allocation9 + $0x3bc] sm:$0xf]
    %v2559 = vld [vmem:[%s10] sm:$0x1f]
    %v2561 = vlaneseq
    %v2562 = vshrl.u32 %v2561, 7
    %v2563 = vsub.s32 0, %v2562
    %v2564 = vrot.slane %v2559, %v2563
    %v2565 = vlaneseq
    %v2566 = vshrl.u32 %v2565, 7
    %v2567 = vsub.s32 1, %v2566
    %v2568 = vrot.slane %v2559, %v2567
    %v2569 = vlaneseq
    %v2570 = vshrl.u32 %v2569, 7
    %v2571 = vsub.s32 2, %v2570
    %v2572 = vrot.slane %v2559, %v2571
    %v2573 = vlaneseq
    %v2574 = vshrl.u32 %v2573, 7
    %v2575 = vsub.s32 3, %v2574
    %v2576 = vrot.slane %v2559, %v2575
    %v2577 = vlaneseq
    %v2578 = vshrl.u32 %v2577, 7
    %v2579 = vsub.s32 4, %v2578
    %v2580 = vrot.slane %v2559, %v2579
    %v2730 = vunpack.c.l.b16 %v2415
    %v2731 = vunpack.c.h.b16 %v2415
    %v2732 = vunpack.c.l.b16 %v2416
    %v2733 = vunpack.c.h.b16 %v2416
    %v2734 = vunpack.c.l.b16 %v2417
    %v2735 = vunpack.c.l.b16 %v2418
    %v2736 = vunpack.c.h.b16 %v2418
    %v2737 = vunpack.c.l.b16 %v2419
    %v2738 = vunpack.c.h.b16 %v2419
    %v2739 = vunpack.c.l.b16 %v2420
    %v2740 = vunpack.c.l.b16 %v2421
    %v2741 = vunpack.c.h.b16 %v2421
    %v2742 = vunpack.c.l.b16 %v2422
    %v2743 = vunpack.c.h.b16 %v2422
    %v2744 = vunpack.c.l.b16 %v2423
    %v2745 = vunpack.c.l.b16 %v2424
    %v2746 = vunpack.c.h.b16 %v2424
    %v2747 = vunpack.c.l.b16 %v2425
    %v2748 = vunpack.c.h.b16 %v2425
    %v2749 = vunpack.c.l.b16 %v2426
    %v2750 = vunpack.c.l.b16 %v2427
    %v2751 = vunpack.c.h.b16 %v2427
    %v2752 = vunpack.c.l.b16 %v2428
    %v2753 = vunpack.c.h.b16 %v2428
    %v2754 = vunpack.c.l.b16 %v2429
    %v2755 = vunpack.c.l.b16 %v2430
    %v2756 = vunpack.c.h.b16 %v2430
    %v2757 = vunpack.c.l.b16 %v2431
    %v2758 = vunpack.c.h.b16 %v2431
    %v2759 = vunpack.c.l.b16 %v2432
    %v2760 = vunpack.c.l.b16 %v2433
    %v2761 = vunpack.c.h.b16 %v2433
    %v2762 = vunpack.c.l.b16 %v2434
    %v2763 = vunpack.c.h.b16 %v2434
    %v2764 = vunpack.c.l.b16 %v2435
    %v2765 = vunpack.c.l.b16 %v2436
    %v2766 = vunpack.c.h.b16 %v2436
    %v2767 = vunpack.c.l.b16 %v2437
    %v2768 = vunpack.c.h.b16 %v2437
    %v2769 = vunpack.c.l.b16 %v2438
    %v2770 = vunpack.c.l.b16 %v2439
    %v2771 = vunpack.c.h.b16 %v2439
    %v2772 = vunpack.c.l.b16 %v2440
    %v2773 = vunpack.c.h.b16 %v2440
    %v2774 = vunpack.c.l.b16 %v2441
    %v2775 = vunpack.c.l.b16 %v2442
    %v2776 = vunpack.c.h.b16 %v2442
    %v2777 = vunpack.c.l.b16 %v2443
    %v2778 = vunpack.c.h.b16 %v2443
    %v2779 = vunpack.c.l.b16 %v2444
    %v2780 = vunpack.c.l.b16 %v2445
    %v2781 = vunpack.c.h.b16 %v2445
    %v2782 = vunpack.c.l.b16 %v2446
    %v2783 = vunpack.c.h.b16 %v2446
    %v2784 = vunpack.c.l.b16 %v2447
    %v2785 = vunpack.c.l.b16 %v2448
    %v2786 = vunpack.c.h.b16 %v2448
    %v2787 = vunpack.c.l.b16 %v2449
    %v2788 = vunpack.c.h.b16 %v2449
    %v2789 = vunpack.c.l.b16 %v2450
    %v2790 = vunpack.c.l.b16 %v2451
    %v2791 = vunpack.c.h.b16 %v2451
    %v2792 = vunpack.c.l.b16 %v2452
    %v2793 = vunpack.c.h.b16 %v2452
    %v2794 = vunpack.c.l.b16 %v2453
    %v2795 = vunpack.c.l.b16 %v2454
    %v2796 = vunpack.c.h.b16 %v2454
    %v2797 = vunpack.c.l.b16 %v2455
    %v2798 = vunpack.c.h.b16 %v2455
    %v2799 = vunpack.c.l.b16 %v2456
    %v2800 = vunpack.c.l.b16 %v2457
    %v2801 = vunpack.c.h.b16 %v2457
    %v2802 = vunpack.c.l.b16 %v2458
    %v2803 = vunpack.c.h.b16 %v2458
    %v2804 = vunpack.c.l.b16 %v2459
    %v2805 = vunpack.c.l.b16 %v2460
    %v2806 = vunpack.c.h.b16 %v2460
    %v2807 = vunpack.c.l.b16 %v2461
    %v2808 = vunpack.c.h.b16 %v2461
    %v2809 = vunpack.c.l.b16 %v2462
    %v2810 = vunpack.c.l.b16 %v2463
    %v2811 = vunpack.c.h.b16 %v2463
    %v2812 = vunpack.c.l.b16 %v2464
    %v2813 = vunpack.c.h.b16 %v2464
    %v2814 = vunpack.c.l.b16 %v2465
    %v2815 = vunpack.c.l.b16 %v2466
    %v2816 = vunpack.c.h.b16 %v2466
    %v2817 = vunpack.c.l.b16 %v2467
    %v2818 = vunpack.c.h.b16 %v2467
    %v2819 = vunpack.c.l.b16 %v2468
    %v2820 = vunpack.c.l.b16 %v2469
    %v2821 = vunpack.c.h.b16 %v2469
    %v2822 = vunpack.c.l.b16 %v2470
    %v2823 = vunpack.c.h.b16 %v2470
    %v2824 = vunpack.c.l.b16 %v2471
    %v2825 = vunpack.c.l.b16 %v2472
    %v2826 = vunpack.c.h.b16 %v2472
    %v2827 = vunpack.c.l.b16 %v2473
    %v2828 = vunpack.c.h.b16 %v2473
    %v2829 = vunpack.c.l.b16 %v2474
    %v2830 = vunpack.c.l.b16 %v2475
    %v2831 = vunpack.c.h.b16 %v2475
    %v2832 = vunpack.c.l.b16 %v2476
    %v2833 = vunpack.c.h.b16 %v2476
    %v2834 = vunpack.c.l.b16 %v2477
    %v2835 = vunpack.c.l.b16 %v2478
    %v2836 = vunpack.c.h.b16 %v2478
    %v2837 = vunpack.c.l.b16 %v2479
    %v2838 = vunpack.c.h.b16 %v2479
    %v2839 = vunpack.c.l.b16 %v2480
    %v2840 = vunpack.c.l.b16 %v2481
    %v2841 = vunpack.c.h.b16 %v2481
    %v2842 = vunpack.c.l.b16 %v2482
    %v2843 = vunpack.c.h.b16 %v2482
    %v2844 = vunpack.c.l.b16 %v2483
    %v2845 = vunpack.c.l.b16 %v2484
    %v2846 = vunpack.c.h.b16 %v2484
    %v2847 = vunpack.c.l.b16 %v2485
    %v2848 = vunpack.c.h.b16 %v2485
    %v2849 = vunpack.c.l.b16 %v2486
    %v2850 = vunpack.c.l.b16 %v2487
    %v2851 = vunpack.c.h.b16 %v2487
    %v2852 = vunpack.c.l.b16 %v2488
    %v2853 = vunpack.c.h.b16 %v2488
    %v2854 = vunpack.c.l.b16 %v2489
    %v2855 = vunpack.c.l.b16 %v2490
    %v2856 = vunpack.c.h.b16 %v2490
    %v2857 = vunpack.c.l.b16 %v2491
    %v2858 = vunpack.c.h.b16 %v2491
    %v2859 = vunpack.c.l.b16 %v2492
    %v2860 = vunpack.c.l.b16 %v2493
    %v2861 = vunpack.c.h.b16 %v2493
    %v2862 = vunpack.c.l.b16 %v2494
    %v2863 = vunpack.c.h.b16 %v2494
    %v2864 = vunpack.c.l.b16 %v2495
    %v2865 = vunpack.c.l.b16 %v2496
    %v2866 = vunpack.c.h.b16 %v2496
    %v2867 = vunpack.c.l.b16 %v2497
    %v2868 = vunpack.c.h.b16 %v2497
    %v2869 = vunpack.c.l.b16 %v2498
    %v2870 = vunpack.c.l.b16 %v2499
    %v2871 = vunpack.c.h.b16 %v2499
    %v2872 = vunpack.c.l.b16 %v2500
    %v2873 = vunpack.c.h.b16 %v2500
    %v2874 = vunpack.c.l.b16 %v2501
    %v2875 = vunpack.c.l.b16 %v2502
    %v2876 = vunpack.c.h.b16 %v2502
    %v2877 = vunpack.c.l.b16 %v2503
    %v2878 = vunpack.c.h.b16 %v2503
    %v2879 = vunpack.c.l.b16 %v2504
    %v2880 = vunpack.c.l.b16 %v2505
    %v2881 = vunpack.c.h.b16 %v2505
    %v2882 = vunpack.c.l.b16 %v2506
    %v2883 = vunpack.c.h.b16 %v2506
    %v2884 = vunpack.c.l.b16 %v2507
    %v2885 = vunpack.c.l.b16 %v2508
    %v2886 = vunpack.c.h.b16 %v2508
    %v2887 = vunpack.c.l.b16 %v2509
    %v2888 = vunpack.c.h.b16 %v2509
    %v2889 = vunpack.c.l.b16 %v2510
    %v2890 = vunpack.c.l.b16 %v2511
    %v2891 = vunpack.c.h.b16 %v2511
    %v2892 = vunpack.c.l.b16 %v2512
    %v2893 = vunpack.c.h.b16 %v2512
    %v2894 = vunpack.c.l.b16 %v2513
    %v2895 = vunpack.c.l.b16 %v2514
    %v2896 = vunpack.c.h.b16 %v2514
    %v2897 = vunpack.c.l.b16 %v2515
    %v2898 = vunpack.c.h.b16 %v2515
    %v2899 = vunpack.c.l.b16 %v2516
    %v2900 = vunpack.c.l.b16 %v2517
    %v2901 = vunpack.c.h.b16 %v2517
    %v2902 = vunpack.c.l.b16 %v2518
    %v2903 = vunpack.c.h.b16 %v2518
    %v2904 = vunpack.c.l.b16 %v2519
    %v2905 = vunpack.c.l.b16 %v2520
    %v2906 = vunpack.c.h.b16 %v2520
    %v2907 = vunpack.c.l.b16 %v2521
    %v2908 = vunpack.c.h.b16 %v2521
    %v2909 = vunpack.c.l.b16 %v2522
    %v2910 = vunpack.c.l.b16 %v2523
    %v2911 = vunpack.c.h.b16 %v2523
    %v2912 = vunpack.c.l.b16 %v2524
    %v2913 = vunpack.c.h.b16 %v2524
    %v2914 = vunpack.c.l.b16 %v2525
    %v2915 = vunpack.c.l.b16 %v2526
    %v2916 = vunpack.c.h.b16 %v2526
    %v2917 = vunpack.c.l.b16 %v2527
    %v2918 = vunpack.c.h.b16 %v2527
    %v2919 = vunpack.c.l.b16 %v2528
    %v2920 = vunpack.c.l.b16 %v2529
    %v2921 = vunpack.c.h.b16 %v2529
    %v2922 = vunpack.c.l.b16 %v2530
    %v2923 = vunpack.c.h.b16 %v2530
    %v2924 = vunpack.c.l.b16 %v2531
    %v2925 = vunpack.c.l.b16 %v2532
    %v2926 = vunpack.c.h.b16 %v2532
    %v2927 = vunpack.c.l.b16 %v2533
    %v2928 = vunpack.c.h.b16 %v2533
    %v2929 = vunpack.c.l.b16 %v2534
    %v2930 = vunpack.c.l.b16 %v2535
    %v2931 = vunpack.c.h.b16 %v2535
    %v2932 = vunpack.c.l.b16 %v2536
    %v2933 = vunpack.c.h.b16 %v2536
    %v2934 = vunpack.c.l.b16 %v2537
    %v2935 = vunpack.c.l.b16 %v2538
    %v2936 = vunpack.c.h.b16 %v2538
    %v2937 = vunpack.c.l.b16 %v2539
    %v2938 = vunpack.c.h.b16 %v2539
    %v2939 = vunpack.c.l.b16 %v2540
    %v2940 = vunpack.c.l.b16 %v2541
    %v2941 = vunpack.c.h.b16 %v2541
    %v2942 = vunpack.c.l.b16 %v2542
    %v2943 = vunpack.c.h.b16 %v2542
    %v2944 = vunpack.c.l.b16 %v2543
    %v2945 = vunpack.c.l.b16 %v2544
    %v2946 = vunpack.c.h.b16 %v2544
    %v2947 = vunpack.c.l.b16 %v2545
    %v2948 = vunpack.c.h.b16 %v2545
    %v2949 = vunpack.c.l.b16 %v2546
    %v2950 = vunpack.c.l.b16 %v2547
    %v2951 = vunpack.c.h.b16 %v2547
    %v2952 = vunpack.c.l.b16 %v2548
    %v2953 = vunpack.c.h.b16 %v2548
    %v2954 = vunpack.c.l.b16 %v2549
    %v2955 = vunpack.c.l.b16 %v2550
    %v2956 = vunpack.c.h.b16 %v2550
    %v2957 = vunpack.c.l.b16 %v2551
    %v2958 = vunpack.c.h.b16 %v2551
    %v2959 = vunpack.c.l.b16 %v2552
    %v2960 = vunpack.c.l.b16 %v2553
    %v2961 = vunpack.c.h.b16 %v2553
    %v2962 = vunpack.c.l.b16 %v2554
    %v2963 = vunpack.c.h.b16 %v2554
    %v2964 = vunpack.c.l.b16 %v2555
    %v2965 = vunpack.c.l.b16 %v2556
    %v2966 = vunpack.c.h.b16 %v2556
    %v2967 = vunpack.c.l.b16 %v2557
    %v2968 = vunpack.c.h.b16 %v2557
    %v2969 = vunpack.c.l.b16 %v2558
    %v2970 = vpack.c.b16 %v2735, %v2730
    %v2971 = vpack.c.b16 %v2736, %v2731
    %v2972 = vpack.c.b16 %v2737, %v2732
    %v2973 = vpack.c.b16 %v2738, %v2733
    %v2974 = vpack.c.b16 %v2739, %v2734
    %v2975 = vpack.c.b16 %v2745, %v2740
    %v2976 = vpack.c.b16 %v2746, %v2741
    %v2977 = vpack.c.b16 %v2747, %v2742
    %v2978 = vpack.c.b16 %v2748, %v2743
    %v2979 = vpack.c.b16 %v2749, %v2744
    %v2980 = vpack.c.b16 %v2755, %v2750
    %v2981 = vpack.c.b16 %v2756, %v2751
    %v2982 = vpack.c.b16 %v2757, %v2752
    %v2983 = vpack.c.b16 %v2758, %v2753
    %v2984 = vpack.c.b16 %v2759, %v2754
    %v2985 = vpack.c.b16 %v2765, %v2760
    %v2986 = vpack.c.b16 %v2766, %v2761
    %v2987 = vpack.c.b16 %v2767, %v2762
    %v2988 = vpack.c.b16 %v2768, %v2763
    %v2989 = vpack.c.b16 %v2769, %v2764
    %v2990 = vpack.c.b16 %v2775, %v2770
    %v2991 = vpack.c.b16 %v2776, %v2771
    %v2992 = vpack.c.b16 %v2777, %v2772
    %v2993 = vpack.c.b16 %v2778, %v2773
    %v2994 = vpack.c.b16 %v2779, %v2774
    %v2995 = vpack.c.b16 %v2785, %v2780
    %v2996 = vpack.c.b16 %v2786, %v2781
    %v2997 = vpack.c.b16 %v2787, %v2782
    %v2998 = vpack.c.b16 %v2788, %v2783
    %v2999 = vpack.c.b16 %v2789, %v2784
    %v3000 = vpack.c.b16 %v2795, %v2790
    %v3001 = vpack.c.b16 %v2796, %v2791
    %v3002 = vpack.c.b16 %v2797, %v2792
    %v3003 = vpack.c.b16 %v2798, %v2793
    %v3004 = vpack.c.b16 %v2799, %v2794
    %v3005 = vpack.c.b16 %v2805, %v2800
    %v3006 = vpack.c.b16 %v2806, %v2801
    %v3007 = vpack.c.b16 %v2807, %v2802
    %v3008 = vpack.c.b16 %v2808, %v2803
    %v3009 = vpack.c.b16 %v2809, %v2804
    %v3010 = vpack.c.b16 %v2815, %v2810
    %v3011 = vpack.c.b16 %v2816, %v2811
    %v3012 = vpack.c.b16 %v2817, %v2812
    %v3013 = vpack.c.b16 %v2818, %v2813
    %v3014 = vpack.c.b16 %v2819, %v2814
    %v3015 = vpack.c.b16 %v2825, %v2820
    %v3016 = vpack.c.b16 %v2826, %v2821
    %v3017 = vpack.c.b16 %v2827, %v2822
    %v3018 = vpack.c.b16 %v2828, %v2823
    %v3019 = vpack.c.b16 %v2829, %v2824
    %v3020 = vpack.c.b16 %v2835, %v2830
    %v3021 = vpack.c.b16 %v2836, %v2831
    %v3022 = vpack.c.b16 %v2837, %v2832
    %v3023 = vpack.c.b16 %v2838, %v2833
    %v3024 = vpack.c.b16 %v2839, %v2834
    %v3025 = vpack.c.b16 %v2845, %v2840
    %v3026 = vpack.c.b16 %v2846, %v2841
    %v3027 = vpack.c.b16 %v2847, %v2842
    %v3028 = vpack.c.b16 %v2848, %v2843
    %v3029 = vpack.c.b16 %v2849, %v2844
    %v3030 = vpack.c.b16 %v2855, %v2850
    %v3031 = vpack.c.b16 %v2856, %v2851
    %v3032 = vpack.c.b16 %v2857, %v2852
    %v3033 = vpack.c.b16 %v2858, %v2853
    %v3034 = vpack.c.b16 %v2859, %v2854
    %v3035 = vpack.c.b16 %v2865, %v2860
    %v3036 = vpack.c.b16 %v2866, %v2861
    %v3037 = vpack.c.b16 %v2867, %v2862
    %v3038 = vpack.c.b16 %v2868, %v2863
    %v3039 = vpack.c.b16 %v2869, %v2864
    %v3040 = vpack.c.b16 %v2875, %v2870
    %v3041 = vpack.c.b16 %v2876, %v2871
    %v3042 = vpack.c.b16 %v2877, %v2872
    %v3043 = vpack.c.b16 %v2878, %v2873
    %v3044 = vpack.c.b16 %v2879, %v2874
    %v3045 = vpack.c.b16 %v2885, %v2880
    %v3046 = vpack.c.b16 %v2886, %v2881
    %v3047 = vpack.c.b16 %v2887, %v2882
    %v3048 = vpack.c.b16 %v2888, %v2883
    %v3049 = vpack.c.b16 %v2889, %v2884
    %v3050 = vpack.c.b16 %v2895, %v2890
    %v3051 = vpack.c.b16 %v2896, %v2891
    %v3052 = vpack.c.b16 %v2897, %v2892
    %v3053 = vpack.c.b16 %v2898, %v2893
    %v3054 = vpack.c.b16 %v2899, %v2894
    %v3055 = vpack.c.b16 %v2905, %v2900
    %v3056 = vpack.c.b16 %v2906, %v2901
    %v3057 = vpack.c.b16 %v2907, %v2902
    %v3058 = vpack.c.b16 %v2908, %v2903
    %v3059 = vpack.c.b16 %v2909, %v2904
    %v3060 = vpack.c.b16 %v2915, %v2910
    %v3061 = vpack.c.b16 %v2916, %v2911
    %v3062 = vpack.c.b16 %v2917, %v2912
    %v3063 = vpack.c.b16 %v2918, %v2913
    %v3064 = vpack.c.b16 %v2919, %v2914
    %v3065 = vpack.c.b16 %v2925, %v2920
    %v3066 = vpack.c.b16 %v2926, %v2921
    %v3067 = vpack.c.b16 %v2927, %v2922
    %v3068 = vpack.c.b16 %v2928, %v2923
    %v3069 = vpack.c.b16 %v2929, %v2924
    %v3070 = vpack.c.b16 %v2935, %v2930
    %v3071 = vpack.c.b16 %v2936, %v2931
    %v3072 = vpack.c.b16 %v2937, %v2932
    %v3073 = vpack.c.b16 %v2938, %v2933
    %v3074 = vpack.c.b16 %v2939, %v2934
    %v3075 = vpack.c.b16 %v2945, %v2940
    %v3076 = vpack.c.b16 %v2946, %v2941
    %v3077 = vpack.c.b16 %v2947, %v2942
    %v3078 = vpack.c.b16 %v2948, %v2943
    %v3079 = vpack.c.b16 %v2949, %v2944
    %v3080 = vpack.c.b16 %v2955, %v2950
    %v3081 = vpack.c.b16 %v2956, %v2951
    %v3082 = vpack.c.b16 %v2957, %v2952
    %v3083 = vpack.c.b16 %v2958, %v2953
    %v3084 = vpack.c.b16 %v2959, %v2954
    %v3085 = vpack.c.b16 %v2965, %v2960
    %v3086 = vpack.c.b16 %v2966, %v2961
    %v3087 = vpack.c.b16 %v2967, %v2962
    %v3088 = vpack.c.b16 %v2968, %v2963
    %v3089 = vpack.c.b16 %v2969, %v2964
    %3210 = vmatprep.subr.bf16.mxu0 %v2971
    %3211 = vmatpush1.bf16.msra.mxu0 %v2970
    %3212 = vmatprep.subr.bf16.mxu0 %v2976
    %3213 = vmatpush1.bf16.msra.mxu0 %v2975
    %3214 = vmatprep.subr.bf16.mxu0 %v2981
    %3215 = vmatpush1.bf16.msra.mxu0 %v2980
    %3216 = vmatprep.subr.bf16.mxu0 %v2986
    %3217 = vmatpush1.bf16.msra.mxu0 %v2985
    %3218 = vmatprep.subr.bf16.mxu0 %v2991
    %3219 = vmatpush1.bf16.msra.mxu0 %v2990
    %3220 = vmatprep.subr.bf16.mxu0 %v2996
    %3221 = vmatpush1.bf16.msra.mxu0 %v2995
    %3222 = vmatprep.subr.bf16.mxu0 %v3001
    %3223 = vmatpush1.bf16.msra.mxu0 %v3000
    %3224 = vmatprep.subr.bf16.mxu0 %v3006
    %3225 = vmatpush1.bf16.msra.mxu0 %v3005
    %3226 = vmatprep.subr.bf16.mxu0 %v3011
    %3227 = vmatpush1.bf16.msra.mxu0 %v3010
    %3228 = vmatprep.subr.bf16.mxu0 %v3016
    %3229 = vmatpush1.bf16.msra.mxu0 %v3015
    %3230 = vmatprep.subr.bf16.mxu0 %v3021
    %3231 = vmatpush1.bf16.msra.mxu0 %v3020
    %3232 = vmatprep.subr.bf16.mxu0 %v3026
    %3233 = vmatpush1.bf16.msra.mxu0 %v3025
    %3234 = vmatprep.subr.bf16.mxu0 %v3031
    %3235 = vmatpush1.bf16.msra.mxu0 %v3030
    %3236 = vmatprep.subr.bf16.mxu0 %v3036
    %3237 = vmatpush1.bf16.msra.mxu0 %v3035
    %3238 = vmatprep.subr.bf16.mxu0 %v3041
    %3239 = vmatpush1.bf16.msra.mxu0 %v3040
    %3240 = vmatprep.subr.bf16.mxu0 %v3046
    %3241 = vmatpush1.bf16.msra.mxu0 %v3045
    %3242 = vmatprep.mubr.bf16.mxu0 %v2413
    %3243 = vmatmul.mubr.bf16.gmra.mrb[0].mxu0 %v2412
    %v3244 = vpop.f32.mrb[0].mxu0
    %v3245 = vadd.f32 %v2564, %v3244
    %v3246 = vpop.f32.mrb[0].mxu0
    %v3247 = vadd.f32 %v2568, %v3246
    %v3248 = vpop.f32.mrb[0].mxu0
    %v3249 = vpop.f32.mrb[0].mxu0
    %3250 = vdwg.mxu0
    %3251 = vmatprep.subr.bf16.mxu0 %v3051
    %3252 = vmatpush1.bf16.msra.mxu0 %v3050
    %3253 = vmatprep.subr.bf16.mxu0 %v3056
    %3254 = vmatpush1.bf16.msra.mxu0 %v3055
    %3255 = vmatprep.subr.bf16.mxu0 %v3061
    %3256 = vmatpush1.bf16.msra.mxu0 %v3060
    %3257 = vmatprep.subr.bf16.mxu0 %v3066
    %3258 = vmatpush1.bf16.msra.mxu0 %v3065
    %3259 = vmatprep.subr.bf16.mxu0 %v3071
    %3260 = vmatpush1.bf16.msra.mxu0 %v3070
    %3261 = vmatprep.subr.bf16.mxu0 %v3076
    %3262 = vmatpush1.bf16.msra.mxu0 %v3075
    %3263 = vmatprep.subr.bf16.mxu0 %v3081
    %3264 = vmatpush1.bf16.msra.mxu0 %v3080
    %3265 = vmatprep.subr.bf16.mxu0 %v3086
    %3266 = vmatpush1.bf16.msra.mxu0 %v3085
    %3267 = vmatprep.subr.bf16.mxu0 0
    %3268 = vmatpush1.bf16.msra.mxu0 0
    %3269 = vmatprep.subr.bf16.mxu0 0
    %3270 = vmatpush1.bf16.msra.mxu0 0
    %3271 = vmatprep.subr.bf16.mxu0 0
    %3272 = vmatpush1.bf16.msra.mxu0 0
    %3273 = vmatprep.subr.bf16.mxu0 0
    %3274 = vmatpush1.bf16.msra.mxu0 0
    %3275 = vmatprep.subr.bf16.mxu0 0
    %3276 = vmatpush1.bf16.msra.mxu0 0
    %3277 = vmatprep.subr.bf16.mxu0 0
    %3278 = vmatpush1.bf16.msra.mxu0 0
    %3279 = vmatprep.subr.bf16.mxu0 0
    %3280 = vmatpush1.bf16.msra.mxu0 0
    %3281 = vmatprep.subr.bf16.mxu0 0
    %3282 = vmatpush1.bf16.msra.mxu0 0
    %3283 = vmatprep.mubr.bf16.mxu0 0
    %3284 = vmatmul.mubr.bf16.gmra.mrb[0].mxu0 %v2414
    %v3285 = vpop.f32.mrb[0].mxu0
    %v3286 = vadd.f32 %v3245, %v3285
    %v3287 = vpop.f32.mrb[0].mxu0
    %v3288 = vadd.f32 %v3247, %v3287
    %v3289 = vpop.f32.mrb[0].mxu0
    %v3290 = vpop.f32.mrb[0].mxu0
    %3291 = vdwg.mxu0
    %3292 = vmatprep.subr.bf16.mxu0 %v2973
    %3293 = vmatpush1.bf16.msra.mxu0 %v2972
    %3294 = vmatprep.subr.bf16.mxu0 %v2978
    %3295 = vmatpush1.bf16.msra.mxu0 %v2977
    %3296 = vmatprep.subr.bf16.mxu0 %v2983
    %3297 = vmatpush1.bf16.msra.mxu0 %v2982
    %3298 = vmatprep.subr.bf16.mxu0 %v2988
    %3299 = vmatpush1.bf16.msra.mxu0 %v2987
    %3300 = vmatprep.subr.bf16.mxu0 %v2993
    %3301 = vmatpush1.bf16.msra.mxu0 %v2992
    %3302 = vmatprep.subr.bf16.mxu0 %v2998
    %3303 = vmatpush1.bf16.msra.mxu0 %v2997
    %3304 = vmatprep.subr.bf16.mxu0 %v3003
    %3305 = vmatpush1.bf16.msra.mxu0 %v3002
    %3306 = vmatprep.subr.bf16.mxu0 %v3008
    %3307 = vmatpush1.bf16.msra.mxu0 %v3007
    %3308 = vmatprep.subr.bf16.mxu0 %v3013
    %3309 = vmatpush1.bf16.msra.mxu0 %v3012
    %3310 = vmatprep.subr.bf16.mxu0 %v3018
    %3311 = vmatpush1.bf16.msra.mxu0 %v3017
    %3312 = vmatprep.subr.bf16.mxu0 %v3023
    %3313 = vmatpush1.bf16.msra.mxu0 %v3022
    %3314 = vmatprep.subr.bf16.mxu0 %v3028
    %3315 = vmatpush1.bf16.msra.mxu0 %v3027
    %3316 = vmatprep.subr.bf16.mxu0 %v3033
    %3317 = vmatpush1.bf16.msra.mxu0 %v3032
    %3318 = vmatprep.subr.bf16.mxu0 %v3038
    %3319 = vmatpush1.bf16.msra.mxu0 %v3037
    %3320 = vmatprep.subr.bf16.mxu0 %v3043
    %3321 = vmatpush1.bf16.msra.mxu0 %v3042
    %3322 = vmatprep.subr.bf16.mxu0 %v3048
    %3323 = vmatpush1.bf16.msra.mxu0 %v3047
    %3324 = vmatprep.mubr.bf16.mxu0 %v2413
    %3325 = vmatmul.mubr.bf16.gmra.mrb[0].mxu0 %v2412
    %v3326 = vpop.f32.mrb[0].mxu0
    %v3327 = vadd.f32 %v2572, %v3326
    %v3328 = vpop.f32.mrb[0].mxu0
    %v3329 = vadd.f32 %v2576, %v3328
    %v3330 = vpop.f32.mrb[0].mxu0
    %v3331 = vpop.f32.mrb[0].mxu0
    %3332 = vdwg.mxu0
    %3333 = vmatprep.subr.bf16.mxu0 %v3053
    %3334 = vmatpush1.bf16.msra.mxu0 %v3052
    %3335 = vmatprep.subr.bf16.mxu0 %v3058
    %3336 = vmatpush1.bf16.msra.mxu0 %v3057
    %3337 = vmatprep.subr.bf16.mxu0 %v3063
    %3338 = vmatpush1.bf16.msra.mxu0 %v3062
    %3339 = vmatprep.subr.bf16.mxu0 %v3068
    %3340 = vmatpush1.bf16.msra.mxu0 %v3067
    %3341 = vmatprep.subr.bf16.mxu0 %v3073
    %3342 = vmatpush1.bf16.msra.mxu0 %v3072
    %3343 = vmatprep.subr.bf16.mxu0 %v3078
    %3344 = vmatpush1.bf16.msra.mxu0 %v3077
    %3345 = vmatprep.subr.bf16.mxu0 %v3083
    %3346 = vmatpush1.bf16.msra.mxu0 %v3082
    %3347 = vmatprep.subr.bf16.mxu0 %v3088
    %3348 = vmatpush1.bf16.msra.mxu0 %v3087
    %3349 = vmatprep.subr.bf16.mxu0 0
    %3350 = vmatpush1.bf16.msra.mxu0 0
    %3351 = vmatprep.subr.bf16.mxu0 0
    %3352 = vmatpush1.bf16.msra.mxu0 0
    %3353 = vmatprep.subr.bf16.mxu0 0
    %3354 = vmatpush1.bf16.msra.mxu0 0
    %3355 = vmatprep.subr.bf16.mxu0 0
    %3356 = vmatpush1.bf16.msra.mxu0 0
    %3357 = vmatprep.subr.bf16.mxu0 0
    %3358 = vmatpush1.bf16.msra.mxu0 0
    %3359 = vmatprep.subr.bf16.mxu0 0
    %3360 = vmatpush1.bf16.msra.mxu0 0
    %3361 = vmatprep.subr.bf16.mxu0 0
    %3362 = vmatpush1.bf16.msra.mxu0 0
    %3363 = vmatprep.subr.bf16.mxu0 0
    %3364 = vmatpush1.bf16.msra.mxu0 0
    %3365 = vmatprep.mubr.bf16.mxu0 0
    %3366 = vmatmul.mubr.bf16.gmra.mrb[0].mxu0 %v2414
    %v3367 = vpop.f32.mrb[0].mxu0
    %v3368 = vadd.f32 %v3327, %v3367
    %v3369 = vpop.f32.mrb[0].mxu0
    %v3370 = vadd.f32 %v3329, %v3369
    %v3371 = vpop.f32.mrb[0].mxu0
    %v3372 = vpop.f32.mrb[0].mxu0
    %3373 = vdwg.mxu0
    %3374 = vmatprep.subr.bf16.mxu0 0
    %3375 = vmatpush1.bf16.msra.mxu0 %v2974
    %3376 = vmatprep.subr.bf16.mxu0 0
    %3377 = vmatpush1.bf16.msra.mxu0 %v2979
    %3378 = vmatprep.subr.bf16.mxu0 0
    %3379 = vmatpush1.bf16.msra.mxu0 %v2984
    %3380 = vmatprep.subr.bf16.mxu0 0
    %3381 = vmatpush1.bf16.msra.mxu0 %v2989
    %3382 = vmatprep.subr.bf16.mxu0 0
    %3383 = vmatpush1.bf16.msra.mxu0 %v2994
    %3384 = vmatprep.subr.bf16.mxu0 0
    %3385 = vmatpush1.bf16.msra.mxu0 %v2999
    %3386 = vmatprep.subr.bf16.mxu0 0
    %3387 = vmatpush1.bf16.msra.mxu0 %v3004
    %3388 = vmatprep.subr.bf16.mxu0 0
    %3389 = vmatpush1.bf16.msra.mxu0 %v3009
    %3390 = vmatprep.subr.bf16.mxu0 0
    %3391 = vmatpush1.bf16.msra.mxu0 %v3014
    %3392 = vmatprep.subr.bf16.mxu0 0
    %3393 = vmatpush1.bf16.msra.mxu0 %v3019
    %3394 = vmatprep.subr.bf16.mxu0 0
    %3395 = vmatpush1.bf16.msra.mxu0 %v3024
    %3396 = vmatprep.subr.bf16.mxu0 0
    %3397 = vmatpush1.bf16.msra.mxu0 %v3029
    %3398 = vmatprep.subr.bf16.mxu0 0
    %3399 = vmatpush1.bf16.msra.mxu0 %v3034
    %3400 = vmatprep.subr.bf16.mxu0 0
    %3401 = vmatpush1.bf16.msra.mxu0 %v3039
    %3402 = vmatprep.subr.bf16.mxu0 0
    %3403 = vmatpush1.bf16.msra.mxu0 %v3044
    %3404 = vmatprep.subr.bf16.mxu0 0
    %3405 = vmatpush1.bf16.msra.mxu0 %v3049
    %3406 = vmatprep.mubr.bf16.mxu0 %v2413
    %3407 = vmatmul.mubr.bf16.gmra.mrb[0].mxu0 %v2412
    %v3408 = vpop.f32.mrb[0].mxu0
    %v3409 = vadd.f32 %v2580, %v3408
    %v3410 = vpop.f32.mrb[0].mxu0
    %v3411 = vpop.f32.mrb[0].mxu0
    %v3412 = vpop.f32.mrb[0].mxu0
    %3413 = vdwg.mxu0
    %3414 = vmatprep.subr.bf16.mxu0 0
    %3415 = vmatpush1.bf16.msra.mxu0 %v3054
    %3416 = vmatprep.subr.bf16.mxu0 0
    %3417 = vmatpush1.bf16.msra.mxu0 %v3059
    %3418 = vmatprep.subr.bf16.mxu0 0
    %3419 = vmatpush1.bf16.msra.mxu0 %v3064
    %3420 = vmatprep.subr.bf16.mxu0 0
    %3421 = vmatpush1.bf16.msra.mxu0 %v3069
    %3422 = vmatprep.subr.bf16.mxu0 0
    %3423 = vmatpush1.bf16.msra.mxu0 %v3074
    %3424 = vmatprep.subr.bf16.mxu0 0
    %3425 = vmatpush1.bf16.msra.mxu0 %v3079
    %3426 = vmatprep.subr.bf16.mxu0 0
    %3427 = vmatpush1.bf16.msra.mxu0 %v3084
    %3428 = vmatprep.subr.bf16.mxu0 0
    %3429 = vmatpush1.bf16.msra.mxu0 %v3089
    %3430 = vmatprep.subr.bf16.mxu0 0
    %3431 = vmatpush1.bf16.msra.mxu0 0
    %3432 = vmatprep.subr.bf16.mxu0 0
    %3433 = vmatpush1.bf16.msra.mxu0 0
    %3434 = vmatprep.subr.bf16.mxu0 0
    %3435 = vmatpush1.bf16.msra.mxu0 0
    %3436 = vmatprep.subr.bf16.mxu0 0
    %3437 = vmatpush1.bf16.msra.mxu0 0
    %3438 = vmatprep.subr.bf16.mxu0 0
    %3439 = vmatpush1.bf16.msra.mxu0 0
    %3440 = vmatprep.subr.bf16.mxu0 0
    %3441 = vmatpush1.bf16.msra.mxu0 0
    %3442 = vmatprep.subr.bf16.mxu0 0
    %3443 = vmatpush1.bf16.msra.mxu0 0
    %3444 = vmatprep.subr.bf16.mxu0 0
    %3445 = vmatpush1.bf16.msra.mxu0 0
    %3446 = vmatprep.mubr.bf16.mxu0 0
    %3447 = vmatmul.mubr.bf16.gmra.mrb[0].mxu0 %v2414
    %v3448 = vpop.f32.mrb[0].mxu0
    %v3449 = vadd.f32 %v3409, %v3448
    %v3450 = vpop.f32.mrb[0].mxu0
    %v3451 = vpop.f32.mrb[0].mxu0
    %v3452 = vpop.f32.mrb[0].mxu0
    %3453 = vdwg.mxu0
    %v3454 = vmax.f32 %v3286, 0.0
    %v3455 = vmax.f32 %v3288, 0.0
    %v3456 = vmax.f32 %v3368, 0.0
    %v3457 = vmax.f32 %v3370, 0.0
    %v3458 = vmax.f32 %v3449, 0.0
    %v3459 = vpack.c.bf16 %v3454, %v3454
    %v3460 = vpack.c.bf16 %v3455, %v3455
    %v3461 = vpack.c.bf16 %v3456, %v3456
    %v3462 = vpack.c.bf16 %v3457, %v3457
    %v3463 = vpack.c.bf16 %v3458, %v3458
    %v3464 = vld [vmem:[#allocation10] sm:$0xff]
    %v3465 = vld [vmem:[#allocation10 + $0x8] sm:$0xff]
    %v3466 = vld [vmem:[#allocation10 + $0x10] sm:$0xff]
    %v3467 = vld [vmem:[#allocation10 + $0x18] sm:$0xff]
    %v3468 = vld [vmem:[#allocation10 + $0x20] sm:$0xff]
    %v3469 = vld [vmem:[#allocation10 + $0x28] sm:$0xff]
    %v3470 = vld [vmem:[#allocation10 + $0x30] sm:$0xff]
    %v3471 = vld [vmem:[#allocation10 + $0x38] sm:$0xff]
    %v3472 = vld [vmem:[#allocation10 + $0x40] sm:$0xff]
    %v3473 = vld [vmem:[#allocation10 + $0x48] sm:$0xff]
    %v3474 = vld [vmem:[#allocation10 + $0x50] sm:$0xff]
    %v3475 = vld [vmem:[#allocation10 + $0x58] sm:$0xff]
    %v3476 = vld [vmem:[#allocation10 + $0x60] sm:$0xff]
    %v3477 = vld [vmem:[#allocation10 + $0x68] sm:$0xff]
    %v3478 = vld [vmem:[#allocation10 + $0x70] sm:$0xff]
    %v3479 = vld [vmem:[#allocation10 + $0x78] sm:$0xff]
    %v3480 = vld [vmem:[#allocation10 + $0x80] sm:$0xff]
    %v3481 = vld [vmem:[#allocation10 + $0x88] sm:$0xff]
    %v3482 = vld [vmem:[#allocation10 + $0x90] sm:$0xff]
    %v3483 = vld [vmem:[#allocation10 + $0x98] sm:$0xff]
    %v3484 = vld [vmem:[#allocation10 + $0xa0] sm:$0xff]
    %v3485 = vld [vmem:[#allocation10 + $0xa8] sm:$0xff]
    %v3486 = vld [vmem:[#allocation10 + $0xb0] sm:$0xff]
    %v3487 = vld [vmem:[#allocation10 + $0xb8] sm:$0xff]
    %v3488 = vld [vmem:[#allocation10 + $0xc0] sm:$0xff]
    %v3489 = vld [vmem:[#allocation10 + $0xc8] sm:$0xff]
    %v3490 = vld [vmem:[#allocation10 + $0xd0] sm:$0xff]
    %v3491 = vld [vmem:[#allocation10 + $0xd8] sm:$0xff]
    %v3492 = vld [vmem:[#allocation10 + $0xe0] sm:$0xff]
    %v3493 = vld [vmem:[#allocation10 + $0xe8] sm:$0xff]
    %v3494 = vld [vmem:[#allocation10 + $0xf0] sm:$0xff]
    %v3495 = vld [vmem:[#allocation10 + $0xf8] sm:$0xff]
    %v3496 = vld [vmem:[#allocation10 + $0x100] sm:$0xff]
    %v3497 = vld [vmem:[#allocation10 + $0x108] sm:$0xff]
    %v3498 = vld [vmem:[#allocation10 + $0x110] sm:$0xff]
    %v3499 = vld [vmem:[#allocation10 + $0x118] sm:$0xff]
    %v3500 = vld [vmem:[#allocation10 + $0x120] sm:$0xff]
    %v3501 = vld [vmem:[#allocation10 + $0x128] sm:$0xff]
    %v3502 = vld [vmem:[#allocation10 + $0x130] sm:$0xff]
    %v3503 = vld [vmem:[#allocation10 + $0x138] sm:$0xff]
    %v3504 = vld [vmem:[#allocation10 + $0x140] sm:$0xff]
    %v3505 = vld [vmem:[#allocation10 + $0x148] sm:$0xff]
    %v3506 = vld [vmem:[#allocation10 + $0x150] sm:$0xff]
    %v3507 = vld [vmem:[#allocation10 + $0x158] sm:$0xff]
    %v3508 = vld [vmem:[#allocation10 + $0x160] sm:$0xff]
    %v3509 = vld [vmem:[#allocation10 + $0x168] sm:$0xff]
    %v3510 = vld [vmem:[#allocation10 + $0x170] sm:$0xff]
    %v3511 = vld [vmem:[#allocation10 + $0x178] sm:$0xff]
    %v3512 = vld [vmem:[#allocation10 + $0x180] sm:$0xff]
    %v3513 = vld [vmem:[#allocation10 + $0x188] sm:$0xff]
    %v3514 = vld [vmem:[#allocation10 + $0x190] sm:$0xff]
    %v3515 = vld [vmem:[#allocation10 + $0x198] sm:$0xff]
    %v3516 = vld [vmem:[#allocation10 + $0x1a0] sm:$0xff]
    %v3517 = vld [vmem:[#allocation10 + $0x1a8] sm:$0xff]
    %v3518 = vld [vmem:[#allocation10 + $0x1b0] sm:$0xff]
    %v3519 = vld [vmem:[#allocation10 + $0x1b8] sm:$0xff]
    %v3520 = vld [vmem:[#allocation10 + $0x1c0] sm:$0xff]
    %v3521 = vld [vmem:[#allocation10 + $0x1c8] sm:$0xff]
    %v3522 = vld [vmem:[#allocation10 + $0x1d0] sm:$0xff]
    %v3523 = vld [vmem:[#allocation10 + $0x1d8] sm:$0xff]
    %v3524 = vld [vmem:[#allocation10 + $0x1e0] sm:$0xff]
    %v3525 = vld [vmem:[#allocation10 + $0x1e8] sm:$0xff]
    %v3526 = vld [vmem:[#allocation10 + $0x1f0] sm:$0xff]
    %v3527 = vld [vmem:[#allocation10 + $0x1f8] sm:$0xff]
    %v3528 = vld [vmem:[#allocation10 + $0x200] sm:$0xff]
    %v3529 = vld [vmem:[#allocation10 + $0x208] sm:$0xff]
    %v3530 = vld [vmem:[#allocation10 + $0x210] sm:$0xff]
    %v3531 = vld [vmem:[#allocation10 + $0x218] sm:$0xff]
    %v3532 = vld [vmem:[#allocation10 + $0x220] sm:$0xff]
    %v3533 = vld [vmem:[#allocation10 + $0x228] sm:$0xff]
    %v3534 = vld [vmem:[#allocation10 + $0x230] sm:$0xff]
    %v3535 = vld [vmem:[#allocation10 + $0x238] sm:$0xff]
    %v3536 = vld [vmem:[#allocation10 + $0x240] sm:$0xff]
    %v3537 = vld [vmem:[#allocation10 + $0x248] sm:$0xff]
    %v3538 = vld [vmem:[#allocation10 + $0x250] sm:$0xff]
    %v3539 = vld [vmem:[#allocation10 + $0x258] sm:$0xff]
    %v3540 = vld [vmem:[#allocation10 + $0x260] sm:$0xff]
    %v3541 = vld [vmem:[#allocation10 + $0x268] sm:$0xff]
    %v3542 = vld [vmem:[#allocation10 + $0x270] sm:$0xff]
    %v3543 = vld [vmem:[#allocation10 + $0x278] sm:$0xff]
    %v3544 = vld [vmem:[%s12] sm:$0x3]
    %v3546 = vlaneseq
    %v3547 = vshrl.u32 %v3546, 7
    %v3548 = vsub.s32 0, %v3547
    %v3549 = vrot.slane %v3544, %v3548
    %v3550 = vlaneseq
    %v3551 = vshrl.u32 %v3550, 7
    %v3552 = vsub.s32 1, %v3551
    %v3553 = vrot.slane %v3544, %v3552
    %v3636 = vunpack.c.l.b16 %v3464
    %v3637 = vunpack.c.h.b16 %v3464
    %v3638 = vunpack.c.l.b16 %v3465
    %v3639 = vunpack.c.h.b16 %v3465
    %v3640 = vunpack.c.l.b16 %v3466
    %v3641 = vunpack.c.h.b16 %v3466
    %v3642 = vunpack.c.l.b16 %v3467
    %v3643 = vunpack.c.h.b16 %v3467
    %v3644 = vunpack.c.l.b16 %v3468
    %v3645 = vunpack.c.h.b16 %v3468
    %v3646 = vunpack.c.l.b16 %v3469
    %v3647 = vunpack.c.h.b16 %v3469
    %v3648 = vunpack.c.l.b16 %v3470
    %v3649 = vunpack.c.h.b16 %v3470
    %v3650 = vunpack.c.l.b16 %v3471
    %v3651 = vunpack.c.h.b16 %v3471
    %v3652 = vunpack.c.l.b16 %v3472
    %v3653 = vunpack.c.h.b16 %v3472
    %v3654 = vunpack.c.l.b16 %v3473
    %v3655 = vunpack.c.h.b16 %v3473
    %v3656 = vunpack.c.l.b16 %v3474
    %v3657 = vunpack.c.h.b16 %v3474
    %v3658 = vunpack.c.l.b16 %v3475
    %v3659 = vunpack.c.h.b16 %v3475
    %v3660 = vunpack.c.l.b16 %v3476
    %v3661 = vunpack.c.h.b16 %v3476
    %v3662 = vunpack.c.l.b16 %v3477
    %v3663 = vunpack.c.h.b16 %v3477
    %v3664 = vunpack.c.l.b16 %v3478
    %v3665 = vunpack.c.h.b16 %v3478
    %v3666 = vunpack.c.l.b16 %v3479
    %v3667 = vunpack.c.h.b16 %v3479
    %v3668 = vunpack.c.l.b16 %v3480
    %v3669 = vunpack.c.h.b16 %v3480
    %v3670 = vunpack.c.l.b16 %v3481
    %v3671 = vunpack.c.h.b16 %v3481
    %v3672 = vunpack.c.l.b16 %v3482
    %v3673 = vunpack.c.h.b16 %v3482
    %v3674 = vunpack.c.l.b16 %v3483
    %v3675 = vunpack.c.h.b16 %v3483
    %v3676 = vunpack.c.l.b16 %v3484
    %v3677 = vunpack.c.h.b16 %v3484
    %v3678 = vunpack.c.l.b16 %v3485
    %v3679 = vunpack.c.h.b16 %v3485
    %v3680 = vunpack.c.l.b16 %v3486
    %v3681 = vunpack.c.h.b16 %v3486
    %v3682 = vunpack.c.l.b16 %v3487
    %v3683 = vunpack.c.h.b16 %v3487
    %v3684 = vunpack.c.l.b16 %v3488
    %v3685 = vunpack.c.h.b16 %v3488
    %v3686 = vunpack.c.l.b16 %v3489
    %v3687 = vunpack.c.h.b16 %v3489
    %v3688 = vunpack.c.l.b16 %v3490
    %v3689 = vunpack.c.h.b16 %v3490
    %v3690 = vunpack.c.l.b16 %v3491
    %v3691 = vunpack.c.h.b16 %v3491
    %v3692 = vunpack.c.l.b16 %v3492
    %v3693 = vunpack.c.h.b16 %v3492
    %v3694 = vunpack.c.l.b16 %v3493
    %v3695 = vunpack.c.h.b16 %v3493
    %v3696 = vunpack.c.l.b16 %v3494
    %v3697 = vunpack.c.h.b16 %v3494
    %v3698 = vunpack.c.l.b16 %v3495
    %v3699 = vunpack.c.h.b16 %v3495
    %v3700 = vunpack.c.l.b16 %v3496
    %v3701 = vunpack.c.h.b16 %v3496
    %v3702 = vunpack.c.l.b16 %v3497
    %v3703 = vunpack.c.h.b16 %v3497
    %v3704 = vunpack.c.l.b16 %v3498
    %v3705 = vunpack.c.h.b16 %v3498
    %v3706 = vunpack.c.l.b16 %v3499
    %v3707 = vunpack.c.h.b16 %v3499
    %v3708 = vunpack.c.l.b16 %v3500
    %v3709 = vunpack.c.h.b16 %v3500
    %v3710 = vunpack.c.l.b16 %v3501
    %v3711 = vunpack.c.h.b16 %v3501
    %v3712 = vunpack.c.l.b16 %v3502
    %v3713 = vunpack.c.h.b16 %v3502
    %v3714 = vunpack.c.l.b16 %v3503
    %v3715 = vunpack.c.h.b16 %v3503
    %v3716 = vunpack.c.l.b16 %v3504
    %v3717 = vunpack.c.h.b16 %v3504
    %v3718 = vunpack.c.l.b16 %v3505
    %v3719 = vunpack.c.h.b16 %v3505
    %v3720 = vunpack.c.l.b16 %v3506
    %v3721 = vunpack.c.h.b16 %v3506
    %v3722 = vunpack.c.l.b16 %v3507
    %v3723 = vunpack.c.h.b16 %v3507
    %v3724 = vunpack.c.l.b16 %v3508
    %v3725 = vunpack.c.h.b16 %v3508
    %v3726 = vunpack.c.l.b16 %v3509
    %v3727 = vunpack.c.h.b16 %v3509
    %v3728 = vunpack.c.l.b16 %v3510
    %v3729 = vunpack.c.h.b16 %v3510
    %v3730 = vunpack.c.l.b16 %v3511
    %v3731 = vunpack.c.h.b16 %v3511
    %v3732 = vunpack.c.l.b16 %v3512
    %v3733 = vunpack.c.h.b16 %v3512
    %v3734 = vunpack.c.l.b16 %v3513
    %v3735 = vunpack.c.h.b16 %v3513
    %v3736 = vunpack.c.l.b16 %v3514
    %v3737 = vunpack.c.h.b16 %v3514
    %v3738 = vunpack.c.l.b16 %v3515
    %v3739 = vunpack.c.h.b16 %v3515
    %v3740 = vunpack.c.l.b16 %v3516
    %v3741 = vunpack.c.h.b16 %v3516
    %v3742 = vunpack.c.l.b16 %v3517
    %v3743 = vunpack.c.h.b16 %v3517
    %v3744 = vunpack.c.l.b16 %v3518
    %v3745 = vunpack.c.h.b16 %v3518
    %v3746 = vunpack.c.l.b16 %v3519
    %v3747 = vunpack.c.h.b16 %v3519
    %v3748 = vunpack.c.l.b16 %v3520
    %v3749 = vunpack.c.h.b16 %v3520
    %v3750 = vunpack.c.l.b16 %v3521
    %v3751 = vunpack.c.h.b16 %v3521
    %v3752 = vunpack.c.l.b16 %v3522
    %v3753 = vunpack.c.h.b16 %v3522
    %v3754 = vunpack.c.l.b16 %v3523
    %v3755 = vunpack.c.h.b16 %v3523
    %v3756 = vunpack.c.l.b16 %v3524
    %v3757 = vunpack.c.h.b16 %v3524
    %v3758 = vunpack.c.l.b16 %v3525
    %v3759 = vunpack.c.h.b16 %v3525
    %v3760 = vunpack.c.l.b16 %v3526
    %v3761 = vunpack.c.h.b16 %v3526
    %v3762 = vunpack.c.l.b16 %v3527
    %v3763 = vunpack.c.h.b16 %v3527
    %v3764 = vunpack.c.l.b16 %v3528
    %v3765 = vunpack.c.h.b16 %v3528
    %v3766 = vunpack.c.l.b16 %v3529
    %v3767 = vunpack.c.h.b16 %v3529
    %v3768 = vunpack.c.l.b16 %v3530
    %v3769 = vunpack.c.h.b16 %v3530
    %v3770 = vunpack.c.l.b16 %v3531
    %v3771 = vunpack.c.h.b16 %v3531
    %v3772 = vunpack.c.l.b16 %v3532
    %v3773 = vunpack.c.h.b16 %v3532
    %v3774 = vunpack.c.l.b16 %v3533
    %v3775 = vunpack.c.h.b16 %v3533
    %v3776 = vunpack.c.l.b16 %v3534
    %v3777 = vunpack.c.h.b16 %v3534
    %v3778 = vunpack.c.l.b16 %v3535
    %v3779 = vunpack.c.h.b16 %v3535
    %v3780 = vunpack.c.l.b16 %v3536
    %v3781 = vunpack.c.h.b16 %v3536
    %v3782 = vunpack.c.l.b16 %v3537
    %v3783 = vunpack.c.h.b16 %v3537
    %v3784 = vunpack.c.l.b16 %v3538
    %v3785 = vunpack.c.h.b16 %v3538
    %v3786 = vunpack.c.l.b16 %v3539
    %v3787 = vunpack.c.h.b16 %v3539
    %v3788 = vunpack.c.l.b16 %v3540
    %v3789 = vunpack.c.h.b16 %v3540
    %v3790 = vunpack.c.l.b16 %v3541
    %v3791 = vunpack.c.h.b16 %v3541
    %v3792 = vunpack.c.l.b16 %v3542
    %v3793 = vunpack.c.h.b16 %v3542
    %v3794 = vunpack.c.l.b16 %v3543
    %v3795 = vunpack.c.h.b16 %v3543
    %v3796 = vpack.c.b16 %v3638, %v3636
    %v3797 = vpack.c.b16 %v3639, %v3637
    %v3798 = vpack.c.b16 %v3642, %v3640
    %v3799 = vpack.c.b16 %v3643, %v3641
    %v3800 = vpack.c.b16 %v3646, %v3644
    %v3801 = vpack.c.b16 %v3647, %v3645
    %v3802 = vpack.c.b16 %v3650, %v3648
    %v3803 = vpack.c.b16 %v3651, %v3649
    %v3804 = vpack.c.b16 %v3654, %v3652
    %v3805 = vpack.c.b16 %v3655, %v3653
    %v3806 = vpack.c.b16 %v3658, %v3656
    %v3807 = vpack.c.b16 %v3659, %v3657
    %v3808 = vpack.c.b16 %v3662, %v3660
    %v3809 = vpack.c.b16 %v3663, %v3661
    %v3810 = vpack.c.b16 %v3666, %v3664
    %v3811 = vpack.c.b16 %v3667, %v3665
    %v3812 = vpack.c.b16 %v3670, %v3668
    %v3813 = vpack.c.b16 %v3671, %v3669
    %v3814 = vpack.c.b16 %v3674, %v3672
    %v3815 = vpack.c.b16 %v3675, %v3673
    %v3816 = vpack.c.b16 %v3678, %v3676
    %v3817 = vpack.c.b16 %v3679, %v3677
    %v3818 = vpack.c.b16 %v3682, %v3680
    %v3819 = vpack.c.b16 %v3683, %v3681
    %v3820 = vpack.c.b16 %v3686, %v3684
    %v3821 = vpack.c.b16 %v3687, %v3685
    %v3822 = vpack.c.b16 %v3690, %v3688
    %v3823 = vpack.c.b16 %v3691, %v3689
    %v3824 = vpack.c.b16 %v3694, %v3692
    %v3825 = vpack.c.b16 %v3695, %v3693
    %v3826 = vpack.c.b16 %v3698, %v3696
    %v3827 = vpack.c.b16 %v3699, %v3697
    %v3828 = vpack.c.b16 %v3702, %v3700
    %v3829 = vpack.c.b16 %v3703, %v3701
    %v3830 = vpack.c.b16 %v3706, %v3704
    %v3831 = vpack.c.b16 %v3707, %v3705
    %v3832 = vpack.c.b16 %v3710, %v3708
    %v3833 = vpack.c.b16 %v3711, %v3709
    %v3834 = vpack.c.b16 %v3714, %v3712
    %v3835 = vpack.c.b16 %v3715, %v3713
    %v3836 = vpack.c.b16 %v3718, %v3716
    %v3837 = vpack.c.b16 %v3719, %v3717
    %v3838 = vpack.c.b16 %v3722, %v3720
    %v3839 = vpack.c.b16 %v3723, %v3721
    %v3840 = vpack.c.b16 %v3726, %v3724
    %v3841 = vpack.c.b16 %v3727, %v3725
    %v3842 = vpack.c.b16 %v3730, %v3728
    %v3843 = vpack.c.b16 %v3731, %v3729
    %v3844 = vpack.c.b16 %v3734, %v3732
    %v3845 = vpack.c.b16 %v3735, %v3733
    %v3846 = vpack.c.b16 %v3738, %v3736
    %v3847 = vpack.c.b16 %v3739, %v3737
    %v3848 = vpack.c.b16 %v3742, %v3740
    %v3849 = vpack.c.b16 %v3743, %v3741
    %v3850 = vpack.c.b16 %v3746, %v3744
    %v3851 = vpack.c.b16 %v3747, %v3745
    %v3852 = vpack.c.b16 %v3750, %v3748
    %v3853 = vpack.c.b16 %v3751, %v3749
    %v3854 = vpack.c.b16 %v3754, %v3752
    %v3855 = vpack.c.b16 %v3755, %v3753
    %v3856 = vpack.c.b16 %v3758, %v3756
    %v3857 = vpack.c.b16 %v3759, %v3757
    %v3858 = vpack.c.b16 %v3762, %v3760
    %v3859 = vpack.c.b16 %v3763, %v3761
    %v3860 = vpack.c.b16 %v3766, %v3764
    %v3861 = vpack.c.b16 %v3767, %v3765
    %v3862 = vpack.c.b16 %v3770, %v3768
    %v3863 = vpack.c.b16 %v3771, %v3769
    %v3864 = vpack.c.b16 %v3774, %v3772
    %v3865 = vpack.c.b16 %v3775, %v3773
    %v3866 = vpack.c.b16 %v3778, %v3776
    %v3867 = vpack.c.b16 %v3779, %v3777
    %v3868 = vpack.c.b16 %v3782, %v3780
    %v3869 = vpack.c.b16 %v3783, %v3781
    %v3870 = vpack.c.b16 %v3786, %v3784
    %v3871 = vpack.c.b16 %v3787, %v3785
    %v3872 = vpack.c.b16 %v3790, %v3788
    %v3873 = vpack.c.b16 %v3791, %v3789
    %v3874 = vpack.c.b16 %v3794, %v3792
    %v3875 = vpack.c.b16 %v3795, %v3793
    %3956 = vmatprep.subr.bf16.mxu0 %v3797
    %3957 = vmatpush1.bf16.msra.mxu0 %v3796
    %3958 = vmatprep.subr.bf16.mxu0 %v3799
    %3959 = vmatpush1.bf16.msra.mxu0 %v3798
    %3960 = vmatprep.subr.bf16.mxu0 %v3801
    %3961 = vmatpush1.bf16.msra.mxu0 %v3800
    %3962 = vmatprep.subr.bf16.mxu0 %v3803
    %3963 = vmatpush1.bf16.msra.mxu0 %v3802
    %3964 = vmatprep.subr.bf16.mxu0 %v3805
    %3965 = vmatpush1.bf16.msra.mxu0 %v3804
    %3966 = vmatprep.subr.bf16.mxu0 %v3807
    %3967 = vmatpush1.bf16.msra.mxu0 %v3806
    %3968 = vmatprep.subr.bf16.mxu0 %v3809
    %3969 = vmatpush1.bf16.msra.mxu0 %v3808
    %3970 = vmatprep.subr.bf16.mxu0 %v3811
    %3971 = vmatpush1.bf16.msra.mxu0 %v3810
    %3972 = vmatprep.subr.bf16.mxu0 %v3813
    %3973 = vmatpush1.bf16.msra.mxu0 %v3812
    %3974 = vmatprep.subr.bf16.mxu0 %v3815
    %3975 = vmatpush1.bf16.msra.mxu0 %v3814
    %3976 = vmatprep.subr.bf16.mxu0 %v3817
    %3977 = vmatpush1.bf16.msra.mxu0 %v3816
    %3978 = vmatprep.subr.bf16.mxu0 %v3819
    %3979 = vmatpush1.bf16.msra.mxu0 %v3818
    %3980 = vmatprep.subr.bf16.mxu0 %v3821
    %3981 = vmatpush1.bf16.msra.mxu0 %v3820
    %3982 = vmatprep.subr.bf16.mxu0 %v3823
    %3983 = vmatpush1.bf16.msra.mxu0 %v3822
    %3984 = vmatprep.subr.bf16.mxu0 %v3825
    %3985 = vmatpush1.bf16.msra.mxu0 %v3824
    %3986 = vmatprep.subr.bf16.mxu0 %v3827
    %3987 = vmatpush1.bf16.msra.mxu0 %v3826
    %3988 = vmatprep.mubr.bf16.mxu0 %v3460
    %3989 = vmatmul.mubr.bf16.gmra.mrb[0].mxu0 %v3459
    %v3990 = vpop.f32.mrb[0].mxu0
    %v3991 = vadd.f32 %v3549, %v3990
    %v3992 = vpop.f32.mrb[0].mxu0
    %v3993 = vadd.f32 %v3553, %v3992
    %v3994 = vpop.f32.mrb[0].mxu0
    %v3995 = vpop.f32.mrb[0].mxu0
    %3996 = vdwg.mxu0
    %3997 = vmatprep.subr.bf16.mxu0 %v3829
    %3998 = vmatpush1.bf16.msra.mxu0 %v3828
    %3999 = vmatprep.subr.bf16.mxu0 %v3831
    %4000 = vmatpush1.bf16.msra.mxu0 %v3830
    %4001 = vmatprep.subr.bf16.mxu0 %v3833
    %4002 = vmatpush1.bf16.msra.mxu0 %v3832
    %4003 = vmatprep.subr.bf16.mxu0 %v3835
    %4004 = vmatpush1.bf16.msra.mxu0 %v3834
    %4005 = vmatprep.subr.bf16.mxu0 %v3837
    %4006 = vmatpush1.bf16.msra.mxu0 %v3836
    %4007 = vmatprep.subr.bf16.mxu0 %v3839
    %4008 = vmatpush1.bf16.msra.mxu0 %v3838
    %4009 = vmatprep.subr.bf16.mxu0 %v3841
    %4010 = vmatpush1.bf16.msra.mxu0 %v3840
    %4011 = vmatprep.subr.bf16.mxu0 %v3843
    %4012 = vmatpush1.bf16.msra.mxu0 %v3842
    %4013 = vmatprep.subr.bf16.mxu0 %v3845
    %4014 = vmatpush1.bf16.msra.mxu0 %v3844
    %4015 = vmatprep.subr.bf16.mxu0 %v3847
    %4016 = vmatpush1.bf16.msra.mxu0 %v3846
    %4017 = vmatprep.subr.bf16.mxu0 %v3849
    %4018 = vmatpush1.bf16.msra.mxu0 %v3848
    %4019 = vmatprep.subr.bf16.mxu0 %v3851
    %4020 = vmatpush1.bf16.msra.mxu0 %v3850
    %4021 = vmatprep.subr.bf16.mxu0 %v3853
    %4022 = vmatpush1.bf16.msra.mxu0 %v3852
    %4023 = vmatprep.subr.bf16.mxu0 %v3855
    %4024 = vmatpush1.bf16.msra.mxu0 %v3854
    %4025 = vmatprep.subr.bf16.mxu0 %v3857
    %4026 = vmatpush1.bf16.msra.mxu0 %v3856
    %4027 = vmatprep.subr.bf16.mxu0 %v3859
    %4028 = vmatpush1.bf16.msra.mxu0 %v3858
    %4029 = vmatprep.mubr.bf16.mxu0 %v3462
    %4030 = vmatmul.mubr.bf16.gmra.mrb[0].mxu0 %v3461
    %v4031 = vpop.f32.mrb[0].mxu0
    %v4032 = vadd.f32 %v3991, %v4031
    %v4033 = vpop.f32.mrb[0].mxu0
    %v4034 = vadd.f32 %v3993, %v4033
    %v4035 = vpop.f32.mrb[0].mxu0
    %v4036 = vpop.f32.mrb[0].mxu0
    %4037 = vdwg.mxu0
    %4038 = vmatprep.subr.bf16.mxu0 %v3861
    %4039 = vmatpush1.bf16.msra.mxu0 %v3860
    %4040 = vmatprep.subr.bf16.mxu0 %v3863
    %4041 = vmatpush1.bf16.msra.mxu0 %v3862
    %4042 = vmatprep.subr.bf16.mxu0 %v3865
    %4043 = vmatpush1.bf16.msra.mxu0 %v3864
    %4044 = vmatprep.subr.bf16.mxu0 %v3867
    %4045 = vmatpush1.bf16.msra.mxu0 %v3866
    %4046 = vmatprep.subr.bf16.mxu0 %v3869
    %4047 = vmatpush1.bf16.msra.mxu0 %v3868
    %4048 = vmatprep.subr.bf16.mxu0 %v3871
    %4049 = vmatpush1.bf16.msra.mxu0 %v3870
    %4050 = vmatprep.subr.bf16.mxu0 %v3873
    %4051 = vmatpush1.bf16.msra.mxu0 %v3872
    %4052 = vmatprep.subr.bf16.mxu0 %v3875
    %4053 = vmatpush1.bf16.msra.mxu0 %v3874
    %4054 = vmatprep.subr.bf16.mxu0 0
    %4055 = vmatpush1.bf16.msra.mxu0 0
    %4056 = vmatprep.subr.bf16.mxu0 0
    %4057 = vmatpush1.bf16.msra.mxu0 0
    %4058 = vmatprep.subr.bf16.mxu0 0
    %4059 = vmatpush1.bf16.msra.mxu0 0
    %4060 = vmatprep.subr.bf16.mxu0 0
    %4061 = vmatpush1.bf16.msra.mxu0 0
    %4062 = vmatprep.subr.bf16.mxu0 0
    %4063 = vmatpush1.bf16.msra.mxu0 0
    %4064 = vmatprep.subr.bf16.mxu0 0
    %4065 = vmatpush1.bf16.msra.mxu0 0
    %4066 = vmatprep.subr.bf16.mxu0 0
    %4067 = vmatpush1.bf16.msra.mxu0 0
    %4068 = vmatprep.subr.bf16.mxu0 0
    %4069 = vmatpush1.bf16.msra.mxu0 0
    %4070 = vmatprep.mubr.bf16.mxu0 0
    %4071 = vmatmul.mubr.bf16.gmra.mrb[0].mxu0 %v3463
    %v4072 = vpop.f32.mrb[0].mxu0
    %v4073 = vadd.f32 %v4032, %v4072
    %v4074 = vpop.f32.mrb[0].mxu0
    %v4075 = vadd.f32 %v4034, %v4074
    %v4076 = vpop.f32.mrb[0].mxu0
    %v4077 = vpop.f32.mrb[0].mxu0
    %4078 = vdwg.mxu0
    %v4079 = vmax.f32 %v4073, 0.0
    %v4080 = vmax.f32 %v4075, 0.0
    %v4083 = vcombine.low %v4079, %v4080
    %4085 = vst [vmem:[%s13] sm:$0xff] %v4083
    // Predicated region
    $region78: #{network_forward.1} parent=1 // pred_check
      _
    $region79: #{network_forward.1} parent=1 // pred_check_branch
      %4087 = sbr.rel (0) target = $region81
    $region80: #{network_forward.1} parent=1 // pred_region
      _
    $region81: #{network_forward.1} parent=1 // pred_fallthru
      _
    // Predicated region
    $region82: #{network_forward.1} parent=1 // pred_check
      _
    $region83: #{network_forward.1} parent=1 // pred_check_branch
      %4089 = sbr.rel (0) target = $region85
    $region84: #{network_forward.1} parent=1 // pred_region
      _
    $region85: #{network_forward.1} parent=1 // pred_fallthru
      _
    %4090 = vsyncpa [#allocation3], 1
    %4091 = vsyncpa [#allocation5], 1
    %4092 = vsyncpa [#allocation8], 1
    %4093 = vsyncpa [#allocation11], 1

</llo_original>
